<compile_context>
chip_gen: v7x
topology: tpu7x:2x2x1
jax: 0.10.0
libtpu: 0.0.40
codegen_flags: <defaults>
</compile_context>

<pallas_src>
import functools

import jax
import jax.numpy as jnp
from jax import lax
from jax.experimental import pallas as pl
from jax.experimental.pallas import tpu as pltpu

# Mirror of the PyTorch `Config` used by the module.
BATCH_SIZE = 2          # config.BATCH_SIZE -> num_groups of both GroupNorms
GN_EPS = 1e-5           # nn.GroupNorm default eps


def _gn_silu_flat(x, m_ref, gamma_ref, beta_ref, eps):
    """GroupNorm + SiLU on a flat (H, W*C) tile (f32).

    m_ref is a (W*C, W*C) matrix holding 1/(H*W*cpg) for lane pairs in the same
    channel group, so a single tiny matmul turns per-lane column sums into
    per-lane group means / mean-squares (no per-group Python loop, no cross-lane
    XLU shuffles).
    """
    colsum = jnp.sum(x, axis=0, keepdims=True)            # (1, L)
    sqsum = jnp.sum(x * x, axis=0, keepdims=True)         # (1, L)
    stats = jnp.concatenate([colsum, sqsum], axis=0)      # (2, L)
    # M=2 matmul: HIGHEST here costs ~nothing and keeps the GN stats accurate.
    agg = jnp.dot(stats, m_ref[...],
                  preferred_element_type=jnp.float32,
                  precision=lax.Precision.HIGHEST)
    mean = agg[0:1, :]
    var = jnp.maximum(agg[1:2, :] - mean * mean, 0.0)     # biased var (PyTorch GN)
    scale = lax.rsqrt(var + eps) * gamma_ref[...]         # (1, L) -- EUP rsqrt
    shift = beta_ref[...] - mean * scale                  # (1, L)
    y = x * scale + shift                                 # 2 full-tile VPU ops
    return y * jax.nn.sigmoid(y)                          # SiLU (sigmoid on EUP)


def _conv3x3_flat(h, w_ref, bias_ref):
    """3x3 'same' conv of flat h:(H, W*Cin) -> (H, W*Cout) as ONE MXU matmul.

    w_ref:(3*W*Cin, W*Cout) bf16 banded weights built in the wrapper; the three
    vertically shifted rows are concatenated along the contraction dim, the
    horizontal taps / zero padding live inside the band structure of w_ref.
    Taps are assembled directly in bf16 to halve the concat traffic.
    """
    H, L = h.shape
    hb = h.astype(jnp.bfloat16)
    z = jnp.zeros((1, L), jnp.bfloat16)
    up = jnp.concatenate([z, hb[:H - 1, :]], axis=0)      # input row h-1 (kh=0)
    dn = jnp.concatenate([hb[1:, :], z], axis=0)          # input row h+1 (kh=2)
    taps = jnp.concatenate([up, hb, dn], axis=1)          # (H, 3*L) bf16, lane-aligned
    acc = jnp.dot(taps, w_ref[...],
                  preferred_element_type=jnp.float32)     # bf16 in, f32 accumulate
    return acc + bias_ref[...]


def vae_residual_kernel(x_ref,
                        m1_ref, g1_ref, b1_ref, w1_ref, c1b_ref,
                        m2_ref, g2_ref, b2_ref, w2_ref, c2b_ref,
                        *rest, has_res, eps):
    if has_res:
        rw_ref, rb_ref, out_ref = rest
    else:
        (out_ref,) = rest

    x = x_ref[0]                                          # (H, W*Cin) f32

    if has_res:                                           # 1x1 conv residual
        resd = jnp.dot(x.astype(jnp.bfloat16), rw_ref[...],
                       preferred_element_type=jnp.float32) + rb_ref[...]
    else:                                                 # nn.Identity (Cin == Cout)
        resd = x

    h1 = _gn_silu_flat(x, m1_ref, g1_ref, b1_ref, eps)    # GN1 + SiLU
    y1 = _conv3x3_flat(h1, w1_ref, c1b_ref)               # conv1 -> (H, W*Cout)
    h2 = _gn_silu_flat(y1, m2_ref, g2_ref, b2_ref, eps)   # GN2 + SiLU
    y2 = _conv3x3_flat(h2, w2_ref, c2b_ref)               # conv2 -> (H, W*Cout)

    out_ref[0] = (y2 + resd).astype(out_ref.dtype)        # lane-dense store


def vae_residual_forward(x_nchw, params, *, num_groups=BATCH_SIZE, eps=GN_EPS):
    N, Cin, H, W = x_nchw.shape
    Cout = params["conv1_w"].shape[0]
    Lin, Lout = W * Cin, W * Cout
    has_res = params.get("res_w") is not None
    f32, bf16 = jnp.float32, jnp.bfloat16

    # NCHW -> lane-dense flat layout (N, H, W*C)
    x = jnp.transpose(x_nchw, (0, 2, 3, 1)).reshape(N, H, Lin).astype(f32)

    def group_mean_matrix(C, L):
        cpg = C // num_groups
        grp = (jnp.arange(L) % C) // cpg
        m = (grp[:, None] == grp[None, :]).astype(f32)
        return m / float(H * W * cpg)                     # (L, L)

    def tile_lanes(v):                                    # (C,) -> (1, W*C)
        return jnp.tile(v.astype(f32), W).reshape(1, -1)

    def band_weights(wt):
        """(O, I, 3, 3) conv weight -> (3*W*I, W*O) banded bf16 matrix.

        B[kh*W*I + p*I + i, w*O + o] = wt[o, i, kh, p - w + 1] (0 elsewhere):
        horizontal taps and the 'same' zero padding are folded into the band.
        """
        O, I = wt.shape[0], wt.shape[1]
        p_ = jnp.arange(W)[:, None, None]
        w_ = jnp.arange(W)[None, :, None]
        kx = jnp.arange(3)[None, None, :]
        sel = (p_ == w_ + kx - 1).astype(f32)             # (W, W, 3)
        b = jnp.einsum("pwx,oiyx->ypiwo", sel, wt.astype(f32))
        return b.reshape(3 * W * I, W * O).astype(bf16)

    m1 = group_mean_matrix(Cin, Lin)
    g1 = tile_lanes(params["gn1_gamma"])
    b1 = tile_lanes(params["gn1_beta"])
    w1 = band_weights(params["conv1_w"])
    c1b = tile_lanes(params["conv1_b"])
    m2 = group_mean_matrix(Cout, Lout)
    g2 = tile_lanes(params["gn2_gamma"])
    b2 = tile_lanes(params["gn2_beta"])
    w2 = band_weights(params["conv2_w"])
    c2b = tile_lanes(params["conv2_b"])

    def full(shape):
        return pl.BlockSpec(shape, lambda b, _n=len(shape): (0,) * _n)

    inputs = [x, m1, g1, b1, w1, c1b, m2, g2, b2, w2, c2b]
    in_specs = [
        pl.BlockSpec((1, H, Lin), lambda b: (b, 0, 0)),
        full((Lin, Lin)), full((1, Lin)), full((1, Lin)),
        full((3 * Lin, Lout)), full((1, Lout)),
        full((Lout, Lout)), full((1, Lout)), full((1, Lout)),
        full((3 * Lout, Lout)), full((1, Lout)),
    ]
    if has_res:
        # 1x1 conv residual as a single block-diagonal matmul in the flat layout.
        rw = jnp.kron(jnp.eye(W, dtype=f32),
                      params["res_w"][:, :, 0, 0].astype(f32).T).astype(bf16)
        rb = tile_lanes(params["res_b"])
        inputs += [rw, rb]
        in_specs += [full((Lin, Lout)), full((1, Lout))]
    else:
        assert Cin == Cout, "identity residual requires in_channels == out_channels"

    kernel = functools.partial(vae_residual_kernel, has_res=has_res, eps=eps)

    # Advisory cost estimate so XLA schedules the custom call sensibly.
    flops = N * (
        2 * H * (3 * Lin) * Lout          # conv1 matmul
        + 2 * H * (3 * Lout) * Lout       # conv2 matmul
        + 2 * 2 * Lin * Lin               # GN1 stats matmul
        + 2 * 2 * Lout * Lout             # GN2 stats matmul
        + (2 * H * Lin * Lout if has_res else 0)
        + 12 * H * (Lin + 2 * Lout)       # elementwise (GN apply, SiLU mul, adds)
    )
    transcendentals = N * (H * (Lin + Lout) + 2 * (Lin + Lout))  # sigmoid + rsqrt
    bytes_accessed = int(
        x.size * 4 + N * H * Lout * 4
        + sum(int(a.size) * (2 if a.dtype == bf16 else 4) for a in inputs[1:]))
    cost = pl.CostEstimate(flops=int(flops),
                           transcendentals=int(transcendentals),
                           bytes_accessed=bytes_accessed)

    out = pl.pallas_call(
        kernel,
        out_shape=jax.ShapeDtypeStruct((N, H, Lout), f32),
        grid_spec=pltpu.PrefetchScalarGridSpec(
            num_scalar_prefetch=0,
            grid=(N,),
            in_specs=in_specs,
            out_specs=pl.BlockSpec((1, H, Lout), lambda b: (b, 0, 0)),
        ),
        compiler_params=pltpu.CompilerParams(
            dimension_semantics=("parallel",),   # batch iters independent -> v7x megacore
            vmem_limit_bytes=32 * 1024 * 1024,
        ),
        cost_estimate=cost,
    )(*inputs)

    # TODO(synk): for production VAE resolutions (e.g. 512ch @ 64x64+), add an H-tile
    # grid axis with a 1-row halo and switch the banded-weight conv to an im2col
    # matmul so the per-conv weight matrix stays O(9*Cin*Cout) instead of O((W*C)^2).

    out = out.reshape(N, H, W, Cout)
    return jnp.transpose(out, (0, 3, 1, 2)).astype(x_nchw.dtype)  # NHWC -> NCHW


def vae_residual_reference(x, params, *, num_groups=BATCH_SIZE, eps=GN_EPS):
    """Pure-JAX NCHW reference matching the PyTorch forward."""
    def gn(v, gamma, beta):
        N, C, H, W = v.shape
        vg = v.reshape(N, num_groups, C // num_groups, H, W)
        m = vg.mean(axis=(2, 3, 4), keepdims=True)
        var = ((vg - m) ** 2).mean(axis=(2, 3, 4), keepdims=True)
        vn = ((vg - m) / jnp.sqrt(var + eps)).reshape(N, C, H, W)
        return vn * gamma.reshape(1, C, 1, 1) + beta.reshape(1, C, 1, 1)

    def silu(v):
        return v * jax.nn.sigmoid(v)

    def conv(v, w, b, pad):
        y = lax.conv_general_dilated(
            v, w, (1, 1), [(pad, pad), (pad, pad)],
            dimension_numbers=("NCHW", "OIHW", "NCHW"),
            precision=lax.Precision.HIGHEST)
        return y + b.reshape(1, -1, 1, 1)

    resd = x if params.get("res_w") is None else conv(x, params["res_w"], params["res_b"], 0)
    h = silu(gn(x, params["gn1_gamma"], params["gn1_beta"]))
    h = conv(h, params["conv1_w"], params["conv1_b"], 1)
    h = silu(gn(h, params["gn2_gamma"], params["gn2_beta"]))
    h = conv(h, params["conv2_w"], params["conv2_b"], 1)
    return h + resd


def _make_params(key, Cin, Cout):
    ks = jax.random.split(key, 10)
    p = {
        "gn1_gamma": 1.0 + 0.1 * jax.random.normal(ks[0], (Cin,), jnp.float32),
        "gn1_beta": 0.1 * jax.random.normal(ks[1], (Cin,), jnp.float32),
        "conv1_w": 0.1 * jax.random.normal(ks[2], (Cout, Cin, 3, 3), jnp.float32),
        "conv1_b": 0.1 * jax.random.normal(ks[3], (Cout,), jnp.float32),
        "gn2_gamma": 1.0 + 0.1 * jax.random.normal(ks[4], (Cout,), jnp.float32),
        "gn2_beta": 0.1 * jax.random.normal(ks[5], (Cout,), jnp.float32),
        "conv2_w": 0.1 * jax.random.normal(ks[6], (Cout, Cout, 3, 3), jnp.float32),
        "conv2_b": 0.1 * jax.random.normal(ks[7], (Cout,), jnp.float32),
    }
    if Cin != Cout:                                       # 1x1 conv residual branch
        p["res_w"] = 0.1 * jax.random.normal(ks[8], (Cout, Cin, 1, 1), jnp.float32)
        p["res_b"] = 0.1 * jax.random.normal(ks[9], (Cout,), jnp.float32)
    return p


if __name__ == "__main__":
    key = jax.random.PRNGKey(0)
    kp1, kx1, kp2, kx2 = jax.random.split(key, 4)
    N, H, W = 2, 16, 16

    # case 1: Cin != Cout -> 1x1-conv residual branch
    Cin, Cout = 8, 16
    params = _make_params(kp1, Cin, Cout)
    x = jax.random.normal(kx1, (N, Cin, H, W), jnp.float32)
    out = jax.block_until_ready(vae_residual_forward(x, params))
    ref = jax.block_until_ready(vae_residual_reference(x, params))
    assert out.shape == (N, Cout, H, W), out.shape
    err = float(jnp.max(jnp.abs(out - ref)))
    mae = float(jnp.mean(jnp.abs(out - ref)))
    assert err < 5e-2 and mae < 1e-2, f"conv-residual case: max={err} mean={mae}"

    # case 2: Cin == Cout -> identity residual (specialized away at trace time)
    Cin = Cout = 16
    params = _make_params(kp2, Cin, Cout)
    x = jax.random.normal(kx2, (N, Cin, H, W), jnp.float32)
    out = jax.block_until_ready(vae_residual_forward(x, params))
    ref = jax.block_until_ready(vae_residual_reference(x, params))
    assert out.shape == (N, Cout, H, W), out.shape
    err = float(jnp.max(jnp.abs(out - ref)))
    mae = float(jnp.mean(jnp.abs(out - ref)))
    assert err < 5e-2 and mae < 1e-2, f"identity-residual case: max={err} mean={mae}"

    print("KERNEL_OK")
</pallas_src>

<mosaic_0001>
module attributes {stable_mosaic.version = 11 : i64} {
  func.func @vae_residual_kernel(%arg0: i32, %arg1: memref<1x16x128xf32, #tpu.memory_space<vmem>>, %arg2: memref<128x128xf32, #tpu.memory_space<vmem>>, %arg3: memref<1x128xf32, #tpu.memory_space<vmem>>, %arg4: memref<1x128xf32, #tpu.memory_space<vmem>>, %arg5: memref<384x256xbf16, #tpu.memory_space<vmem>>, %arg6: memref<1x256xf32, #tpu.memory_space<vmem>>, %arg7: memref<256x256xf32, #tpu.memory_space<vmem>>, %arg8: memref<1x256xf32, #tpu.memory_space<vmem>>, %arg9: memref<1x256xf32, #tpu.memory_space<vmem>>, %arg10: memref<768x256xbf16, #tpu.memory_space<vmem>>, %arg11: memref<1x256xf32, #tpu.memory_space<vmem>>, %arg12: memref<128x256xbf16, #tpu.memory_space<vmem>>, %arg13: memref<1x256xf32, #tpu.memory_space<vmem>>, %arg14: memref<1x16x256xf32, #tpu.memory_space<vmem>>) attributes {dimension_semantics = [#tpu.dimension_semantics<parallel>], iteration_bounds = array<i64: 2>, scalar_prefetch = 0 : i64, scratch_operands = 0 : i64, tpu.core_type = #tpu.core_type<tc>, window_params = [{transform_indices = @transform_0, window_bounds = array<i64: 1, 16, 128>}, {pipeline_mode = #tpu.pipeline_mode<synchronous>, transform_indices = @transform_1, window_bounds = array<i64: 128, 128>}, {pipeline_mode = #tpu.pipeline_mode<synchronous>, transform_indices = @transform_2, window_bounds = array<i64: 1, 128>}, {pipeline_mode = #tpu.pipeline_mode<synchronous>, transform_indices = @transform_3, window_bounds = array<i64: 1, 128>}, {pipeline_mode = #tpu.pipeline_mode<synchronous>, transform_indices = @transform_4, window_bounds = array<i64: 384, 256>}, {pipeline_mode = #tpu.pipeline_mode<synchronous>, transform_indices = @transform_5, window_bounds = array<i64: 1, 256>}, {pipeline_mode = #tpu.pipeline_mode<synchronous>, transform_indices = @transform_6, window_bounds = array<i64: 256, 256>}, {pipeline_mode = #tpu.pipeline_mode<synchronous>, transform_indices = @transform_7, window_bounds = array<i64: 1, 256>}, {pipeline_mode = #tpu.pipeline_mode<synchronous>, transform_indices = @transform_8, window_bounds = array<i64: 1, 256>}, {pipeline_mode = #tpu.pipeline_mode<synchronous>, transform_indices = @transform_9, window_bounds = array<i64: 768, 256>}, {pipeline_mode = #tpu.pipeline_mode<synchronous>, transform_indices = @transform_10, window_bounds = array<i64: 1, 256>}, {pipeline_mode = #tpu.pipeline_mode<synchronous>, transform_indices = @transform_11, window_bounds = array<i64: 128, 256>}, {pipeline_mode = #tpu.pipeline_mode<synchronous>, transform_indices = @transform_12, window_bounds = array<i64: 1, 256>}, {transform_indices = @transform_13, window_bounds = array<i64: 1, 16, 256>}]} {
    %c0 = arith.constant 0 : index
    %c0_0 = arith.constant 0 : index
    %c0_1 = arith.constant 0 : index
    %0 = vector.load %arg1[%c0, %c0_0, %c0_1] : memref<1x16x128xf32, #tpu.memory_space<vmem>>, vector<1x16x128xf32>
    %1 = vector.shape_cast %0 : vector<1x16x128xf32> to vector<16x128xf32>
    %2 = arith.truncf %1 : vector<16x128xf32> to vector<16x128xbf16>
    %c0_2 = arith.constant 0 : index
    %c0_3 = arith.constant 0 : index
    %3 = vector.load %arg12[%c0_2, %c0_3] : memref<128x256xbf16, #tpu.memory_space<vmem>>, vector<128x256xbf16>
    %cst = arith.constant dense<0.000000e+00> : vector<16x256xf32>
    %4 = tpu.matmul %2, %3, %cst {dimension_numbers = #tpu.dot_dimension_numbers<[1], [0], [0], [1], [0, 0, 1, 1], [], []>} : vector<16x128xbf16>, vector<128x256xbf16>, vector<16x256xf32> -> vector<16x256xf32>
    %c0_4 = arith.constant 0 : index
    %c0_5 = arith.constant 0 : index
    %5 = vector.load %arg13[%c0_4, %c0_5] : memref<1x256xf32, #tpu.memory_space<vmem>>, vector<1x256xf32>
    %6 = vector.broadcast %5 : vector<1x256xf32> to vector<16x256xf32>
    %7 = arith.addf %4, %6 : vector<16x256xf32>
    %cst_6 = arith.constant dense<0.000000e+00> : vector<128xf32>
    %8 = vector.multi_reduction <add>, %1, %cst_6 [0] : vector<16x128xf32> to vector<128xf32>
    %9 = vector.shape_cast %8 : vector<128xf32> to vector<1x128xf32>
    %10 = arith.mulf %1, %1 : vector<16x128xf32>
    %cst_7 = arith.constant dense<0.000000e+00> : vector<128xf32>
    %11 = vector.multi_reduction <add>, %10, %cst_7 [0] : vector<16x128xf32> to vector<128xf32>
    %12 = vector.shape_cast %11 : vector<128xf32> to vector<1x128xf32>
    %13 = tpu.concatenate %9, %12 in 0 : vector<1x128xf32>, vector<1x128xf32> -> vector<2x128xf32>
    %c0_8 = arith.constant 0 : index
    %c0_9 = arith.constant 0 : index
    %14 = vector.load %arg2[%c0_8, %c0_9] : memref<128x128xf32, #tpu.memory_space<vmem>>, vector<128x128xf32>
    %cst_10 = arith.constant dense<0.000000e+00> : vector<2x128xf32>
    %15 = tpu.matmul %13, %14, %cst_10 {dimension_numbers = #tpu.dot_dimension_numbers<[1], [0], [0], [1], [0, 0, 1, 1], [], []>, precision = #tpu.contract_precision<fp32>} : vector<2x128xf32>, vector<128x128xf32>, vector<2x128xf32> -> vector<2x128xf32>
    %16 = vector.extract_strided_slice %15 {offsets = [0, 0], sizes = [1, 128], strides = [1, 1]} : vector<2x128xf32> to vector<1x128xf32>
    %17 = vector.extract_strided_slice %15 {offsets = [1, 0], sizes = [1, 128], strides = [1, 1]} : vector<2x128xf32> to vector<1x128xf32>
    %18 = arith.mulf %16, %16 : vector<1x128xf32>
    %19 = arith.subf %17, %18 : vector<1x128xf32>
    %cst_11 = arith.constant 0.000000e+00 : f32
    %20 = vector.broadcast %cst_11 : f32 to vector<1x128xf32>
    %21 = arith.maximumf %19, %20 : vector<1x128xf32>
    %cst_12 = arith.constant 9.99999974E-6 : f32
    %22 = vector.broadcast %cst_12 : f32 to vector<1x128xf32>
    %23 = arith.addf %21, %22 : vector<1x128xf32>
    %24 = math.rsqrt %23 : vector<1x128xf32>
    %c0_13 = arith.constant 0 : index
    %c0_14 = arith.constant 0 : index
    %25 = vector.load %arg3[%c0_13, %c0_14] : memref<1x128xf32, #tpu.memory_space<vmem>>, vector<1x128xf32>
    %26 = arith.mulf %24, %25 : vector<1x128xf32>
    %c0_15 = arith.constant 0 : index
    %c0_16 = arith.constant 0 : index
    %27 = vector.load %arg4[%c0_15, %c0_16] : memref<1x128xf32, #tpu.memory_space<vmem>>, vector<1x128xf32>
    %28 = arith.mulf %16, %26 : vector<1x128xf32>
    %29 = arith.subf %27, %28 : vector<1x128xf32>
    %30 = vector.broadcast %26 : vector<1x128xf32> to vector<16x128xf32>
    %31 = arith.mulf %1, %30 : vector<16x128xf32>
    %32 = vector.broadcast %29 : vector<1x128xf32> to vector<16x128xf32>
    %33 = arith.addf %31, %32 : vector<16x128xf32>
    %34 = arith.negf %33 : vector<16x128xf32>
    %35 = math.exp %34 : vector<16x128xf32>
    %cst_17 = arith.constant 1.000000e+00 : f32
    %36 = vector.broadcast %cst_17 : f32 to vector<16x128xf32>
    %37 = arith.addf %36, %35 : vector<16x128xf32>
    %38 = arith.divf %36, %37 : vector<16x128xf32>
    %39 = arith.mulf %33, %38 : vector<16x128xf32>
    %40 = arith.truncf %39 : vector<16x128xf32> to vector<16x128xbf16>
    %cst_18 = arith.constant 0.000000e+00 : bf16
    %41 = vector.broadcast %cst_18 : bf16 to vector<1x128xbf16>
    %42 = vector.extract_strided_slice %40 {offsets = [0, 0], sizes = [15, 128], strides = [1, 1]} : vector<16x128xbf16> to vector<15x128xbf16>
    %43 = tpu.concatenate %41, %42 in 0 : vector<1x128xbf16>, vector<15x128xbf16> -> vector<16x128xbf16>
    %44 = vector.extract_strided_slice %40 {offsets = [1, 0], sizes = [15, 128], strides = [1, 1]} : vector<16x128xbf16> to vector<15x128xbf16>
    %45 = tpu.concatenate %44, %41 in 0 : vector<15x128xbf16>, vector<1x128xbf16> -> vector<16x128xbf16>
    %46 = tpu.concatenate %43, %40, %45 in 1 : vector<16x128xbf16>, vector<16x128xbf16>, vector<16x128xbf16> -> vector<16x384xbf16>
    %c0_19 = arith.constant 0 : index
    %c0_20 = arith.constant 0 : index
    %47 = vector.load %arg5[%c0_19, %c0_20] : memref<384x256xbf16, #tpu.memory_space<vmem>>, vector<384x256xbf16>
    %cst_21 = arith.constant dense<0.000000e+00> : vector<16x256xf32>
    %48 = tpu.matmul %46, %47, %cst_21 {dimension_numbers = #tpu.dot_dimension_numbers<[1], [0], [0], [1], [0, 0, 1, 1], [], []>} : vector<16x384xbf16>, vector<384x256xbf16>, vector<16x256xf32> -> vector<16x256xf32>
    %c0_22 = arith.constant 0 : index
    %c0_23 = arith.constant 0 : index
    %49 = vector.load %arg6[%c0_22, %c0_23] : memref<1x256xf32, #tpu.memory_space<vmem>>, vector<1x256xf32>
    %50 = vector.broadcast %49 : vector<1x256xf32> to vector<16x256xf32>
    %51 = arith.addf %48, %50 : vector<16x256xf32>
    %cst_24 = arith.constant dense<0.000000e+00> : vector<256xf32>
    %52 = vector.multi_reduction <add>, %51, %cst_24 [0] : vector<16x256xf32> to vector<256xf32>
    %53 = vector.shape_cast %52 : vector<256xf32> to vector<1x256xf32>
    %54 = arith.mulf %51, %51 : vector<16x256xf32>
    %cst_25 = arith.constant dense<0.000000e+00> : vector<256xf32>
    %55 = vector.multi_reduction <add>, %54, %cst_25 [0] : vector<16x256xf32> to vector<256xf32>
    %56 = vector.shape_cast %55 : vector<256xf32> to vector<1x256xf32>
    %57 = tpu.concatenate %53, %56 in 0 : vector<1x256xf32>, vector<1x256xf32> -> vector<2x256xf32>
    %c0_26 = arith.constant 0 : index
    %c0_27 = arith.constant 0 : index
    %58 = vector.load %arg7[%c0_26, %c0_27] : memref<256x256xf32, #tpu.memory_space<vmem>>, vector<256x256xf32>
    %cst_28 = arith.constant dense<0.000000e+00> : vector<2x256xf32>
    %59 = tpu.matmul %57, %58, %cst_28 {dimension_numbers = #tpu.dot_dimension_numbers<[1], [0], [0], [1], [0, 0, 1, 1], [], []>, precision = #tpu.contract_precision<fp32>} : vector<2x256xf32>, vector<256x256xf32>, vector<2x256xf32> -> vector<2x256xf32>
    %60 = vector.extract_strided_slice %59 {offsets = [0, 0], sizes = [1, 256], strides = [1, 1]} : vector<2x256xf32> to vector<1x256xf32>
    %61 = vector.extract_strided_slice %59 {offsets = [1, 0], sizes = [1, 256], strides = [1, 1]} : vector<2x256xf32> to vector<1x256xf32>
    %62 = arith.mulf %60, %60 : vector<1x256xf32>
    %63 = arith.subf %61, %62 : vector<1x256xf32>
    %cst_29 = arith.constant 0.000000e+00 : f32
    %64 = vector.broadcast %cst_29 : f32 to vector<1x256xf32>
    %65 = arith.maximumf %63, %64 : vector<1x256xf32>
    %cst_30 = arith.constant 9.99999974E-6 : f32
    %66 = vector.broadcast %cst_30 : f32 to vector<1x256xf32>
    %67 = arith.addf %65, %66 : vector<1x256xf32>
    %68 = math.rsqrt %67 : vector<1x256xf32>
    %c0_31 = arith.constant 0 : index
    %c0_32 = arith.constant 0 : index
    %69 = vector.load %arg8[%c0_31, %c0_32] : memref<1x256xf32, #tpu.memory_space<vmem>>, vector<1x256xf32>
    %70 = arith.mulf %68, %69 : vector<1x256xf32>
    %c0_33 = arith.constant 0 : index
    %c0_34 = arith.constant 0 : index
    %71 = vector.load %arg9[%c0_33, %c0_34] : memref<1x256xf32, #tpu.memory_space<vmem>>, vector<1x256xf32>
    %72 = arith.mulf %60, %70 : vector<1x256xf32>
    %73 = arith.subf %71, %72 : vector<1x256xf32>
    %74 = vector.broadcast %70 : vector<1x256xf32> to vector<16x256xf32>
    %75 = arith.mulf %51, %74 : vector<16x256xf32>
    %76 = vector.broadcast %73 : vector<1x256xf32> to vector<16x256xf32>
    %77 = arith.addf %75, %76 : vector<16x256xf32>
    %78 = arith.negf %77 : vector<16x256xf32>
    %79 = math.exp %78 : vector<16x256xf32>
    %cst_35 = arith.constant 1.000000e+00 : f32
    %80 = vector.broadcast %cst_35 : f32 to vector<16x256xf32>
    %81 = arith.addf %80, %79 : vector<16x256xf32>
    %82 = arith.divf %80, %81 : vector<16x256xf32>
    %83 = arith.mulf %77, %82 : vector<16x256xf32>
    %84 = arith.truncf %83 : vector<16x256xf32> to vector<16x256xbf16>
    %cst_36 = arith.constant 0.000000e+00 : bf16
    %85 = vector.broadcast %cst_36 : bf16 to vector<1x256xbf16>
    %86 = vector.extract_strided_slice %84 {offsets = [0, 0], sizes = [15, 256], strides = [1, 1]} : vector<16x256xbf16> to vector<15x256xbf16>
    %87 = tpu.concatenate %85, %86 in 0 : vector<1x256xbf16>, vector<15x256xbf16> -> vector<16x256xbf16>
    %88 = vector.extract_strided_slice %84 {offsets = [1, 0], sizes = [15, 256], strides = [1, 1]} : vector<16x256xbf16> to vector<15x256xbf16>
    %89 = tpu.concatenate %88, %85 in 0 : vector<15x256xbf16>, vector<1x256xbf16> -> vector<16x256xbf16>
    %90 = tpu.concatenate %87, %84, %89 in 1 : vector<16x256xbf16>, vector<16x256xbf16>, vector<16x256xbf16> -> vector<16x768xbf16>
    %c0_37 = arith.constant 0 : index
    %c0_38 = arith.constant 0 : index
    %91 = vector.load %arg10[%c0_37, %c0_38] : memref<768x256xbf16, #tpu.memory_space<vmem>>, vector<768x256xbf16>
    %cst_39 = arith.constant dense<0.000000e+00> : vector<16x256xf32>
    %92 = tpu.matmul %90, %91, %cst_39 {dimension_numbers = #tpu.dot_dimension_numbers<[1], [0], [0], [1], [0, 0, 1, 1], [], []>} : vector<16x768xbf16>, vector<768x256xbf16>, vector<16x256xf32> -> vector<16x256xf32>
    %c0_40 = arith.constant 0 : index
    %c0_41 = arith.constant 0 : index
    %93 = vector.load %arg11[%c0_40, %c0_41] : memref<1x256xf32, #tpu.memory_space<vmem>>, vector<1x256xf32>
    %94 = vector.broadcast %93 : vector<1x256xf32> to vector<16x256xf32>
    %95 = arith.addf %92, %94 : vector<16x256xf32>
    %96 = arith.addf %95, %7 : vector<16x256xf32>
    %c0_42 = arith.constant 0 : index
    %c0_43 = arith.constant 0 : index
    %c0_44 = arith.constant 0 : index
    %97 = vector.load %arg14[%c0_42, %c0_43, %c0_44] : memref<1x16x256xf32, #tpu.memory_space<vmem>>, vector<1x16x256xf32>
    %98 = vector.shape_cast %97 : vector<1x16x256xf32> to vector<16x256xf32>
    %99 = vector.shape_cast %96 : vector<16x256xf32> to vector<1x16x256xf32>
    tpu.vector_store %arg14[%c0_42, %c0_43, %c0_44], %99 {strides = array<i32>} : memref<1x16x256xf32, #tpu.memory_space<vmem>>, vector<1x16x256xf32>,
    return
  }
  func.func @transform_0(%arg0: i32) -> (i32, i32, i32) {
    %c0_i32 = arith.constant 0 : i32
    %c0_i32_0 = arith.constant 0 : i32
    %c0_i32_1 = arith.constant 0 : i32
    return %arg0, %c0_i32, %c0_i32_0 : i32, i32, i32
  }
  func.func @transform_1(%arg0: i32) -> (i32, i32) {
    %c0_i32 = arith.constant 0 : i32
    %c0_i32_0 = arith.constant 0 : i32
    %c0_i32_1 = arith.constant 0 : i32
    return %c0_i32, %c0_i32_0 : i32, i32
  }
  func.func @transform_2(%arg0: i32) -> (i32, i32) {
    %c0_i32 = arith.constant 0 : i32
    %c0_i32_0 = arith.constant 0 : i32
    %c0_i32_1 = arith.constant 0 : i32
    return %c0_i32, %c0_i32_0 : i32, i32
  }
  func.func @transform_3(%arg0: i32) -> (i32, i32) {
    %c0_i32 = arith.constant 0 : i32
    %c0_i32_0 = arith.constant 0 : i32
    %c0_i32_1 = arith.constant 0 : i32
    return %c0_i32, %c0_i32_0 : i32, i32
  }
  func.func @transform_4(%arg0: i32) -> (i32, i32) {
    %c0_i32 = arith.constant 0 : i32
    %c0_i32_0 = arith.constant 0 : i32
    %c0_i32_1 = arith.constant 0 : i32
    return %c0_i32, %c0_i32_0 : i32, i32
  }
  func.func @transform_5(%arg0: i32) -> (i32, i32) {
    %c0_i32 = arith.constant 0 : i32
    %c0_i32_0 = arith.constant 0 : i32
    %c0_i32_1 = arith.constant 0 : i32
    return %c0_i32, %c0_i32_0 : i32, i32
  }
  func.func @transform_6(%arg0: i32) -> (i32, i32) {
    %c0_i32 = arith.constant 0 : i32
    %c0_i32_0 = arith.constant 0 : i32
    %c0_i32_1 = arith.constant 0 : i32
    return %c0_i32, %c0_i32_0 : i32, i32
  }
  func.func @transform_7(%arg0: i32) -> (i32, i32) {
    %c0_i32 = arith.constant 0 : i32
    %c0_i32_0 = arith.constant 0 : i32
    %c0_i32_1 = arith.constant 0 : i32
    return %c0_i32, %c0_i32_0 : i32, i32
  }
  func.func @transform_8(%arg0: i32) -> (i32, i32) {
    %c0_i32 = arith.constant 0 : i32
    %c0_i32_0 = arith.constant 0 : i32
    %c0_i32_1 = arith.constant 0 : i32
    return %c0_i32, %c0_i32_0 : i32, i32
  }
  func.func @transform_9(%arg0: i32) -> (i32, i32) {
    %c0_i32 = arith.constant 0 : i32
    %c0_i32_0 = arith.constant 0 : i32
    %c0_i32_1 = arith.constant 0 : i32
    return %c0_i32, %c0_i32_0 : i32, i32
  }
  func.func @transform_10(%arg0: i32) -> (i32, i32) {
    %c0_i32 = arith.constant 0 : i32
    %c0_i32_0 = arith.constant 0 : i32
    %c0_i32_1 = arith.constant 0 : i32
    return %c0_i32, %c0_i32_0 : i32, i32
  }
  func.func @transform_11(%arg0: i32) -> (i32, i32) {
    %c0_i32 = arith.constant 0 : i32
    %c0_i32_0 = arith.constant 0 : i32
    %c0_i32_1 = arith.constant 0 : i32
    return %c0_i32, %c0_i32_0 : i32, i32
  }
  func.func @transform_12(%arg0: i32) -> (i32, i32) {
    %c0_i32 = arith.constant 0 : i32
    %c0_i32_0 = arith.constant 0 : i32
    %c0_i32_1 = arith.constant 0 : i32
    return %c0_i32, %c0_i32_0 : i32, i32
  }
  func.func @transform_13(%arg0: i32) -> (i32, i32, i32) {
    %c0_i32 = arith.constant 0 : i32
    %c0_i32_0 = arith.constant 0 : i32
    %c0_i32_1 = arith.constant 0 : i32
    return %arg0, %c0_i32, %c0_i32_0 : i32, i32, i32
  }
}

</mosaic_0001>

<llo_original>
// kernel: tpu_custom_call.1
$region0: #{tpu_custom_call.1}
  #allocation0 [shape = 'u32[]', space=smem, size = 0x4, offset = 0x4, fixed_abs, tag = 'smem constant byte address 0x4 - core index']
  #allocation1 [shape = 'u32[144,128]{1,0:T(1,128)}', space=vmem, size = 0x12000, scoped, tag = 'internal scratch']
  %s0 = inlined_call_operand.hbm [shape: f32[2,16,128], index: 0, kind: input, shape index: {}]
  %s1 = inlined_call_operand.hbm [shape: f32[128,128], index: 1, kind: input, shape index: {}]
  %s2 = inlined_call_operand.vmem [shape: f32[1,128], index: 2, kind: input, shape index: {}]
  %s3 = inlined_call_operand.hbm [shape: f32[1,128], index: 3, kind: input, shape index: {}]
  %s4 = inlined_call_operand.hbm [shape: bf16[384,256], index: 4, kind: input, shape index: {}]
  %s5 = inlined_call_operand.vmem [shape: f32[1,256], index: 5, kind: input, shape index: {}]
  %s6 = inlined_call_operand.hbm [shape: f32[256,256], index: 6, kind: input, shape index: {}]
  %s7 = inlined_call_operand.vmem [shape: f32[1,256], index: 7, kind: input, shape index: {}]
  %s8 = inlined_call_operand.vmem [shape: f32[1,256], index: 8, kind: input, shape index: {}]
  %s9 = inlined_call_operand.hbm [shape: bf16[768,256], index: 9, kind: input, shape index: {}]
  %s10 = inlined_call_operand.vmem [shape: f32[1,256], index: 10, kind: input, shape index: {}]
  %s11 = inlined_call_operand.hbm [shape: bf16[128,256], index: 11, kind: input, shape index: {}]
  %s12 = inlined_call_operand.vmem [shape: f32[1,256], index: 12, kind: input, shape index: {}]
  %s13 = inlined_call_operand.hbm [shape: f32[2,16,256], index: 13, kind: output, shape index: {}]
  %s14 = sld [smem:[#allocation0]]
  $region113: #{tpu_custom_call.1} parent=0
    _
  %s16 = ssub.s32 1, %s14
  %s17 = scalar_select 0, %s16, %s14
  $region1: #{tpu_custom_call.1} parent=0
    #allocation2 [shape = 'u8[16384]{0}', space=vmem, size = 0x4000, scoped, tag = 'input window, operand 0']
    #allocation3 [shape = 's32[2]{0}', space=sflag, size = 0x8, scoped, tag = 'scoped memory for tpu_custom_call.1']
    #allocation4 [shape = 's32[2]{0}', space=sflag, size = 0x8, scoped, tag = 'scoped memory for tpu_custom_call.1']
    #allocation5 [shape = 'u8[65536]{0}', space=vmem, size = 0x10000, scoped, tag = 'input window, operand 1, single buffered']
    #allocation6 [shape = 's32[1]{0}', space=sflag, size = 0x4, scoped, tag = 'scoped memory for tpu_custom_call.1']
    #allocation7 [shape = 'u8[512]{0}', space=vmem, size = 0x400, scoped, tag = 'input window, operand 3, single buffered']
    #allocation8 [shape = 'u8[196608]{0}', space=vmem, size = 0x30000, scoped, tag = 'input window, operand 4, single buffered']
    #allocation9 [shape = 's32[1]{0}', space=sflag, size = 0x4, scoped, tag = 'scoped memory for tpu_custom_call.1']
    #allocation10 [shape = 'u8[262144]{0}', space=vmem, size = 0x40000, scoped, tag = 'input window, operand 6, single buffered']
    #allocation11 [shape = 'u8[393216]{0}', space=vmem, size = 0x60000, scoped, tag = 'input window, operand 9, single buffered']
    #allocation12 [shape = 's32[1]{0}', space=sflag, size = 0x4, scoped, tag = 'scoped memory for tpu_custom_call.1']
    #allocation13 [shape = 'u8[65536]{0}', space=vmem, size = 0x10000, scoped, tag = 'input window, operand 11, single buffered']
    #allocation14 [shape = 'u8[32768]{0}', space=vmem, size = 0x8000, scoped, tag = 'output window, operand 0']
    %18 = vsyncpa [#allocation3], 0
    %s19 = scalar_lea.sflag [#allocation3], 1
    %20 = vsyncpa %s19, 0
    %21 = vsyncpa [#allocation6], 0
    %22 = vsyncpa [#allocation9], 0
    %23 = vsyncpa [#allocation12], 0
    %24 = vsyncpa [#allocation4], 0
    %s25 = scalar_lea.sflag [#allocation4], 1
    %26 = vsyncpa %s25, 0
    loop: start=0, step=1, limit=4
    $region2: #{tpu_custom_call.1} parent=1 // loop_pre_header
      _
    $region3: #{tpu_custom_call.1} parent=1 // loop_header
      %s28 = sphi 0, %s32
      %p29 = scmp.ge.s32.totalorder %s28, 4
      %s38 = sphi 0, %s40
      %s41 = sphi 0, %s38
      %s42 = sphi 0, %s41
      %s58 = sphi 0, %s42
      %s62 = sphi 0, %s62
      %s64 = sphi 0, %s62
      %s65 = sphi 0, %s64
      %s79 = sphi 0, %s65
      %s83 = sphi 0, %s83
      %s85 = sphi 0, %s83
      %s86 = sphi 0, %s85
      %s100 = sphi 0, %s86
      %s104 = sphi 0, %s104
      %s106 = sphi 0, %s104
      %s107 = sphi 0, %s106
      %s121 = sphi 0, %s107
      %s125 = sphi 0, %s125
      %s127 = sphi 0, %s125
      %s128 = sphi 0, %s127
      %s142 = sphi 0, %s128
      %s146 = sphi 0, %s146
      %s148 = sphi 0, %s146
      %s149 = sphi 0, %s148
      %s163 = sphi 0, %s149
      %s167 = sphi 0, %s167
      %s169 = sphi 0, %s167
      %s170 = sphi 0, %s169
      %s184 = sphi 0, %s170
      %s188 = sphi 0, %s188
      %s190 = sphi 0, %s188
      %s191 = sphi 0, %s190
      %s205 = sphi 0, %s191
      %s209 = sphi 0, %s209
      %s211 = sphi 0, %s209
      %s212 = sphi 0, %s211
      %s226 = sphi 0, %s212
      %s230 = sphi 0, %s230
      %s232 = sphi 0, %s230
      %s233 = sphi 0, %s232
      %s247 = sphi 0, %s233
      %s251 = sphi 0, %s251
      %s253 = sphi 0, %s251
      %s254 = sphi 0, %s253
      %s268 = sphi 0, %s254
      %s272 = sphi 0, %s272
      %s274 = sphi 0, %s272
      %s275 = sphi 0, %s274
      %s289 = sphi 0, %s275
      %s293 = sphi 0, %s293
      %s295 = sphi 0, %s293
      %s296 = sphi 0, %s295
      %s310 = sphi 0, %s296
      %s316 = sphi 0, %s318
      %s319 = sphi 0, %s316
      %s320 = sphi 0, %s319
      %s336 = sphi 0, %s320
    $region4: #{tpu_custom_call.1} parent=1 // loop_header_branch
      %31 = sbr.rel (%p29) target = $region8
    $region5: #{tpu_custom_call.1} parent=1 // loop_body
      %s33 = ssub.s32 %s28, 1
      %s34 = ssub.s32 %s28, 2
      %s35 = sadd.s32 %s28, 1
      %s36 = ssub.s32 %s28, %s35
      %p37 = scmp.eq.s32.totalorder %s36, 0
      %s39 = sadd.s32 %s38, 1
      %s40 = scalar_select %p37, %s38, %s39
      %p43 = pneg %p37
      %p44 = scmp.eq.s32.totalorder %s28, 1
      %p45 = por %p43, %p44
      %p46 = scmp.ne.s32.totalorder %s38, %s41
      %p47 = scmp.eq.s32.totalorder %s28, 0
      %p48 = por %p46, %p47
      %p49 = scmp.ne.s32.totalorder %s38, %s41
      %p50 = scmp.eq.s32.totalorder %s33, 1
      %p51 = por %p49, %p50
      %p52 = scmp.ne.s32.totalorder %s41, %s42
      %p53 = scmp.eq.s32.totalorder %s33, 0
      %p54 = por %p52, %p53
      %p55 = scmp.ne.s32.totalorder %s41, %s42
      %p56 = scmp.eq.s32.totalorder %s34, 1
      %p57 = por %p55, %p56
      %p59 = scmp.ne.s32.totalorder %s42, %s58
      %p60 = scmp.eq.s32.totalorder %s34, 0
      %p61 = por %p59, %p60
      %s63 = sadd.s32 %s62, 1
      %p66 = scmp.eq.s32.totalorder %s28, 1
      %p67 = scmp.ne.s32.totalorder %s62, %s64
      %p68 = scmp.eq.s32.totalorder %s28, 0
      %p69 = por %p67, %p68
      %p70 = scmp.ne.s32.totalorder %s62, %s64
      %p71 = scmp.eq.s32.totalorder %s33, 1
      %p72 = por %p70, %p71
      %p73 = scmp.ne.s32.totalorder %s64, %s65
      %p74 = scmp.eq.s32.totalorder %s33, 0
      %p75 = por %p73, %p74
      %p76 = scmp.ne.s32.totalorder %s64, %s65
      %p77 = scmp.eq.s32.totalorder %s34, 1
      %p78 = por %p76, %p77
      %p80 = scmp.ne.s32.totalorder %s65, %s79
      %p81 = scmp.eq.s32.totalorder %s34, 0
      %p82 = por %p80, %p81
      %s84 = sadd.s32 %s83, 1
      %p87 = scmp.eq.s32.totalorder %s28, 1
      %p88 = scmp.ne.s32.totalorder %s83, %s85
      %p89 = scmp.eq.s32.totalorder %s28, 0
      %p90 = por %p88, %p89
      %p91 = scmp.ne.s32.totalorder %s83, %s85
      %p92 = scmp.eq.s32.totalorder %s33, 1
      %p93 = por %p91, %p92
      %p94 = scmp.ne.s32.totalorder %s85, %s86
      %p95 = scmp.eq.s32.totalorder %s33, 0
      %p96 = por %p94, %p95
      %p97 = scmp.ne.s32.totalorder %s85, %s86
      %p98 = scmp.eq.s32.totalorder %s34, 1
      %p99 = por %p97, %p98
      %p101 = scmp.ne.s32.totalorder %s86, %s100
      %p102 = scmp.eq.s32.totalorder %s34, 0
      %p103 = por %p101, %p102
      %s105 = sadd.s32 %s104, 1
      %p108 = scmp.eq.s32.totalorder %s28, 1
      %p109 = scmp.ne.s32.totalorder %s104, %s106
      %p110 = scmp.eq.s32.totalorder %s28, 0
      %p111 = por %p109, %p110
      %p112 = scmp.ne.s32.totalorder %s104, %s106
      %p113 = scmp.eq.s32.totalorder %s33, 1
      %p114 = por %p112, %p113
      %p115 = scmp.ne.s32.totalorder %s106, %s107
      %p116 = scmp.eq.s32.totalorder %s33, 0
      %p117 = por %p115, %p116
      %p118 = scmp.ne.s32.totalorder %s106, %s107
      %p119 = scmp.eq.s32.totalorder %s34, 1
      %p120 = por %p118, %p119
      %p122 = scmp.ne.s32.totalorder %s107, %s121
      %p123 = scmp.eq.s32.totalorder %s34, 0
      %p124 = por %p122, %p123
      %s126 = sadd.s32 %s125, 1
      %p129 = scmp.eq.s32.totalorder %s28, 1
      %p130 = scmp.ne.s32.totalorder %s125, %s127
      %p131 = scmp.eq.s32.totalorder %s28, 0
      %p132 = por %p130, %p131
      %p133 = scmp.ne.s32.totalorder %s125, %s127
      %p134 = scmp.eq.s32.totalorder %s33, 1
      %p135 = por %p133, %p134
      %p136 = scmp.ne.s32.totalorder %s127, %s128
      %p137 = scmp.eq.s32.totalorder %s33, 0
      %p138 = por %p136, %p137
      %p139 = scmp.ne.s32.totalorder %s127, %s128
      %p140 = scmp.eq.s32.totalorder %s34, 1
      %p141 = por %p139, %p140
      %p143 = scmp.ne.s32.totalorder %s128, %s142
      %p144 = scmp.eq.s32.totalorder %s34, 0
      %p145 = por %p143, %p144
      %s147 = sadd.s32 %s146, 1
      %p150 = scmp.eq.s32.totalorder %s28, 1
      %p151 = scmp.ne.s32.totalorder %s146, %s148
      %p152 = scmp.eq.s32.totalorder %s28, 0
      %p153 = por %p151, %p152
      %p154 = scmp.ne.s32.totalorder %s146, %s148
      %p155 = scmp.eq.s32.totalorder %s33, 1
      %p156 = por %p154, %p155
      %p157 = scmp.ne.s32.totalorder %s148, %s149
      %p158 = scmp.eq.s32.totalorder %s33, 0
      %p159 = por %p157, %p158
      %p160 = scmp.ne.s32.totalorder %s148, %s149
      %p161 = scmp.eq.s32.totalorder %s34, 1
      %p162 = por %p160, %p161
      %p164 = scmp.ne.s32.totalorder %s149, %s163
      %p165 = scmp.eq.s32.totalorder %s34, 0
      %p166 = por %p164, %p165
      %s168 = sadd.s32 %s167, 1
      %p171 = scmp.eq.s32.totalorder %s28, 1
      %p172 = scmp.ne.s32.totalorder %s167, %s169
      %p173 = scmp.eq.s32.totalorder %s28, 0
      %p174 = por %p172, %p173
      %p175 = scmp.ne.s32.totalorder %s167, %s169
      %p176 = scmp.eq.s32.totalorder %s33, 1
      %p177 = por %p175, %p176
      %p178 = scmp.ne.s32.totalorder %s169, %s170
      %p179 = scmp.eq.s32.totalorder %s33, 0
      %p180 = por %p178, %p179
      %p181 = scmp.ne.s32.totalorder %s169, %s170
      %p182 = scmp.eq.s32.totalorder %s34, 1
      %p183 = por %p181, %p182
      %p185 = scmp.ne.s32.totalorder %s170, %s184
      %p186 = scmp.eq.s32.totalorder %s34, 0
      %p187 = por %p185, %p186
      %s189 = sadd.s32 %s188, 1
      %p192 = scmp.eq.s32.totalorder %s28, 1
      %p193 = scmp.ne.s32.totalorder %s188, %s190
      %p194 = scmp.eq.s32.totalorder %s28, 0
      %p195 = por %p193, %p194
      %p196 = scmp.ne.s32.totalorder %s188, %s190
      %p197 = scmp.eq.s32.totalorder %s33, 1
      %p198 = por %p196, %p197
      %p199 = scmp.ne.s32.totalorder %s190, %s191
      %p200 = scmp.eq.s32.totalorder %s33, 0
      %p201 = por %p199, %p200
      %p202 = scmp.ne.s32.totalorder %s190, %s191
      %p203 = scmp.eq.s32.totalorder %s34, 1
      %p204 = por %p202, %p203
      %p206 = scmp.ne.s32.totalorder %s191, %s205
      %p207 = scmp.eq.s32.totalorder %s34, 0
      %p208 = por %p206, %p207
      %s210 = sadd.s32 %s209, 1
      %p213 = scmp.eq.s32.totalorder %s28, 1
      %p214 = scmp.ne.s32.totalorder %s209, %s211
      %p215 = scmp.eq.s32.totalorder %s28, 0
      %p216 = por %p214, %p215
      %p217 = scmp.ne.s32.totalorder %s209, %s211
      %p218 = scmp.eq.s32.totalorder %s33, 1
      %p219 = por %p217, %p218
      %p220 = scmp.ne.s32.totalorder %s211, %s212
      %p221 = scmp.eq.s32.totalorder %s33, 0
      %p222 = por %p220, %p221
      %p223 = scmp.ne.s32.totalorder %s211, %s212
      %p224 = scmp.eq.s32.totalorder %s34, 1
      %p225 = por %p223, %p224
      %p227 = scmp.ne.s32.totalorder %s212, %s226
      %p228 = scmp.eq.s32.totalorder %s34, 0
      %p229 = por %p227, %p228
      %s231 = sadd.s32 %s230, 1
      %p234 = scmp.eq.s32.totalorder %s28, 1
      %p235 = scmp.ne.s32.totalorder %s230, %s232
      %p236 = scmp.eq.s32.totalorder %s28, 0
      %p237 = por %p235, %p236
      %p238 = scmp.ne.s32.totalorder %s230, %s232
      %p239 = scmp.eq.s32.totalorder %s33, 1
      %p240 = por %p238, %p239
      %p241 = scmp.ne.s32.totalorder %s232, %s233
      %p242 = scmp.eq.s32.totalorder %s33, 0
      %p243 = por %p241, %p242
      %p244 = scmp.ne.s32.totalorder %s232, %s233
      %p245 = scmp.eq.s32.totalorder %s34, 1
      %p246 = por %p244, %p245
      %p248 = scmp.ne.s32.totalorder %s233, %s247
      %p249 = scmp.eq.s32.totalorder %s34, 0
      %p250 = por %p248, %p249
      %s252 = sadd.s32 %s251, 1
      %p255 = scmp.eq.s32.totalorder %s28, 1
      %p256 = scmp.ne.s32.totalorder %s251, %s253
      %p257 = scmp.eq.s32.totalorder %s28, 0
      %p258 = por %p256, %p257
      %p259 = scmp.ne.s32.totalorder %s251, %s253
      %p260 = scmp.eq.s32.totalorder %s33, 1
      %p261 = por %p259, %p260
      %p262 = scmp.ne.s32.totalorder %s253, %s254
      %p263 = scmp.eq.s32.totalorder %s33, 0
      %p264 = por %p262, %p263
      %p265 = scmp.ne.s32.totalorder %s253, %s254
      %p266 = scmp.eq.s32.totalorder %s34, 1
      %p267 = por %p265, %p266
      %p269 = scmp.ne.s32.totalorder %s254, %s268
      %p270 = scmp.eq.s32.totalorder %s34, 0
      %p271 = por %p269, %p270
      %s273 = sadd.s32 %s272, 1
      %p276 = scmp.eq.s32.totalorder %s28, 1
      %p277 = scmp.ne.s32.totalorder %s272, %s274
      %p278 = scmp.eq.s32.totalorder %s28, 0
      %p279 = por %p277, %p278
      %p280 = scmp.ne.s32.totalorder %s272, %s274
      %p281 = scmp.eq.s32.totalorder %s33, 1
      %p282 = por %p280, %p281
      %p283 = scmp.ne.s32.totalorder %s274, %s275
      %p284 = scmp.eq.s32.totalorder %s33, 0
      %p285 = por %p283, %p284
      %p286 = scmp.ne.s32.totalorder %s274, %s275
      %p287 = scmp.eq.s32.totalorder %s34, 1
      %p288 = por %p286, %p287
      %p290 = scmp.ne.s32.totalorder %s275, %s289
      %p291 = scmp.eq.s32.totalorder %s34, 0
      %p292 = por %p290, %p291
      %s294 = sadd.s32 %s293, 1
      %p297 = scmp.eq.s32.totalorder %s28, 1
      %p298 = scmp.ne.s32.totalorder %s293, %s295
      %p299 = scmp.eq.s32.totalorder %s28, 0
      %p300 = por %p298, %p299
      %p301 = scmp.ne.s32.totalorder %s293, %s295
      %p302 = scmp.eq.s32.totalorder %s33, 1
      %p303 = por %p301, %p302
      %p304 = scmp.ne.s32.totalorder %s295, %s296
      %p305 = scmp.eq.s32.totalorder %s33, 0
      %p306 = por %p304, %p305
      %p307 = scmp.ne.s32.totalorder %s295, %s296
      %p308 = scmp.eq.s32.totalorder %s34, 1
      %p309 = por %p307, %p308
      %p311 = scmp.ne.s32.totalorder %s296, %s310
      %p312 = scmp.eq.s32.totalorder %s34, 0
      %p313 = por %p311, %p312
      %s314 = ssub.s32 %s28, %s35
      %p315 = scmp.eq.s32.totalorder %s314, 0
      %s317 = sadd.s32 %s316, 1
      %s318 = scalar_select %p315, %s316, %s317
      %p321 = pneg %p315
      %p322 = scmp.eq.s32.totalorder %s28, 1
      %p323 = por %p321, %p322
      %p324 = scmp.ne.s32.totalorder %s316, %s319
      %p325 = scmp.eq.s32.totalorder %s28, 0
      %p326 = por %p324, %p325
      %p327 = scmp.ne.s32.totalorder %s316, %s319
      %p328 = scmp.eq.s32.totalorder %s33, 1
      %p329 = por %p327, %p328
      %p330 = scmp.ne.s32.totalorder %s319, %s320
      %p331 = scmp.eq.s32.totalorder %s33, 0
      %p332 = por %p330, %p331
      %p333 = scmp.ne.s32.totalorder %s319, %s320
      %p334 = scmp.eq.s32.totalorder %s34, 1
      %p335 = por %p333, %p334
      %p337 = scmp.ne.s32.totalorder %s320, %s336
      %p338 = scmp.eq.s32.totalorder %s34, 0
      %p339 = por %p337, %p338
      %p340 = scmp.le.s32.totalorder 1, %s28
      %p341 = scmp.lt.s32.totalorder %s28, 3
      %p342 = pnand %p340, %p341
      %p343 = pneg %p342
      // Predicated region
      $region9: #{tpu_custom_call.1} parent=5 // pred_check
        _
      $region10: #{tpu_custom_call.1} parent=5 // pred_check_branch
        %345 = sbr.rel (%p342) target = $region12
      $region11: #{tpu_custom_call.1} parent=5 // pred_region
        %s346 = ssub.s32 %s28, 1
        // Predicated region
        $region13: #{tpu_custom_call.1} parent=11 // pred_check
          %p347 = pneg %p75
        $region14: #{tpu_custom_call.1} parent=11 // pred_check_branch
          %349 = sbr.rel (%p347) target = $region16
        $region15: #{tpu_custom_call.1} parent=11 // pred_region
          %s351 = ssub.s32 2048, 2048
          %352 = vsyncadd [#allocation6], %s351
          %s353 = sshll.u32 [#allocation5], 4
          %s354 = int_to_ptr.vmem [resolvable:$true] %s353
          %359 = dma.hbm_to_vmem [thread:$0]  %s1, 2048, %s354, [#allocation6], 128, 128, 8
        $region16: #{tpu_custom_call.1} parent=11 // pred_fallthru
          _
        // Predicated region
        $region17: #{tpu_custom_call.1} parent=11 // pred_check
          %p360 = pneg %p96
        $region18: #{tpu_custom_call.1} parent=11 // pred_check_branch
          %362 = sbr.rel (%p360) target = $region20
        $region19: #{tpu_custom_call.1} parent=11 // pred_region
          _
        $region20: #{tpu_custom_call.1} parent=11 // pred_fallthru
          _
        // Predicated region
        $region21: #{tpu_custom_call.1} parent=11 // pred_check
          %p363 = pneg %p117
        $region22: #{tpu_custom_call.1} parent=11 // pred_check_branch
          %365 = sbr.rel (%p363) target = $region24
        $region23: #{tpu_custom_call.1} parent=11 // pred_region
          %s367 = ssub.s32 16, 16
          %368 = vsyncadd [#allocation6], %s367
          %s370 = sshll.u32 [#allocation7], 4
          %s371 = int_to_ptr.vmem [resolvable:$true] %s370
          %373 = dma.hbm_to_vmem [thread:$0]  %s3, 16, %s371, [#allocation6]
        $region24: #{tpu_custom_call.1} parent=11 // pred_fallthru
          _
        // Predicated region
        $region25: #{tpu_custom_call.1} parent=11 // pred_check
          %p374 = pneg %p138
        $region26: #{tpu_custom_call.1} parent=11 // pred_check_branch
          %376 = sbr.rel (%p374) target = $region28
        $region27: #{tpu_custom_call.1} parent=11 // pred_region
          %s378 = ssub.s32 6144, 6144
          %379 = vsyncadd [#allocation9], %s378
          %s380 = sshll.u32 [#allocation8], 4
          %s381 = int_to_ptr.vmem [resolvable:$true] %s380
          %386 = dma.hbm_to_vmem [thread:$0]  %s4, 6144, %s381, [#allocation9], 128, 128, 8
        $region28: #{tpu_custom_call.1} parent=11 // pred_fallthru
          _
        // Predicated region
        $region29: #{tpu_custom_call.1} parent=11 // pred_check
          %p387 = pneg %p159
        $region30: #{tpu_custom_call.1} parent=11 // pred_check_branch
          %389 = sbr.rel (%p387) target = $region32
        $region31: #{tpu_custom_call.1} parent=11 // pred_region
          _
        $region32: #{tpu_custom_call.1} parent=11 // pred_fallthru
          _
        // Predicated region
        $region33: #{tpu_custom_call.1} parent=11 // pred_check
          %p390 = pneg %p180
        $region34: #{tpu_custom_call.1} parent=11 // pred_check_branch
          %392 = sbr.rel (%p390) target = $region36
        $region35: #{tpu_custom_call.1} parent=11 // pred_region
          %s394 = ssub.s32 8192, 8192
          %395 = vsyncadd [#allocation9], %s394
          %s396 = sshll.u32 [#allocation10], 4
          %s397 = int_to_ptr.vmem [resolvable:$true] %s396
          %402 = dma.hbm_to_vmem [thread:$0]  %s6, 8192, %s397, [#allocation9], 256, 256, 16
        $region36: #{tpu_custom_call.1} parent=11 // pred_fallthru
          _
        // Predicated region
        $region37: #{tpu_custom_call.1} parent=11 // pred_check
          %p403 = pneg %p201
        $region38: #{tpu_custom_call.1} parent=11 // pred_check_branch
          %405 = sbr.rel (%p403) target = $region40
        $region39: #{tpu_custom_call.1} parent=11 // pred_region
          _
        $region40: #{tpu_custom_call.1} parent=11 // pred_fallthru
          _
        // Predicated region
        $region41: #{tpu_custom_call.1} parent=11 // pred_check
          %p406 = pneg %p222
        $region42: #{tpu_custom_call.1} parent=11 // pred_check_branch
          %408 = sbr.rel (%p406) target = $region44
        $region43: #{tpu_custom_call.1} parent=11 // pred_region
          _
        $region44: #{tpu_custom_call.1} parent=11 // pred_fallthru
          _
        // Predicated region
        $region45: #{tpu_custom_call.1} parent=11 // pred_check
          %p409 = pneg %p243
        $region46: #{tpu_custom_call.1} parent=11 // pred_check_branch
          %411 = sbr.rel (%p409) target = $region48
        $region47: #{tpu_custom_call.1} parent=11 // pred_region
          %s413 = ssub.s32 12288, 12288
          %414 = vsyncadd [#allocation12], %s413
          %s415 = sshll.u32 [#allocation11], 4
          %s416 = int_to_ptr.vmem [resolvable:$true] %s415
          %421 = dma.hbm_to_vmem [thread:$0]  %s9, 12288, %s416, [#allocation12], 128, 128, 8
        $region48: #{tpu_custom_call.1} parent=11 // pred_fallthru
          _
        // Predicated region
        $region49: #{tpu_custom_call.1} parent=11 // pred_check
          %p422 = pneg %p264
        $region50: #{tpu_custom_call.1} parent=11 // pred_check_branch
          %424 = sbr.rel (%p422) target = $region52
        $region51: #{tpu_custom_call.1} parent=11 // pred_region
          _
        $region52: #{tpu_custom_call.1} parent=11 // pred_fallthru
          _
        // Predicated region
        $region53: #{tpu_custom_call.1} parent=11 // pred_check
          %p425 = pneg %p285
        $region54: #{tpu_custom_call.1} parent=11 // pred_check_branch
          %427 = sbr.rel (%p425) target = $region56
        $region55: #{tpu_custom_call.1} parent=11 // pred_region
          %s429 = ssub.s32 2048, 2048
          %430 = vsyncadd [#allocation12], %s429
          %s431 = sshll.u32 [#allocation13], 4
          %s432 = int_to_ptr.vmem [resolvable:$true] %s431
          %437 = dma.hbm_to_vmem [thread:$0]  %s11, 2048, %s432, [#allocation12], 128, 128, 8
        $region56: #{tpu_custom_call.1} parent=11 // pred_fallthru
          _
        // Predicated region
        $region57: #{tpu_custom_call.1} parent=11 // pred_check
          %p438 = pneg %p306
        $region58: #{tpu_custom_call.1} parent=11 // pred_check_branch
          %440 = sbr.rel (%p438) target = $region60
        $region59: #{tpu_custom_call.1} parent=11 // pred_region
          _
        $region60: #{tpu_custom_call.1} parent=11 // pred_fallthru
          _
      $region12: #{tpu_custom_call.1} parent=5 // pred_fallthru
        _
      %p441 = scmp.lt.s32.totalorder %s28, 2
      // Predicated region
      $region61: #{tpu_custom_call.1} parent=5 // pred_check
        %p442 = pneg %p441
      $region62: #{tpu_custom_call.1} parent=5 // pred_check_branch
        %444 = sbr.rel (%p442) target = $region64
      $region63: #{tpu_custom_call.1} parent=5 // pred_region
        // Predicated region
        $region65: #{tpu_custom_call.1} parent=63 // pred_check
          %p445 = pneg %p48
        $region66: #{tpu_custom_call.1} parent=63 // pred_check_branch
          %447 = sbr.rel (%p445) target = $region68
        $region67: #{tpu_custom_call.1} parent=63 // pred_region
          %s448 = sand.u32 %s38, 1
          %s449 = scalar_lea.sflag [#allocation3], %s448
          %s450 = sand.u32 %s38, 1
          %s451 = smul.addr %s450, 16
          %s452 = scalar_lea.vmem [#allocation2], %s451
          %s454 = ssub.s32 256, 256
          %455 = vsyncadd %s449, %s454
          %s456 = smul.addr %s28, 2
          %s457 = smul.addr %s456, 128
          %s458 = scalar_lea.hbm %s0, %s457
          %s459 = sshll.u32 %s452, 4
          %s460 = int_to_ptr.vmem [resolvable:$true] %s459
          %465 = dma.hbm_to_vmem [thread:$0]  %s458, 256, %s460, %s449, 128, 128, 8
        $region68: #{tpu_custom_call.1} parent=63 // pred_fallthru
          _
      $region64: #{tpu_custom_call.1} parent=5 // pred_fallthru
        _
      %p466 = scmp.le.s32.totalorder 1, %s28
      %p467 = scmp.lt.s32.totalorder %s28, 3
      %p468 = pnand %p466, %p467
      %p469 = pneg %p468
      // Predicated region
      $region69: #{tpu_custom_call.1} parent=5 // pred_check
        _
      $region70: #{tpu_custom_call.1} parent=5 // pred_check_branch
        %471 = sbr.rel (%p468) target = $region72
      $region71: #{tpu_custom_call.1} parent=5 // pred_region
        %s472 = ssub.s32 %s28, 1
        %s473 = sand.u32 %s41, 1
        %s474 = scalar_lea.sflag [#allocation3], %s473
        %s475 = sand.u32 %s41, 1
        %s476 = smul.addr %s475, 16
        %s477 = scalar_lea.vmem [#allocation2], %s476
        // Predicated region
        $region73: #{tpu_custom_call.1} parent=71 // pred_check
          %p478 = pneg %p54
        $region74: #{tpu_custom_call.1} parent=71 // pred_check_branch
          %480 = sbr.rel (%p478) target = $region76
        $region75: #{tpu_custom_call.1} parent=71 // pred_region
          %481 = dma.done %s474, 256
        $region76: #{tpu_custom_call.1} parent=71 // pred_fallthru
          _
        // Predicated region
        $region77: #{tpu_custom_call.1} parent=71 // pred_check
          %p482 = pneg %p75
        $region78: #{tpu_custom_call.1} parent=71 // pred_check_branch
          %484 = sbr.rel (%p482) target = $region80
        $region79: #{tpu_custom_call.1} parent=71 // pred_region
          %485 = dma.done [#allocation6], 2048
        $region80: #{tpu_custom_call.1} parent=71 // pred_fallthru
          _
        // Predicated region
        $region81: #{tpu_custom_call.1} parent=71 // pred_check
          %p486 = pneg %p117
        $region82: #{tpu_custom_call.1} parent=71 // pred_check_branch
          %488 = sbr.rel (%p486) target = $region84
        $region83: #{tpu_custom_call.1} parent=71 // pred_region
          %489 = dma.done [#allocation6], 16
        $region84: #{tpu_custom_call.1} parent=71 // pred_fallthru
          _
        // Predicated region
        $region85: #{tpu_custom_call.1} parent=71 // pred_check
          %p490 = pneg %p138
        $region86: #{tpu_custom_call.1} parent=71 // pred_check_branch
          %492 = sbr.rel (%p490) target = $region88
        $region87: #{tpu_custom_call.1} parent=71 // pred_region
          %493 = dma.done [#allocation9], 6144
        $region88: #{tpu_custom_call.1} parent=71 // pred_fallthru
          _
        // Predicated region
        $region89: #{tpu_custom_call.1} parent=71 // pred_check
          %p494 = pneg %p180
        $region90: #{tpu_custom_call.1} parent=71 // pred_check_branch
          %496 = sbr.rel (%p494) target = $region92
        $region91: #{tpu_custom_call.1} parent=71 // pred_region
          %497 = dma.done [#allocation9], 8192
        $region92: #{tpu_custom_call.1} parent=71 // pred_fallthru
          _
        // Predicated region
        $region93: #{tpu_custom_call.1} parent=71 // pred_check
          %p498 = pneg %p243
        $region94: #{tpu_custom_call.1} parent=71 // pred_check_branch
          %500 = sbr.rel (%p498) target = $region96
        $region95: #{tpu_custom_call.1} parent=71 // pred_region
          %501 = dma.done [#allocation12], 12288
        $region96: #{tpu_custom_call.1} parent=71 // pred_fallthru
          _
        // Predicated region
        $region97: #{tpu_custom_call.1} parent=71 // pred_check
          %p502 = pneg %p285
        $region98: #{tpu_custom_call.1} parent=71 // pred_check_branch
          %504 = sbr.rel (%p502) target = $region100
        $region99: #{tpu_custom_call.1} parent=71 // pred_region
          %505 = dma.done [#allocation12], 2048
        $region100: #{tpu_custom_call.1} parent=71 // pred_fallthru
          _
        %s506 = sand.u32 %s41, 1
        %s507 = scalar_lea.sflag [#allocation3], %s506
        %s508 = sand.u32 %s41, 1
        %s509 = smul.addr %s508, 16
        %s510 = scalar_lea.vmem [#allocation2], %s509
        %p511 = pneg %p54
        %p512 = pneg %p51
        %p513 = pneg %p75
        %p514 = pneg %p72
        %p515 = pneg %p96
        %p516 = pneg %p93
        %p517 = pneg %p117
        %p518 = pneg %p114
        %p519 = pneg %p138
        %p520 = pneg %p135
        %p521 = pneg %p159
        %p522 = pneg %p156
        %p523 = pneg %p180
        %p524 = pneg %p177
        %p525 = pneg %p201
        %p526 = pneg %p198
        %p527 = pneg %p222
        %p528 = pneg %p219
        %p529 = pneg %p243
        %p530 = pneg %p240
        %p531 = pneg %p264
        %p532 = pneg %p261
        %p533 = pneg %p285
        %p534 = pneg %p282
        %p535 = pneg %p306
        %p536 = pneg %p303
        %p537 = pneg %p332
        %p538 = pneg %p329
        %s539 = sand.u32 %s319, 1
        %s540 = scalar_lea.sflag [#allocation4], %s539
        %s541 = sand.u32 %s319, 1
        %s542 = smul.addr %s541, 32
        %s543 = scalar_lea.vmem [#allocation14], %s542
        %v545 = vld [vmem:[%s477] sm:$0xff]
        %v546 = vld [vmem:[%s477 + $0x8] sm:$0xff]
        %v547 = vpack.c.bf16 %v546, %v545
        %v548 = vld [vmem:[#allocation13] sm:$0xff]
        %v549 = vld [vmem:[#allocation13 + $0x8] sm:$0xff]
        %v550 = vld [vmem:[#allocation13 + $0x10] sm:$0xff]
        %v551 = vld [vmem:[#allocation13 + $0x18] sm:$0xff]
        %v552 = vld [vmem:[#allocation13 + $0x20] sm:$0xff]
        %v553 = vld [vmem:[#allocation13 + $0x28] sm:$0xff]
        %v554 = vld [vmem:[#allocation13 + $0x30] sm:$0xff]
        %v555 = vld [vmem:[#allocation13 + $0x38] sm:$0xff]
        %v556 = vld [vmem:[#allocation13 + $0x40] sm:$0xff]
        %v557 = vld [vmem:[#allocation13 + $0x48] sm:$0xff]
        %v558 = vld [vmem:[#allocation13 + $0x50] sm:$0xff]
        %v559 = vld [vmem:[#allocation13 + $0x58] sm:$0xff]
        %v560 = vld [vmem:[#allocation13 + $0x60] sm:$0xff]
        %v561 = vld [vmem:[#allocation13 + $0x68] sm:$0xff]
        %v562 = vld [vmem:[#allocation13 + $0x70] sm:$0xff]
        %v563 = vld [vmem:[#allocation13 + $0x78] sm:$0xff]
        %v564 = vld [vmem:[%s12] sm:$0x3]
        %v566 = vlaneseq
        %v567 = vshrl.u32 %v566, 7
        %v568 = vsub.s32 0, %v567
        %v569 = vrot.slane %v564, %v568
        %v570 = vlaneseq
        %v571 = vshrl.u32 %v570, 7
        %v572 = vsub.s32 1, %v571
        %v573 = vrot.slane %v564, %v572
        %v592 = vunpack.c.l.b16 %v548
        %v593 = vunpack.c.h.b16 %v548
        %v594 = vunpack.c.l.b16 %v549
        %v595 = vunpack.c.h.b16 %v549
        %v596 = vunpack.c.l.b16 %v550
        %v597 = vunpack.c.h.b16 %v550
        %v598 = vunpack.c.l.b16 %v551
        %v599 = vunpack.c.h.b16 %v551
        %v600 = vunpack.c.l.b16 %v552
        %v601 = vunpack.c.h.b16 %v552
        %v602 = vunpack.c.l.b16 %v553
        %v603 = vunpack.c.h.b16 %v553
        %v604 = vunpack.c.l.b16 %v554
        %v605 = vunpack.c.h.b16 %v554
        %v606 = vunpack.c.l.b16 %v555
        %v607 = vunpack.c.h.b16 %v555
        %v608 = vunpack.c.l.b16 %v556
        %v609 = vunpack.c.h.b16 %v556
        %v610 = vunpack.c.l.b16 %v557
        %v611 = vunpack.c.h.b16 %v557
        %v612 = vunpack.c.l.b16 %v558
        %v613 = vunpack.c.h.b16 %v558
        %v614 = vunpack.c.l.b16 %v559
        %v615 = vunpack.c.h.b16 %v559
        %v616 = vunpack.c.l.b16 %v560
        %v617 = vunpack.c.h.b16 %v560
        %v618 = vunpack.c.l.b16 %v561
        %v619 = vunpack.c.h.b16 %v561
        %v620 = vunpack.c.l.b16 %v562
        %v621 = vunpack.c.h.b16 %v562
        %v622 = vunpack.c.l.b16 %v563
        %v623 = vunpack.c.h.b16 %v563
        %v624 = vpack.c.b16 %v594, %v592
        %v625 = vpack.c.b16 %v595, %v593
        %v626 = vpack.c.b16 %v598, %v596
        %v627 = vpack.c.b16 %v599, %v597
        %v628 = vpack.c.b16 %v602, %v600
        %v629 = vpack.c.b16 %v603, %v601
        %v630 = vpack.c.b16 %v606, %v604
        %v631 = vpack.c.b16 %v607, %v605
        %v632 = vpack.c.b16 %v610, %v608
        %v633 = vpack.c.b16 %v611, %v609
        %v634 = vpack.c.b16 %v614, %v612
        %v635 = vpack.c.b16 %v615, %v613
        %v636 = vpack.c.b16 %v618, %v616
        %v637 = vpack.c.b16 %v619, %v617
        %v638 = vpack.c.b16 %v622, %v620
        %v639 = vpack.c.b16 %v623, %v621
        %656 = vmatprep.subr.bf16.mxu0 %v625
        %657 = vmatpush1.bf16.msra.mxu0 %v624
        %658 = vmatprep.subr.bf16.mxu0 %v627
        %659 = vmatpush1.bf16.msra.mxu0 %v626
        %660 = vmatprep.subr.bf16.mxu0 %v629
        %661 = vmatpush1.bf16.msra.mxu0 %v628
        %662 = vmatprep.subr.bf16.mxu0 %v631
        %663 = vmatpush1.bf16.msra.mxu0 %v630
        %664 = vmatprep.subr.bf16.mxu0 %v633
        %665 = vmatpush1.bf16.msra.mxu0 %v632
        %666 = vmatprep.subr.bf16.mxu0 %v635
        %667 = vmatpush1.bf16.msra.mxu0 %v634
        %668 = vmatprep.subr.bf16.mxu0 %v637
        %669 = vmatpush1.bf16.msra.mxu0 %v636
        %670 = vmatprep.subr.bf16.mxu0 %v639
        %671 = vmatpush1.bf16.msra.mxu0 %v638
        %672 = vmatprep.subr.bf16.mxu0 0
        %673 = vmatpush1.bf16.msra.mxu0 0
        %674 = vmatprep.subr.bf16.mxu0 0
        %675 = vmatpush1.bf16.msra.mxu0 0
        %676 = vmatprep.subr.bf16.mxu0 0
        %677 = vmatpush1.bf16.msra.mxu0 0
        %678 = vmatprep.subr.bf16.mxu0 0
        %679 = vmatpush1.bf16.msra.mxu0 0
        %680 = vmatprep.subr.bf16.mxu0 0
        %681 = vmatpush1.bf16.msra.mxu0 0
        %682 = vmatprep.subr.bf16.mxu0 0
        %683 = vmatpush1.bf16.msra.mxu0 0
        %684 = vmatprep.subr.bf16.mxu0 0
        %685 = vmatpush1.bf16.msra.mxu0 0
        %686 = vmatprep.subr.bf16.mxu0 0
        %687 = vmatpush1.bf16.msra.mxu0 0
        %688 = vmatprep.mubr.bf16.mxu0 0
        %689 = vmatmul.mubr.bf16.gmra.mrb[0].mxu0 %v547
        %v690 = vpop.f32.mrb[0].mxu0
        %v691 = vadd.f32 %v569, %v690
        %v692 = vpop.f32.mrb[0].mxu0
        %v693 = vadd.f32 %v573, %v692
        %v694 = vpop.f32.mrb[0].mxu0
        %v695 = vadd.f32 %v569, %v694
        %v696 = vpop.f32.mrb[0].mxu0
        %v697 = vadd.f32 %v573, %v696
        %698 = vdwg.mxu0
        %v699 = vadd.f32 %v545, %v546
        %v700 = vrot.slane %v699, 4
        %v701 = vadd.f32 %v699, %v700
        %v702 = vrot.slane %v701, 2
        %v703 = vadd.f32 %v701, %v702
        %v704 = vrot.slane %v703, 1
        %v705 = vadd.f32 %v703, %v704
        %v706 = vmul.f32 %v545, %v545
        %v707 = vmul.f32 %v546, %v546
        %v708 = vadd.f32 %v706, %v707
        %v709 = vrot.slane %v708, 4
        %v710 = vadd.f32 %v708, %v709
        %v711 = vrot.slane %v710, 2
        %v712 = vadd.f32 %v710, %v711
        %v713 = vrot.slane %v712, 1
        %v714 = vadd.f32 %v712, %v713
        %vm715 = vcmask 1040384
        %v716 = vsel %vm715, %v705, %v714
        %v717 = vld [vmem:[#allocation5] sm:$0xff]
        %v718 = vld [vmem:[#allocation5 + $0x8] sm:$0xff]
        %v719 = vld [vmem:[#allocation5 + $0x10] sm:$0xff]
        %v720 = vld [vmem:[#allocation5 + $0x18] sm:$0xff]
        %v721 = vld [vmem:[#allocation5 + $0x20] sm:$0xff]
        %v722 = vld [vmem:[#allocation5 + $0x28] sm:$0xff]
        %v723 = vld [vmem:[#allocation5 + $0x30] sm:$0xff]
        %v724 = vld [vmem:[#allocation5 + $0x38] sm:$0xff]
        %v725 = vld [vmem:[#allocation5 + $0x40] sm:$0xff]
        %v726 = vld [vmem:[#allocation5 + $0x48] sm:$0xff]
        %v727 = vld [vmem:[#allocation5 + $0x50] sm:$0xff]
        %v728 = vld [vmem:[#allocation5 + $0x58] sm:$0xff]
        %v729 = vld [vmem:[#allocation5 + $0x60] sm:$0xff]
        %v730 = vld [vmem:[#allocation5 + $0x68] sm:$0xff]
        %v731 = vld [vmem:[#allocation5 + $0x70] sm:$0xff]
        %v732 = vld [vmem:[#allocation5 + $0x78] sm:$0xff]
        %733 = vmatprep.subr.mxu0 0.0
        %v734 = vand.u32 %v717, 4294901760
        %735 = vmatpush1.msra.mxu0 %v734
        %736 = vmatprep.subr.mxu0 0.0
        %v737 = vand.u32 %v718, 4294901760
        %738 = vmatpush1.msra.mxu0 %v737
        %739 = vmatprep.subr.mxu0 0.0
        %v740 = vand.u32 %v719, 4294901760
        %741 = vmatpush1.msra.mxu0 %v740
        %742 = vmatprep.subr.mxu0 0.0
        %v743 = vand.u32 %v720, 4294901760
        %744 = vmatpush1.msra.mxu0 %v743
        %745 = vmatprep.subr.mxu0 0.0
        %v746 = vand.u32 %v721, 4294901760
        %747 = vmatpush1.msra.mxu0 %v746
        %748 = vmatprep.subr.mxu0 0.0
        %v749 = vand.u32 %v722, 4294901760
        %750 = vmatpush1.msra.mxu0 %v749
        %751 = vmatprep.subr.mxu0 0.0
        %v752 = vand.u32 %v723, 4294901760
        %753 = vmatpush1.msra.mxu0 %v752
        %754 = vmatprep.subr.mxu0 0.0
        %v755 = vand.u32 %v724, 4294901760
        %756 = vmatpush1.msra.mxu0 %v755
        %757 = vmatprep.subr.mxu0 0.0
        %v758 = vand.u32 %v725, 4294901760
        %759 = vmatpush1.msra.mxu0 %v758
        %760 = vmatprep.subr.mxu0 0.0
        %v761 = vand.u32 %v726, 4294901760
        %762 = vmatpush1.msra.mxu0 %v761
        %763 = vmatprep.subr.mxu0 0.0
        %v764 = vand.u32 %v727, 4294901760
        %765 = vmatpush1.msra.mxu0 %v764
        %766 = vmatprep.subr.mxu0 0.0
        %v767 = vand.u32 %v728, 4294901760
        %768 = vmatpush1.msra.mxu0 %v767
        %769 = vmatprep.subr.mxu0 0.0
        %v770 = vand.u32 %v729, 4294901760
        %771 = vmatpush1.msra.mxu0 %v770
        %772 = vmatprep.subr.mxu0 0.0
        %v773 = vand.u32 %v730, 4294901760
        %774 = vmatpush1.msra.mxu0 %v773
        %775 = vmatprep.subr.mxu0 0.0
        %v776 = vand.u32 %v731, 4294901760
        %777 = vmatpush1.msra.mxu0 %v776
        %778 = vmatprep.subr.mxu0 0.0
        %v779 = vand.u32 %v732, 4294901760
        %780 = vmatpush1.msra.mxu0 %v779
        %781 = vmatprep.subr.mxu0 0.0
        %782 = vmatpush1.msra.mxu0 0.0
        %783 = vmatprep.subr.mxu0 0.0
        %784 = vmatpush1.msra.mxu0 0.0
        %785 = vmatprep.subr.mxu0 0.0
        %786 = vmatpush1.msra.mxu0 0.0
        %787 = vmatprep.subr.mxu0 0.0
        %788 = vmatpush1.msra.mxu0 0.0
        %789 = vmatprep.subr.mxu0 0.0
        %790 = vmatpush1.msra.mxu0 0.0
        %791 = vmatprep.subr.mxu0 0.0
        %792 = vmatpush1.msra.mxu0 0.0
        %793 = vmatprep.subr.mxu0 0.0
        %794 = vmatpush1.msra.mxu0 0.0
        %795 = vmatprep.subr.mxu0 0.0
        %796 = vmatpush1.msra.mxu0 0.0
        %797 = vmatprep.subr.mxu0 0.0
        %798 = vmatpush1.msra.mxu0 0.0
        %799 = vmatprep.subr.mxu0 0.0
        %800 = vmatpush1.msra.mxu0 0.0
        %801 = vmatprep.subr.mxu0 0.0
        %802 = vmatpush1.msra.mxu0 0.0
        %803 = vmatprep.subr.mxu0 0.0
        %804 = vmatpush1.msra.mxu0 0.0
        %805 = vmatprep.subr.mxu0 0.0
        %806 = vmatpush1.msra.mxu0 0.0
        %807 = vmatprep.subr.mxu0 0.0
        %808 = vmatpush1.msra.mxu0 0.0
        %809 = vmatprep.subr.mxu0 0.0
        %810 = vmatpush1.msra.mxu0 0.0
        %811 = vmatprep.subr.mxu0 0.0
        %812 = vmatpush1.msra.mxu0 0.0
        %813 = vmatprep.mubr.f32.mxu0 0.0
        %v814 = vand.u32 %v716, 4294901760
        %v815 = vsub.f32 %v716, %v814
        %v816 = vand.u32 %v815, 4294901760
        %v817 = vsub.f32 %v815, %v816
        %v818 = vand.u32 %v817, 4294901760
        %819 = vmatmul.mubr.f32.gmra.mrb[0].mxu0 %v818
        %v820 = vpop.f32.mrb[0].mxu0
        %v821 = vadd.f32 0.0, %v820
        %v822 = vpop.f32.mrb[0].mxu0
        %823 = vdwg.mxu0
        %824 = vmatprep.subr.mxu0 0.0
        %v825 = vand.u32 %v717, 4294901760
        %v826 = vsub.f32 %v717, %v825
        %v827 = vand.u32 %v826, 4294901760
        %v828 = vsub.f32 %v826, %v827
        %v829 = vand.u32 %v828, 4294901760
        %830 = vmatpush1.msra.mxu0 %v829
        %831 = vmatprep.subr.mxu0 0.0
        %v832 = vand.u32 %v718, 4294901760
        %v833 = vsub.f32 %v718, %v832
        %v834 = vand.u32 %v833, 4294901760
        %v835 = vsub.f32 %v833, %v834
        %v836 = vand.u32 %v835, 4294901760
        %837 = vmatpush1.msra.mxu0 %v836
        %838 = vmatprep.subr.mxu0 0.0
        %v839 = vand.u32 %v719, 4294901760
        %v840 = vsub.f32 %v719, %v839
        %v841 = vand.u32 %v840, 4294901760
        %v842 = vsub.f32 %v840, %v841
        %v843 = vand.u32 %v842, 4294901760
        %844 = vmatpush1.msra.mxu0 %v843
        %845 = vmatprep.subr.mxu0 0.0
        %v846 = vand.u32 %v720, 4294901760
        %v847 = vsub.f32 %v720, %v846
        %v848 = vand.u32 %v847, 4294901760
        %v849 = vsub.f32 %v847, %v848
        %v850 = vand.u32 %v849, 4294901760
        %851 = vmatpush1.msra.mxu0 %v850
        %852 = vmatprep.subr.mxu0 0.0
        %v853 = vand.u32 %v721, 4294901760
        %v854 = vsub.f32 %v721, %v853
        %v855 = vand.u32 %v854, 4294901760
        %v856 = vsub.f32 %v854, %v855
        %v857 = vand.u32 %v856, 4294901760
        %858 = vmatpush1.msra.mxu0 %v857
        %859 = vmatprep.subr.mxu0 0.0
        %v860 = vand.u32 %v722, 4294901760
        %v861 = vsub.f32 %v722, %v860
        %v862 = vand.u32 %v861, 4294901760
        %v863 = vsub.f32 %v861, %v862
        %v864 = vand.u32 %v863, 4294901760
        %865 = vmatpush1.msra.mxu0 %v864
        %866 = vmatprep.subr.mxu0 0.0
        %v867 = vand.u32 %v723, 4294901760
        %v868 = vsub.f32 %v723, %v867
        %v869 = vand.u32 %v868, 4294901760
        %v870 = vsub.f32 %v868, %v869
        %v871 = vand.u32 %v870, 4294901760
        %872 = vmatpush1.msra.mxu0 %v871
        %873 = vmatprep.subr.mxu0 0.0
        %v874 = vand.u32 %v724, 4294901760
        %v875 = vsub.f32 %v724, %v874
        %v876 = vand.u32 %v875, 4294901760
        %v877 = vsub.f32 %v875, %v876
        %v878 = vand.u32 %v877, 4294901760
        %879 = vmatpush1.msra.mxu0 %v878
        %880 = vmatprep.subr.mxu0 0.0
        %v881 = vand.u32 %v725, 4294901760
        %v882 = vsub.f32 %v725, %v881
        %v883 = vand.u32 %v882, 4294901760
        %v884 = vsub.f32 %v882, %v883
        %v885 = vand.u32 %v884, 4294901760
        %886 = vmatpush1.msra.mxu0 %v885
        %887 = vmatprep.subr.mxu0 0.0
        %v888 = vand.u32 %v726, 4294901760
        %v889 = vsub.f32 %v726, %v888
        %v890 = vand.u32 %v889, 4294901760
        %v891 = vsub.f32 %v889, %v890
        %v892 = vand.u32 %v891, 4294901760
        %893 = vmatpush1.msra.mxu0 %v892
        %894 = vmatprep.subr.mxu0 0.0
        %v895 = vand.u32 %v727, 4294901760
        %v896 = vsub.f32 %v727, %v895
        %v897 = vand.u32 %v896, 4294901760
        %v898 = vsub.f32 %v896, %v897
        %v899 = vand.u32 %v898, 4294901760
        %900 = vmatpush1.msra.mxu0 %v899
        %901 = vmatprep.subr.mxu0 0.0
        %v902 = vand.u32 %v728, 4294901760
        %v903 = vsub.f32 %v728, %v902
        %v904 = vand.u32 %v903, 4294901760
        %v905 = vsub.f32 %v903, %v904
        %v906 = vand.u32 %v905, 4294901760
        %907 = vmatpush1.msra.mxu0 %v906
        %908 = vmatprep.subr.mxu0 0.0
        %v909 = vand.u32 %v729, 4294901760
        %v910 = vsub.f32 %v729, %v909
        %v911 = vand.u32 %v910, 4294901760
        %v912 = vsub.f32 %v910, %v911
        %v913 = vand.u32 %v912, 4294901760
        %914 = vmatpush1.msra.mxu0 %v913
        %915 = vmatprep.subr.mxu0 0.0
        %v916 = vand.u32 %v730, 4294901760
        %v917 = vsub.f32 %v730, %v916
        %v918 = vand.u32 %v917, 4294901760
        %v919 = vsub.f32 %v917, %v918
        %v920 = vand.u32 %v919, 4294901760
        %921 = vmatpush1.msra.mxu0 %v920
        %922 = vmatprep.subr.mxu0 0.0
        %v923 = vand.u32 %v731, 4294901760
        %v924 = vsub.f32 %v731, %v923
        %v925 = vand.u32 %v924, 4294901760
        %v926 = vsub.f32 %v924, %v925
        %v927 = vand.u32 %v926, 4294901760
        %928 = vmatpush1.msra.mxu0 %v927
        %929 = vmatprep.subr.mxu0 0.0
        %v930 = vand.u32 %v732, 4294901760
        %v931 = vsub.f32 %v732, %v930
        %v932 = vand.u32 %v931, 4294901760
        %v933 = vsub.f32 %v931, %v932
        %v934 = vand.u32 %v933, 4294901760
        %935 = vmatpush1.msra.mxu0 %v934
        %936 = vmatprep.subr.mxu0 0.0
        %937 = vmatpush1.msra.mxu0 0.0
        %938 = vmatprep.subr.mxu0 0.0
        %939 = vmatpush1.msra.mxu0 0.0
        %940 = vmatprep.subr.mxu0 0.0
        %941 = vmatpush1.msra.mxu0 0.0
        %942 = vmatprep.subr.mxu0 0.0
        %943 = vmatpush1.msra.mxu0 0.0
        %944 = vmatprep.subr.mxu0 0.0
        %945 = vmatpush1.msra.mxu0 0.0
        %946 = vmatprep.subr.mxu0 0.0
        %947 = vmatpush1.msra.mxu0 0.0
        %948 = vmatprep.subr.mxu0 0.0
        %949 = vmatpush1.msra.mxu0 0.0
        %950 = vmatprep.subr.mxu0 0.0
        %951 = vmatpush1.msra.mxu0 0.0
        %952 = vmatprep.subr.mxu0 0.0
        %953 = vmatpush1.msra.mxu0 0.0
        %954 = vmatprep.subr.mxu0 0.0
        %955 = vmatpush1.msra.mxu0 0.0
        %956 = vmatprep.subr.mxu0 0.0
        %957 = vmatpush1.msra.mxu0 0.0
        %958 = vmatprep.subr.mxu0 0.0
        %959 = vmatpush1.msra.mxu0 0.0
        %960 = vmatprep.subr.mxu0 0.0
        %961 = vmatpush1.msra.mxu0 0.0
        %962 = vmatprep.subr.mxu0 0.0
        %963 = vmatpush1.msra.mxu0 0.0
        %964 = vmatprep.subr.mxu0 0.0
        %965 = vmatpush1.msra.mxu0 0.0
        %966 = vmatprep.subr.mxu0 0.0
        %967 = vmatpush1.msra.mxu0 0.0
        %968 = vmatprep.mubr.f32.mxu0 0.0
        %v969 = vand.u32 %v716, 4294901760
        %970 = vmatmul.mubr.f32.gmra.mrb[0].mxu0 %v969
        %v971 = vpop.f32.mrb[0].mxu0
        %v972 = vadd.f32 %v821, %v971
        %v973 = vpop.f32.mrb[0].mxu0
        %974 = vdwg.mxu0
        %975 = vmatprep.subr.mxu0 0.0
        %v976 = vand.u32 %v717, 4294901760
        %v977 = vsub.f32 %v717, %v976
        %978 = vmatpush1.msra.mxu0 %v977
        %979 = vmatprep.subr.mxu0 0.0
        %v980 = vand.u32 %v718, 4294901760
        %v981 = vsub.f32 %v718, %v980
        %982 = vmatpush1.msra.mxu0 %v981
        %983 = vmatprep.subr.mxu0 0.0
        %v984 = vand.u32 %v719, 4294901760
        %v985 = vsub.f32 %v719, %v984
        %986 = vmatpush1.msra.mxu0 %v985
        %987 = vmatprep.subr.mxu0 0.0
        %v988 = vand.u32 %v720, 4294901760
        %v989 = vsub.f32 %v720, %v988
        %990 = vmatpush1.msra.mxu0 %v989
        %991 = vmatprep.subr.mxu0 0.0
        %v992 = vand.u32 %v721, 4294901760
        %v993 = vsub.f32 %v721, %v992
        %994 = vmatpush1.msra.mxu0 %v993
        %995 = vmatprep.subr.mxu0 0.0
        %v996 = vand.u32 %v722, 4294901760
        %v997 = vsub.f32 %v722, %v996
        %998 = vmatpush1.msra.mxu0 %v997
        %999 = vmatprep.subr.mxu0 0.0
        %v1000 = vand.u32 %v723, 4294901760
        %v1001 = vsub.f32 %v723, %v1000
        %1002 = vmatpush1.msra.mxu0 %v1001
        %1003 = vmatprep.subr.mxu0 0.0
        %v1004 = vand.u32 %v724, 4294901760
        %v1005 = vsub.f32 %v724, %v1004
        %1006 = vmatpush1.msra.mxu0 %v1005
        %1007 = vmatprep.subr.mxu0 0.0
        %v1008 = vand.u32 %v725, 4294901760
        %v1009 = vsub.f32 %v725, %v1008
        %1010 = vmatpush1.msra.mxu0 %v1009
        %1011 = vmatprep.subr.mxu0 0.0
        %v1012 = vand.u32 %v726, 4294901760
        %v1013 = vsub.f32 %v726, %v1012
        %1014 = vmatpush1.msra.mxu0 %v1013
        %1015 = vmatprep.subr.mxu0 0.0
        %v1016 = vand.u32 %v727, 4294901760
        %v1017 = vsub.f32 %v727, %v1016
        %1018 = vmatpush1.msra.mxu0 %v1017
        %1019 = vmatprep.subr.mxu0 0.0
        %v1020 = vand.u32 %v728, 4294901760
        %v1021 = vsub.f32 %v728, %v1020
        %1022 = vmatpush1.msra.mxu0 %v1021
        %1023 = vmatprep.subr.mxu0 0.0
        %v1024 = vand.u32 %v729, 4294901760
        %v1025 = vsub.f32 %v729, %v1024
        %1026 = vmatpush1.msra.mxu0 %v1025
        %1027 = vmatprep.subr.mxu0 0.0
        %v1028 = vand.u32 %v730, 4294901760
        %v1029 = vsub.f32 %v730, %v1028
        %1030 = vmatpush1.msra.mxu0 %v1029
        %1031 = vmatprep.subr.mxu0 0.0
        %v1032 = vand.u32 %v731, 4294901760
        %v1033 = vsub.f32 %v731, %v1032
        %1034 = vmatpush1.msra.mxu0 %v1033
        %1035 = vmatprep.subr.mxu0 0.0
        %v1036 = vand.u32 %v732, 4294901760
        %v1037 = vsub.f32 %v732, %v1036
        %1038 = vmatpush1.msra.mxu0 %v1037
        %1039 = vmatprep.subr.mxu0 0.0
        %1040 = vmatpush1.msra.mxu0 0.0
        %1041 = vmatprep.subr.mxu0 0.0
        %1042 = vmatpush1.msra.mxu0 0.0
        %1043 = vmatprep.subr.mxu0 0.0
        %1044 = vmatpush1.msra.mxu0 0.0
        %1045 = vmatprep.subr.mxu0 0.0
        %1046 = vmatpush1.msra.mxu0 0.0
        %1047 = vmatprep.subr.mxu0 0.0
        %1048 = vmatpush1.msra.mxu0 0.0
        %1049 = vmatprep.subr.mxu0 0.0
        %1050 = vmatpush1.msra.mxu0 0.0
        %1051 = vmatprep.subr.mxu0 0.0
        %1052 = vmatpush1.msra.mxu0 0.0
        %1053 = vmatprep.subr.mxu0 0.0
        %1054 = vmatpush1.msra.mxu0 0.0
        %1055 = vmatprep.subr.mxu0 0.0
        %1056 = vmatpush1.msra.mxu0 0.0
        %1057 = vmatprep.subr.mxu0 0.0
        %1058 = vmatpush1.msra.mxu0 0.0
        %1059 = vmatprep.subr.mxu0 0.0
        %1060 = vmatpush1.msra.mxu0 0.0
        %1061 = vmatprep.subr.mxu0 0.0
        %1062 = vmatpush1.msra.mxu0 0.0
        %1063 = vmatprep.subr.mxu0 0.0
        %1064 = vmatpush1.msra.mxu0 0.0
        %1065 = vmatprep.subr.mxu0 0.0
        %1066 = vmatpush1.msra.mxu0 0.0
        %1067 = vmatprep.subr.mxu0 0.0
        %1068 = vmatpush1.msra.mxu0 0.0
        %1069 = vmatprep.subr.mxu0 0.0
        %1070 = vmatpush1.msra.mxu0 0.0
        %1071 = vmatprep.mubr.f32.mxu0 0.0
        %v1072 = vand.u32 %v716, 4294901760
        %v1073 = vsub.f32 %v716, %v1072
        %1074 = vmatmul.mubr.f32.gmra.mrb[0].mxu0 %v1073
        %v1075 = vpop.f32.mrb[0].mxu0
        %v1076 = vadd.f32 %v972, %v1075
        %v1077 = vpop.f32.mrb[0].mxu0
        %1078 = vdwg.mxu0
        %1079 = vmatprep.subr.mxu0 0.0
        %v1080 = vand.u32 %v717, 4294901760
        %1081 = vmatpush1.msra.mxu0 %v1080
        %1082 = vmatprep.subr.mxu0 0.0
        %v1083 = vand.u32 %v718, 4294901760
        %1084 = vmatpush1.msra.mxu0 %v1083
        %1085 = vmatprep.subr.mxu0 0.0
        %v1086 = vand.u32 %v719, 4294901760
        %1087 = vmatpush1.msra.mxu0 %v1086
        %1088 = vmatprep.subr.mxu0 0.0
        %v1089 = vand.u32 %v720, 4294901760
        %1090 = vmatpush1.msra.mxu0 %v1089
        %1091 = vmatprep.subr.mxu0 0.0
        %v1092 = vand.u32 %v721, 4294901760
        %1093 = vmatpush1.msra.mxu0 %v1092
        %1094 = vmatprep.subr.mxu0 0.0
        %v1095 = vand.u32 %v722, 4294901760
        %1096 = vmatpush1.msra.mxu0 %v1095
        %1097 = vmatprep.subr.mxu0 0.0
        %v1098 = vand.u32 %v723, 4294901760
        %1099 = vmatpush1.msra.mxu0 %v1098
        %1100 = vmatprep.subr.mxu0 0.0
        %v1101 = vand.u32 %v724, 4294901760
        %1102 = vmatpush1.msra.mxu0 %v1101
        %1103 = vmatprep.subr.mxu0 0.0
        %v1104 = vand.u32 %v725, 4294901760
        %1105 = vmatpush1.msra.mxu0 %v1104
        %1106 = vmatprep.subr.mxu0 0.0
        %v1107 = vand.u32 %v726, 4294901760
        %1108 = vmatpush1.msra.mxu0 %v1107
        %1109 = vmatprep.subr.mxu0 0.0
        %v1110 = vand.u32 %v727, 4294901760
        %1111 = vmatpush1.msra.mxu0 %v1110
        %1112 = vmatprep.subr.mxu0 0.0
        %v1113 = vand.u32 %v728, 4294901760
        %1114 = vmatpush1.msra.mxu0 %v1113
        %1115 = vmatprep.subr.mxu0 0.0
        %v1116 = vand.u32 %v729, 4294901760
        %1117 = vmatpush1.msra.mxu0 %v1116
        %1118 = vmatprep.subr.mxu0 0.0
        %v1119 = vand.u32 %v730, 4294901760
        %1120 = vmatpush1.msra.mxu0 %v1119
        %1121 = vmatprep.subr.mxu0 0.0
        %v1122 = vand.u32 %v731, 4294901760
        %1123 = vmatpush1.msra.mxu0 %v1122
        %1124 = vmatprep.subr.mxu0 0.0
        %v1125 = vand.u32 %v732, 4294901760
        %1126 = vmatpush1.msra.mxu0 %v1125
        %1127 = vmatprep.subr.mxu0 0.0
        %1128 = vmatpush1.msra.mxu0 0.0
        %1129 = vmatprep.subr.mxu0 0.0
        %1130 = vmatpush1.msra.mxu0 0.0
        %1131 = vmatprep.subr.mxu0 0.0
        %1132 = vmatpush1.msra.mxu0 0.0
        %1133 = vmatprep.subr.mxu0 0.0
        %1134 = vmatpush1.msra.mxu0 0.0
        %1135 = vmatprep.subr.mxu0 0.0
        %1136 = vmatpush1.msra.mxu0 0.0
        %1137 = vmatprep.subr.mxu0 0.0
        %1138 = vmatpush1.msra.mxu0 0.0
        %1139 = vmatprep.subr.mxu0 0.0
        %1140 = vmatpush1.msra.mxu0 0.0
        %1141 = vmatprep.subr.mxu0 0.0
        %1142 = vmatpush1.msra.mxu0 0.0
        %1143 = vmatprep.subr.mxu0 0.0
        %1144 = vmatpush1.msra.mxu0 0.0
        %1145 = vmatprep.subr.mxu0 0.0
        %1146 = vmatpush1.msra.mxu0 0.0
        %1147 = vmatprep.subr.mxu0 0.0
        %1148 = vmatpush1.msra.mxu0 0.0
        %1149 = vmatprep.subr.mxu0 0.0
        %1150 = vmatpush1.msra.mxu0 0.0
        %1151 = vmatprep.subr.mxu0 0.0
        %1152 = vmatpush1.msra.mxu0 0.0
        %1153 = vmatprep.subr.mxu0 0.0
        %1154 = vmatpush1.msra.mxu0 0.0
        %1155 = vmatprep.subr.mxu0 0.0
        %1156 = vmatpush1.msra.mxu0 0.0
        %1157 = vmatprep.subr.mxu0 0.0
        %1158 = vmatpush1.msra.mxu0 0.0
        %1159 = vmatprep.mubr.f32.mxu0 0.0
        %v1160 = vand.u32 %v716, 4294901760
        %v1161 = vsub.f32 %v716, %v1160
        %v1162 = vand.u32 %v1161, 4294901760
        %1163 = vmatmul.mubr.f32.gmra.mrb[0].mxu0 %v1162
        %v1164 = vpop.f32.mrb[0].mxu0
        %v1165 = vadd.f32 %v1076, %v1164
        %v1166 = vpop.f32.mrb[0].mxu0
        %1167 = vdwg.mxu0
        %1168 = vmatprep.subr.mxu0 0.0
        %v1169 = vand.u32 %v717, 4294901760
        %v1170 = vsub.f32 %v717, %v1169
        %v1171 = vand.u32 %v1170, 4294901760
        %1172 = vmatpush1.msra.mxu0 %v1171
        %1173 = vmatprep.subr.mxu0 0.0
        %v1174 = vand.u32 %v718, 4294901760
        %v1175 = vsub.f32 %v718, %v1174
        %v1176 = vand.u32 %v1175, 4294901760
        %1177 = vmatpush1.msra.mxu0 %v1176
        %1178 = vmatprep.subr.mxu0 0.0
        %v1179 = vand.u32 %v719, 4294901760
        %v1180 = vsub.f32 %v719, %v1179
        %v1181 = vand.u32 %v1180, 4294901760
        %1182 = vmatpush1.msra.mxu0 %v1181
        %1183 = vmatprep.subr.mxu0 0.0
        %v1184 = vand.u32 %v720, 4294901760
        %v1185 = vsub.f32 %v720, %v1184
        %v1186 = vand.u32 %v1185, 4294901760
        %1187 = vmatpush1.msra.mxu0 %v1186
        %1188 = vmatprep.subr.mxu0 0.0
        %v1189 = vand.u32 %v721, 4294901760
        %v1190 = vsub.f32 %v721, %v1189
        %v1191 = vand.u32 %v1190, 4294901760
        %1192 = vmatpush1.msra.mxu0 %v1191
        %1193 = vmatprep.subr.mxu0 0.0
        %v1194 = vand.u32 %v722, 4294901760
        %v1195 = vsub.f32 %v722, %v1194
        %v1196 = vand.u32 %v1195, 4294901760
        %1197 = vmatpush1.msra.mxu0 %v1196
        %1198 = vmatprep.subr.mxu0 0.0
        %v1199 = vand.u32 %v723, 4294901760
        %v1200 = vsub.f32 %v723, %v1199
        %v1201 = vand.u32 %v1200, 4294901760
        %1202 = vmatpush1.msra.mxu0 %v1201
        %1203 = vmatprep.subr.mxu0 0.0
        %v1204 = vand.u32 %v724, 4294901760
        %v1205 = vsub.f32 %v724, %v1204
        %v1206 = vand.u32 %v1205, 4294901760
        %1207 = vmatpush1.msra.mxu0 %v1206
        %1208 = vmatprep.subr.mxu0 0.0
        %v1209 = vand.u32 %v725, 4294901760
        %v1210 = vsub.f32 %v725, %v1209
        %v1211 = vand.u32 %v1210, 4294901760
        %1212 = vmatpush1.msra.mxu0 %v1211
        %1213 = vmatprep.subr.mxu0 0.0
        %v1214 = vand.u32 %v726, 4294901760
        %v1215 = vsub.f32 %v726, %v1214
        %v1216 = vand.u32 %v1215, 4294901760
        %1217 = vmatpush1.msra.mxu0 %v1216
        %1218 = vmatprep.subr.mxu0 0.0
        %v1219 = vand.u32 %v727, 4294901760
        %v1220 = vsub.f32 %v727, %v1219
        %v1221 = vand.u32 %v1220, 4294901760
        %1222 = vmatpush1.msra.mxu0 %v1221
        %1223 = vmatprep.subr.mxu0 0.0
        %v1224 = vand.u32 %v728, 4294901760
        %v1225 = vsub.f32 %v728, %v1224
        %v1226 = vand.u32 %v1225, 4294901760
        %1227 = vmatpush1.msra.mxu0 %v1226
        %1228 = vmatprep.subr.mxu0 0.0
        %v1229 = vand.u32 %v729, 4294901760
        %v1230 = vsub.f32 %v729, %v1229
        %v1231 = vand.u32 %v1230, 4294901760
        %1232 = vmatpush1.msra.mxu0 %v1231
        %1233 = vmatprep.subr.mxu0 0.0
        %v1234 = vand.u32 %v730, 4294901760
        %v1235 = vsub.f32 %v730, %v1234
        %v1236 = vand.u32 %v1235, 4294901760
        %1237 = vmatpush1.msra.mxu0 %v1236
        %1238 = vmatprep.subr.mxu0 0.0
        %v1239 = vand.u32 %v731, 4294901760
        %v1240 = vsub.f32 %v731, %v1239
        %v1241 = vand.u32 %v1240, 4294901760
        %1242 = vmatpush1.msra.mxu0 %v1241
        %1243 = vmatprep.subr.mxu0 0.0
        %v1244 = vand.u32 %v732, 4294901760
        %v1245 = vsub.f32 %v732, %v1244
        %v1246 = vand.u32 %v1245, 4294901760
        %1247 = vmatpush1.msra.mxu0 %v1246
        %1248 = vmatprep.subr.mxu0 0.0
        %1249 = vmatpush1.msra.mxu0 0.0
        %1250 = vmatprep.subr.mxu0 0.0
        %1251 = vmatpush1.msra.mxu0 0.0
        %1252 = vmatprep.subr.mxu0 0.0
        %1253 = vmatpush1.msra.mxu0 0.0
        %1254 = vmatprep.subr.mxu0 0.0
        %1255 = vmatpush1.msra.mxu0 0.0
        %1256 = vmatprep.subr.mxu0 0.0
        %1257 = vmatpush1.msra.mxu0 0.0
        %1258 = vmatprep.subr.mxu0 0.0
        %1259 = vmatpush1.msra.mxu0 0.0
        %1260 = vmatprep.subr.mxu0 0.0
        %1261 = vmatpush1.msra.mxu0 0.0
        %1262 = vmatprep.subr.mxu0 0.0
        %1263 = vmatpush1.msra.mxu0 0.0
        %1264 = vmatprep.subr.mxu0 0.0
        %1265 = vmatpush1.msra.mxu0 0.0
        %1266 = vmatprep.subr.mxu0 0.0
        %1267 = vmatpush1.msra.mxu0 0.0
        %1268 = vmatprep.subr.mxu0 0.0
        %1269 = vmatpush1.msra.mxu0 0.0
        %1270 = vmatprep.subr.mxu0 0.0
        %1271 = vmatpush1.msra.mxu0 0.0
        %1272 = vmatprep.subr.mxu0 0.0
        %1273 = vmatpush1.msra.mxu0 0.0
        %1274 = vmatprep.subr.mxu0 0.0
        %1275 = vmatpush1.msra.mxu0 0.0
        %1276 = vmatprep.subr.mxu0 0.0
        %1277 = vmatpush1.msra.mxu0 0.0
        %1278 = vmatprep.subr.mxu0 0.0
        %1279 = vmatpush1.msra.mxu0 0.0
        %1280 = vmatprep.mubr.f32.mxu0 0.0
        %v1281 = vand.u32 %v716, 4294901760
        %1282 = vmatmul.mubr.f32.gmra.mrb[0].mxu0 %v1281
        %v1283 = vpop.f32.mrb[0].mxu0
        %v1284 = vadd.f32 %v1165, %v1283
        %v1285 = vpop.f32.mrb[0].mxu0
        %1286 = vdwg.mxu0
        %1287 = vmatprep.subr.mxu0 0.0
        %v1288 = vand.u32 %v717, 4294901760
        %1289 = vmatpush1.msra.mxu0 %v1288
        %1290 = vmatprep.subr.mxu0 0.0
        %v1291 = vand.u32 %v718, 4294901760
        %1292 = vmatpush1.msra.mxu0 %v1291
        %1293 = vmatprep.subr.mxu0 0.0
        %v1294 = vand.u32 %v719, 4294901760
        %1295 = vmatpush1.msra.mxu0 %v1294
        %1296 = vmatprep.subr.mxu0 0.0
        %v1297 = vand.u32 %v720, 4294901760
        %1298 = vmatpush1.msra.mxu0 %v1297
        %1299 = vmatprep.subr.mxu0 0.0
        %v1300 = vand.u32 %v721, 4294901760
        %1301 = vmatpush1.msra.mxu0 %v1300
        %1302 = vmatprep.subr.mxu0 0.0
        %v1303 = vand.u32 %v722, 4294901760
        %1304 = vmatpush1.msra.mxu0 %v1303
        %1305 = vmatprep.subr.mxu0 0.0
        %v1306 = vand.u32 %v723, 4294901760
        %1307 = vmatpush1.msra.mxu0 %v1306
        %1308 = vmatprep.subr.mxu0 0.0
        %v1309 = vand.u32 %v724, 4294901760
        %1310 = vmatpush1.msra.mxu0 %v1309
        %1311 = vmatprep.subr.mxu0 0.0
        %v1312 = vand.u32 %v725, 4294901760
        %1313 = vmatpush1.msra.mxu0 %v1312
        %1314 = vmatprep.subr.mxu0 0.0
        %v1315 = vand.u32 %v726, 4294901760
        %1316 = vmatpush1.msra.mxu0 %v1315
        %1317 = vmatprep.subr.mxu0 0.0
        %v1318 = vand.u32 %v727, 4294901760
        %1319 = vmatpush1.msra.mxu0 %v1318
        %1320 = vmatprep.subr.mxu0 0.0
        %v1321 = vand.u32 %v728, 4294901760
        %1322 = vmatpush1.msra.mxu0 %v1321
        %1323 = vmatprep.subr.mxu0 0.0
        %v1324 = vand.u32 %v729, 4294901760
        %1325 = vmatpush1.msra.mxu0 %v1324
        %1326 = vmatprep.subr.mxu0 0.0
        %v1327 = vand.u32 %v730, 4294901760
        %1328 = vmatpush1.msra.mxu0 %v1327
        %1329 = vmatprep.subr.mxu0 0.0
        %v1330 = vand.u32 %v731, 4294901760
        %1331 = vmatpush1.msra.mxu0 %v1330
        %1332 = vmatprep.subr.mxu0 0.0
        %v1333 = vand.u32 %v732, 4294901760
        %1334 = vmatpush1.msra.mxu0 %v1333
        %1335 = vmatprep.subr.mxu0 0.0
        %1336 = vmatpush1.msra.mxu0 0.0
        %1337 = vmatprep.subr.mxu0 0.0
        %1338 = vmatpush1.msra.mxu0 0.0
        %1339 = vmatprep.subr.mxu0 0.0
        %1340 = vmatpush1.msra.mxu0 0.0
        %1341 = vmatprep.subr.mxu0 0.0
        %1342 = vmatpush1.msra.mxu0 0.0
        %1343 = vmatprep.subr.mxu0 0.0
        %1344 = vmatpush1.msra.mxu0 0.0
        %1345 = vmatprep.subr.mxu0 0.0
        %1346 = vmatpush1.msra.mxu0 0.0
        %1347 = vmatprep.subr.mxu0 0.0
        %1348 = vmatpush1.msra.mxu0 0.0
        %1349 = vmatprep.subr.mxu0 0.0
        %1350 = vmatpush1.msra.mxu0 0.0
        %1351 = vmatprep.subr.mxu0 0.0
        %1352 = vmatpush1.msra.mxu0 0.0
        %1353 = vmatprep.subr.mxu0 0.0
        %1354 = vmatpush1.msra.mxu0 0.0
        %1355 = vmatprep.subr.mxu0 0.0
        %1356 = vmatpush1.msra.mxu0 0.0
        %1357 = vmatprep.subr.mxu0 0.0
        %1358 = vmatpush1.msra.mxu0 0.0
        %1359 = vmatprep.subr.mxu0 0.0
        %1360 = vmatpush1.msra.mxu0 0.0
        %1361 = vmatprep.subr.mxu0 0.0
        %1362 = vmatpush1.msra.mxu0 0.0
        %1363 = vmatprep.subr.mxu0 0.0
        %1364 = vmatpush1.msra.mxu0 0.0
        %1365 = vmatprep.subr.mxu0 0.0
        %1366 = vmatpush1.msra.mxu0 0.0
        %1367 = vmatprep.mubr.f32.mxu0 0.0
        %v1368 = vand.u32 %v716, 4294901760
        %1369 = vmatmul.mubr.f32.gmra.mrb[0].mxu0 %v1368
        %v1370 = vpop.f32.mrb[0].mxu0
        %v1371 = vadd.f32 %v1284, %v1370
        %v1372 = vpop.f32.mrb[0].mxu0
        %1373 = vdwg.mxu0
        %v1374 = vmul.f32 %v1371, %v1371
        %v1376 = vrot.slane %v1374, 7
        %v1378 = vsub.f32 %v1371, %v1376
        %v1379 = vmax.f32 %v1378, 0.0
        %v1380 = vadd.f32 %v1379, 1e-05
        %v1381 = vrsqrt.pop %v1380
        %v1382 = vld [vmem:[%s2] sm:$0x1]
        %v1384 = vlaneseq
        %v1385 = vshrl.u32 %v1384, 7
        %v1386 = vsub.s32 0, %v1385
        %v1387 = vrot.slane %v1382, %v1386
        %v1389 = vmul.f32 %v1381, %v1387
        %v1390 = vld [vmem:[#allocation7] sm:$0x1]
        %v1392 = vrot.slane %v1389, 1
        %v1394 = vmul.f32 %v1371, %v1392
        %v1395 = vsub.f32 %v1390, %v1394
        %v1396 = vlaneseq
        %v1397 = vshrl.u32 %v1396, 7
        %v1398 = vsub.s32 1, %v1397
        %v1399 = vrot.slane %v1389, %v1398
        %v1400 = vmul.f32 %v545, %v1399
        %v1401 = vmul.f32 %v546, %v1399
        %v1403 = vlaneseq
        %v1404 = vshrl.u32 %v1403, 7
        %v1405 = vsub.s32 0, %v1404
        %v1406 = vrot.slane %v1395, %v1405
        %v1408 = vadd.f32 %v1400, %v1406
        %v1409 = vadd.f32 %v1401, %v1406
        %v1410 = vxor.u32 %v1408, 2147483648
        %v1411 = vxor.u32 %v1409, 2147483648
        %v1412 = vmul.f32 %v1410, 1.442695
        %v1413 = vpow.pop %v1412
        %v1414 = vmul.f32 %v1411, 1.442695
        %v1415 = vpow.pop %v1414
        %v1416 = vadd.f32 %v1413, 1.0
        %v1417 = vadd.f32 %v1415, 1.0
        %v1418 = vrcp.pop %v1416
        %v1419 = vmul.f32 1.0, %v1418
        %v1420 = vrcp.pop %v1417
        %v1421 = vmul.f32 1.0, %v1420
        %v1422 = vmul.f32 %v1408, %v1419
        %v1423 = vmul.f32 %v1409, %v1421
        %v1424 = vpack.c.bf16 %v1423, %v1422
        %v1426 = vshrl.u32 %v1424, 16
        %v1428 = vrot.slane %v1426, 7
        %v1429 = vshll.u32 %v1424, 16
        %v1431 = vor.u32 %v1428, %v1429
        %vm1433 = vcmask 1040384
        %vm1434 = vsmask.f32 256
        %vm1435 = vmand %vm1433, %vm1434
        %v1436 = vsel %vm1435, 0, %v1431
        %v1437 = vrot.slane %v1429, 1
        %v1438 = vor.u32 %v1426, %v1437
        %vm1440 = vcmask 1047552
        %vm1441 = vsmask.f32 7424
        %vm1442 = vmand %vm1440, %vm1441
        %v1443 = vsel %vm1442, %v1438, 0
        %v1444 = vld [vmem:[#allocation8] sm:$0xff]
        %v1445 = vld [vmem:[#allocation8 + $0x8] sm:$0xff]
        %v1446 = vld [vmem:[#allocation8 + $0x10] sm:$0xff]
        %v1447 = vld [vmem:[#allocation8 + $0x18] sm:$0xff]
        %v1448 = vld [vmem:[#allocation8 + $0x20] sm:$0xff]
        %v1449 = vld [vmem:[#allocation8 + $0x28] sm:$0xff]
        %v1450 = vld [vmem:[#allocation8 + $0x30] sm:$0xff]
        %v1451 = vld [vmem:[#allocation8 + $0x38] sm:$0xff]
        %v1452 = vld [vmem:[#allocation8 + $0x40] sm:$0xff]
        %v1453 = vld [vmem:[#allocation8 + $0x48] sm:$0xff]
        %v1454 = vld [vmem:[#allocation8 + $0x50] sm:$0xff]
        %v1455 = vld [vmem:[#allocation8 + $0x58] sm:$0xff]
        %v1456 = vld [vmem:[#allocation8 + $0x60] sm:$0xff]
        %v1457 = vld [vmem:[#allocation8 + $0x68] sm:$0xff]
        %v1458 = vld [vmem:[#allocation8 + $0x70] sm:$0xff]
        %v1459 = vld [vmem:[#allocation8 + $0x78] sm:$0xff]
        %v1460 = vld [vmem:[#allocation8 + $0x80] sm:$0xff]
        %v1461 = vld [vmem:[#allocation8 + $0x88] sm:$0xff]
        %v1462 = vld [vmem:[#allocation8 + $0x90] sm:$0xff]
        %v1463 = vld [vmem:[#allocation8 + $0x98] sm:$0xff]
        %v1464 = vld [vmem:[#allocation8 + $0xa0] sm:$0xff]
        %v1465 = vld [vmem:[#allocation8 + $0xa8] sm:$0xff]
        %v1466 = vld [vmem:[#allocation8 + $0xb0] sm:$0xff]
        %v1467 = vld [vmem:[#allocation8 + $0xb8] sm:$0xff]
        %v1468 = vld [vmem:[#allocation8 + $0xc0] sm:$0xff]
        %v1469 = vld [vmem:[#allocation8 + $0xc8] sm:$0xff]
        %v1470 = vld [vmem:[#allocation8 + $0xd0] sm:$0xff]
        %v1471 = vld [vmem:[#allocation8 + $0xd8] sm:$0xff]
        %v1472 = vld [vmem:[#allocation8 + $0xe0] sm:$0xff]
        %v1473 = vld [vmem:[#allocation8 + $0xe8] sm:$0xff]
        %v1474 = vld [vmem:[#allocation8 + $0xf0] sm:$0xff]
        %v1475 = vld [vmem:[#allocation8 + $0xf8] sm:$0xff]
        %v1476 = vld [vmem:[#allocation8 + $0x100] sm:$0xff]
        %v1477 = vld [vmem:[#allocation8 + $0x108] sm:$0xff]
        %v1478 = vld [vmem:[#allocation8 + $0x110] sm:$0xff]
        %v1479 = vld [vmem:[#allocation8 + $0x118] sm:$0xff]
        %v1480 = vld [vmem:[#allocation8 + $0x120] sm:$0xff]
        %v1481 = vld [vmem:[#allocation8 + $0x128] sm:$0xff]
        %v1482 = vld [vmem:[#allocation8 + $0x130] sm:$0xff]
        %v1483 = vld [vmem:[#allocation8 + $0x138] sm:$0xff]
        %v1484 = vld [vmem:[#allocation8 + $0x140] sm:$0xff]
        %v1485 = vld [vmem:[#allocation8 + $0x148] sm:$0xff]
        %v1486 = vld [vmem:[#allocation8 + $0x150] sm:$0xff]
        %v1487 = vld [vmem:[#allocation8 + $0x158] sm:$0xff]
        %v1488 = vld [vmem:[#allocation8 + $0x160] sm:$0xff]
        %v1489 = vld [vmem:[#allocation8 + $0x168] sm:$0xff]
        %v1490 = vld [vmem:[#allocation8 + $0x170] sm:$0xff]
        %v1491 = vld [vmem:[#allocation8 + $0x178] sm:$0xff]
        %v1492 = vld [vmem:[%s5] sm:$0x3]
        %v1494 = vlaneseq
        %v1495 = vshrl.u32 %v1494, 7
        %v1496 = vsub.s32 0, %v1495
        %v1497 = vrot.slane %v1492, %v1496
        %v1498 = vlaneseq
        %v1499 = vshrl.u32 %v1498, 7
        %v1500 = vsub.s32 1, %v1499
        %v1501 = vrot.slane %v1492, %v1500
        %v1552 = vunpack.c.l.b16 %v1444
        %v1553 = vunpack.c.h.b16 %v1444
        %v1554 = vunpack.c.l.b16 %v1445
        %v1555 = vunpack.c.h.b16 %v1445
        %v1556 = vunpack.c.l.b16 %v1446
        %v1557 = vunpack.c.h.b16 %v1446
        %v1558 = vunpack.c.l.b16 %v1447
        %v1559 = vunpack.c.h.b16 %v1447
        %v1560 = vunpack.c.l.b16 %v1448
        %v1561 = vunpack.c.h.b16 %v1448
        %v1562 = vunpack.c.l.b16 %v1449
        %v1563 = vunpack.c.h.b16 %v1449
        %v1564 = vunpack.c.l.b16 %v1450
        %v1565 = vunpack.c.h.b16 %v1450
        %v1566 = vunpack.c.l.b16 %v1451
        %v1567 = vunpack.c.h.b16 %v1451
        %v1568 = vunpack.c.l.b16 %v1452
        %v1569 = vunpack.c.h.b16 %v1452
        %v1570 = vunpack.c.l.b16 %v1453
        %v1571 = vunpack.c.h.b16 %v1453
        %v1572 = vunpack.c.l.b16 %v1454
        %v1573 = vunpack.c.h.b16 %v1454
        %v1574 = vunpack.c.l.b16 %v1455
        %v1575 = vunpack.c.h.b16 %v1455
        %v1576 = vunpack.c.l.b16 %v1456
        %v1577 = vunpack.c.h.b16 %v1456
        %v1578 = vunpack.c.l.b16 %v1457
        %v1579 = vunpack.c.h.b16 %v1457
        %v1580 = vunpack.c.l.b16 %v1458
        %v1581 = vunpack.c.h.b16 %v1458
        %v1582 = vunpack.c.l.b16 %v1459
        %v1583 = vunpack.c.h.b16 %v1459
        %v1584 = vunpack.c.l.b16 %v1460
        %v1585 = vunpack.c.h.b16 %v1460
        %v1586 = vunpack.c.l.b16 %v1461
        %v1587 = vunpack.c.h.b16 %v1461
        %v1588 = vunpack.c.l.b16 %v1462
        %v1589 = vunpack.c.h.b16 %v1462
        %v1590 = vunpack.c.l.b16 %v1463
        %v1591 = vunpack.c.h.b16 %v1463
        %v1592 = vunpack.c.l.b16 %v1464
        %v1593 = vunpack.c.h.b16 %v1464
        %v1594 = vunpack.c.l.b16 %v1465
        %v1595 = vunpack.c.h.b16 %v1465
        %v1596 = vunpack.c.l.b16 %v1466
        %v1597 = vunpack.c.h.b16 %v1466
        %v1598 = vunpack.c.l.b16 %v1467
        %v1599 = vunpack.c.h.b16 %v1467
        %v1600 = vunpack.c.l.b16 %v1468
        %v1601 = vunpack.c.h.b16 %v1468
        %v1602 = vunpack.c.l.b16 %v1469
        %v1603 = vunpack.c.h.b16 %v1469
        %v1604 = vunpack.c.l.b16 %v1470
        %v1605 = vunpack.c.h.b16 %v1470
        %v1606 = vunpack.c.l.b16 %v1471
        %v1607 = vunpack.c.h.b16 %v1471
        %v1608 = vunpack.c.l.b16 %v1472
        %v1609 = vunpack.c.h.b16 %v1472
        %v1610 = vunpack.c.l.b16 %v1473
        %v1611 = vunpack.c.h.b16 %v1473
        %v1612 = vunpack.c.l.b16 %v1474
        %v1613 = vunpack.c.h.b16 %v1474
        %v1614 = vunpack.c.l.b16 %v1475
        %v1615 = vunpack.c.h.b16 %v1475
        %v1616 = vunpack.c.l.b16 %v1476
        %v1617 = vunpack.c.h.b16 %v1476
        %v1618 = vunpack.c.l.b16 %v1477
        %v1619 = vunpack.c.h.b16 %v1477
        %v1620 = vunpack.c.l.b16 %v1478
        %v1621 = vunpack.c.h.b16 %v1478
        %v1622 = vunpack.c.l.b16 %v1479
        %v1623 = vunpack.c.h.b16 %v1479
        %v1624 = vunpack.c.l.b16 %v1480
        %v1625 = vunpack.c.h.b16 %v1480
        %v1626 = vunpack.c.l.b16 %v1481
        %v1627 = vunpack.c.h.b16 %v1481
        %v1628 = vunpack.c.l.b16 %v1482
        %v1629 = vunpack.c.h.b16 %v1482
        %v1630 = vunpack.c.l.b16 %v1483
        %v1631 = vunpack.c.h.b16 %v1483
        %v1632 = vunpack.c.l.b16 %v1484
        %v1633 = vunpack.c.h.b16 %v1484
        %v1634 = vunpack.c.l.b16 %v1485
        %v1635 = vunpack.c.h.b16 %v1485
        %v1636 = vunpack.c.l.b16 %v1486
        %v1637 = vunpack.c.h.b16 %v1486
        %v1638 = vunpack.c.l.b16 %v1487
        %v1639 = vunpack.c.h.b16 %v1487
        %v1640 = vunpack.c.l.b16 %v1488
        %v1641 = vunpack.c.h.b16 %v1488
        %v1642 = vunpack.c.l.b16 %v1489
        %v1643 = vunpack.c.h.b16 %v1489
        %v1644 = vunpack.c.l.b16 %v1490
        %v1645 = vunpack.c.h.b16 %v1490
        %v1646 = vunpack.c.l.b16 %v1491
        %v1647 = vunpack.c.h.b16 %v1491
        %v1648 = vpack.c.b16 %v1554, %v1552
        %v1649 = vpack.c.b16 %v1555, %v1553
        %v1650 = vpack.c.b16 %v1558, %v1556
        %v1651 = vpack.c.b16 %v1559, %v1557
        %v1652 = vpack.c.b16 %v1562, %v1560
        %v1653 = vpack.c.b16 %v1563, %v1561
        %v1654 = vpack.c.b16 %v1566, %v1564
        %v1655 = vpack.c.b16 %v1567, %v1565
        %v1656 = vpack.c.b16 %v1570, %v1568
        %v1657 = vpack.c.b16 %v1571, %v1569
        %v1658 = vpack.c.b16 %v1574, %v1572
        %v1659 = vpack.c.b16 %v1575, %v1573
        %v1660 = vpack.c.b16 %v1578, %v1576
        %v1661 = vpack.c.b16 %v1579, %v1577
        %v1662 = vpack.c.b16 %v1582, %v1580
        %v1663 = vpack.c.b16 %v1583, %v1581
        %v1664 = vpack.c.b16 %v1586, %v1584
        %v1665 = vpack.c.b16 %v1587, %v1585
        %v1666 = vpack.c.b16 %v1590, %v1588
        %v1667 = vpack.c.b16 %v1591, %v1589
        %v1668 = vpack.c.b16 %v1594, %v1592
        %v1669 = vpack.c.b16 %v1595, %v1593
        %v1670 = vpack.c.b16 %v1598, %v1596
        %v1671 = vpack.c.b16 %v1599, %v1597
        %v1672 = vpack.c.b16 %v1602, %v1600
        %v1673 = vpack.c.b16 %v1603, %v1601
        %v1674 = vpack.c.b16 %v1606, %v1604
        %v1675 = vpack.c.b16 %v1607, %v1605
        %v1676 = vpack.c.b16 %v1610, %v1608
        %v1677 = vpack.c.b16 %v1611, %v1609
        %v1678 = vpack.c.b16 %v1614, %v1612
        %v1679 = vpack.c.b16 %v1615, %v1613
        %v1680 = vpack.c.b16 %v1618, %v1616
        %v1681 = vpack.c.b16 %v1619, %v1617
        %v1682 = vpack.c.b16 %v1622, %v1620
        %v1683 = vpack.c.b16 %v1623, %v1621
        %v1684 = vpack.c.b16 %v1626, %v1624
        %v1685 = vpack.c.b16 %v1627, %v1625
        %v1686 = vpack.c.b16 %v1630, %v1628
        %v1687 = vpack.c.b16 %v1631, %v1629
        %v1688 = vpack.c.b16 %v1634, %v1632
        %v1689 = vpack.c.b16 %v1635, %v1633
        %v1690 = vpack.c.b16 %v1638, %v1636
        %v1691 = vpack.c.b16 %v1639, %v1637
        %v1692 = vpack.c.b16 %v1642, %v1640
        %v1693 = vpack.c.b16 %v1643, %v1641
        %v1694 = vpack.c.b16 %v1646, %v1644
        %v1695 = vpack.c.b16 %v1647, %v1645
        %1744 = vmatprep.subr.bf16.mxu0 %v1649
        %1745 = vmatpush1.bf16.msra.mxu0 %v1648
        %1746 = vmatprep.subr.bf16.mxu0 %v1651
        %1747 = vmatpush1.bf16.msra.mxu0 %v1650
        %1748 = vmatprep.subr.bf16.mxu0 %v1653
        %1749 = vmatpush1.bf16.msra.mxu0 %v1652
        %1750 = vmatprep.subr.bf16.mxu0 %v1655
        %1751 = vmatpush1.bf16.msra.mxu0 %v1654
        %1752 = vmatprep.subr.bf16.mxu0 %v1657
        %1753 = vmatpush1.bf16.msra.mxu0 %v1656
        %1754 = vmatprep.subr.bf16.mxu0 %v1659
        %1755 = vmatpush1.bf16.msra.mxu0 %v1658
        %1756 = vmatprep.subr.bf16.mxu0 %v1661
        %1757 = vmatpush1.bf16.msra.mxu0 %v1660
        %1758 = vmatprep.subr.bf16.mxu0 %v1663
        %1759 = vmatpush1.bf16.msra.mxu0 %v1662
        %1760 = vmatprep.subr.bf16.mxu0 %v1665
        %1761 = vmatpush1.bf16.msra.mxu0 %v1664
        %1762 = vmatprep.subr.bf16.mxu0 %v1667
        %1763 = vmatpush1.bf16.msra.mxu0 %v1666
        %1764 = vmatprep.subr.bf16.mxu0 %v1669
        %1765 = vmatpush1.bf16.msra.mxu0 %v1668
        %1766 = vmatprep.subr.bf16.mxu0 %v1671
        %1767 = vmatpush1.bf16.msra.mxu0 %v1670
        %1768 = vmatprep.subr.bf16.mxu0 %v1673
        %1769 = vmatpush1.bf16.msra.mxu0 %v1672
        %1770 = vmatprep.subr.bf16.mxu0 %v1675
        %1771 = vmatpush1.bf16.msra.mxu0 %v1674
        %1772 = vmatprep.subr.bf16.mxu0 %v1677
        %1773 = vmatpush1.bf16.msra.mxu0 %v1676
        %1774 = vmatprep.subr.bf16.mxu0 %v1679
        %1775 = vmatpush1.bf16.msra.mxu0 %v1678
        %1776 = vmatprep.mubr.bf16.mxu0 %v1424
        %1777 = vmatmul.mubr.bf16.gmra.mrb[0].mxu0 %v1436
        %v1778 = vpop.f32.mrb[0].mxu0
        %v1779 = vadd.f32 %v1497, %v1778
        %v1780 = vpop.f32.mrb[0].mxu0
        %v1781 = vadd.f32 %v1501, %v1780
        %v1782 = vpop.f32.mrb[0].mxu0
        %v1783 = vadd.f32 %v1497, %v1782
        %v1784 = vpop.f32.mrb[0].mxu0
        %v1785 = vadd.f32 %v1501, %v1784
        %1786 = vdwg.mxu0
        %1787 = vmatprep.subr.bf16.mxu0 %v1681
        %1788 = vmatpush1.bf16.msra.mxu0 %v1680
        %1789 = vmatprep.subr.bf16.mxu0 %v1683
        %1790 = vmatpush1.bf16.msra.mxu0 %v1682
        %1791 = vmatprep.subr.bf16.mxu0 %v1685
        %1792 = vmatpush1.bf16.msra.mxu0 %v1684
        %1793 = vmatprep.subr.bf16.mxu0 %v1687
        %1794 = vmatpush1.bf16.msra.mxu0 %v1686
        %1795 = vmatprep.subr.bf16.mxu0 %v1689
        %1796 = vmatpush1.bf16.msra.mxu0 %v1688
        %1797 = vmatprep.subr.bf16.mxu0 %v1691
        %1798 = vmatpush1.bf16.msra.mxu0 %v1690
        %1799 = vmatprep.subr.bf16.mxu0 %v1693
        %1800 = vmatpush1.bf16.msra.mxu0 %v1692
        %1801 = vmatprep.subr.bf16.mxu0 %v1695
        %1802 = vmatpush1.bf16.msra.mxu0 %v1694
        %1803 = vmatprep.subr.bf16.mxu0 0
        %1804 = vmatpush1.bf16.msra.mxu0 0
        %1805 = vmatprep.subr.bf16.mxu0 0
        %1806 = vmatpush1.bf16.msra.mxu0 0
        %1807 = vmatprep.subr.bf16.mxu0 0
        %1808 = vmatpush1.bf16.msra.mxu0 0
        %1809 = vmatprep.subr.bf16.mxu0 0
        %1810 = vmatpush1.bf16.msra.mxu0 0
        %1811 = vmatprep.subr.bf16.mxu0 0
        %1812 = vmatpush1.bf16.msra.mxu0 0
        %1813 = vmatprep.subr.bf16.mxu0 0
        %1814 = vmatpush1.bf16.msra.mxu0 0
        %1815 = vmatprep.subr.bf16.mxu0 0
        %1816 = vmatpush1.bf16.msra.mxu0 0
        %1817 = vmatprep.subr.bf16.mxu0 0
        %1818 = vmatpush1.bf16.msra.mxu0 0
        %1819 = vmatprep.mubr.bf16.mxu0 0
        %1820 = vmatmul.mubr.bf16.gmra.mrb[0].mxu0 %v1443
        %v1821 = vpop.f32.mrb[0].mxu0
        %v1822 = vadd.f32 %v1779, %v1821
        %v1823 = vpop.f32.mrb[0].mxu0
        %v1824 = vadd.f32 %v1781, %v1823
        %v1825 = vpop.f32.mrb[0].mxu0
        %v1826 = vadd.f32 %v1783, %v1825
        %v1827 = vpop.f32.mrb[0].mxu0
        %v1828 = vadd.f32 %v1785, %v1827
        %1829 = vdwg.mxu0
        %v1830 = vadd.f32 %v1822, %v1826
        %v1831 = vrot.slane %v1830, 4
        %v1832 = vadd.f32 %v1830, %v1831
        %v1833 = vrot.slane %v1832, 2
        %v1834 = vadd.f32 %v1832, %v1833
        %v1835 = vrot.slane %v1834, 1
        %v1836 = vadd.f32 %v1834, %v1835
        %v1837 = vadd.f32 %v1824, %v1828
        %v1838 = vrot.slane %v1837, 4
        %v1839 = vadd.f32 %v1837, %v1838
        %v1840 = vrot.slane %v1839, 2
        %v1841 = vadd.f32 %v1839, %v1840
        %v1842 = vrot.slane %v1841, 1
        %v1843 = vadd.f32 %v1841, %v1842
        %v1844 = vmul.f32 %v1822, %v1822
        %v1845 = vmul.f32 %v1824, %v1824
        %v1846 = vmul.f32 %v1826, %v1826
        %v1847 = vmul.f32 %v1828, %v1828
        %v1848 = vadd.f32 %v1844, %v1846
        %v1849 = vrot.slane %v1848, 4
        %v1850 = vadd.f32 %v1848, %v1849
        %v1851 = vrot.slane %v1850, 2
        %v1852 = vadd.f32 %v1850, %v1851
        %v1853 = vrot.slane %v1852, 1
        %v1854 = vadd.f32 %v1852, %v1853
        %v1855 = vadd.f32 %v1845, %v1847
        %v1856 = vrot.slane %v1855, 4
        %v1857 = vadd.f32 %v1855, %v1856
        %v1858 = vrot.slane %v1857, 2
        %v1859 = vadd.f32 %v1857, %v1858
        %v1860 = vrot.slane %v1859, 1
        %v1861 = vadd.f32 %v1859, %v1860
        %v1862 = vsel %vm715, %v1836, %v1854
        %v1863 = vsel %vm715, %v1843, %v1861
        %v1864 = vld [vmem:[#allocation10] sm:$0xff]
        %v1865 = vld [vmem:[#allocation10 + $0x8] sm:$0xff]
        %v1866 = vld [vmem:[#allocation10 + $0x10] sm:$0xff]
        %v1867 = vld [vmem:[#allocation10 + $0x18] sm:$0xff]
        %v1868 = vld [vmem:[#allocation10 + $0x20] sm:$0xff]
        %v1869 = vld [vmem:[#allocation10 + $0x28] sm:$0xff]
        %v1870 = vld [vmem:[#allocation10 + $0x30] sm:$0xff]
        %v1871 = vld [vmem:[#allocation10 + $0x38] sm:$0xff]
        %v1872 = vld [vmem:[#allocation10 + $0x40] sm:$0xff]
        %v1873 = vld [vmem:[#allocation10 + $0x48] sm:$0xff]
        %v1874 = vld [vmem:[#allocation10 + $0x50] sm:$0xff]
        %v1875 = vld [vmem:[#allocation10 + $0x58] sm:$0xff]
        %v1876 = vld [vmem:[#allocation10 + $0x60] sm:$0xff]
        %v1877 = vld [vmem:[#allocation10 + $0x68] sm:$0xff]
        %v1878 = vld [vmem:[#allocation10 + $0x70] sm:$0xff]
        %v1879 = vld [vmem:[#allocation10 + $0x78] sm:$0xff]
        %v1880 = vld [vmem:[#allocation10 + $0x80] sm:$0xff]
        %v1881 = vld [vmem:[#allocation10 + $0x88] sm:$0xff]
        %v1882 = vld [vmem:[#allocation10 + $0x90] sm:$0xff]
        %v1883 = vld [vmem:[#allocation10 + $0x98] sm:$0xff]
        %v1884 = vld [vmem:[#allocation10 + $0xa0] sm:$0xff]
        %v1885 = vld [vmem:[#allocation10 + $0xa8] sm:$0xff]
        %v1886 = vld [vmem:[#allocation10 + $0xb0] sm:$0xff]
        %v1887 = vld [vmem:[#allocation10 + $0xb8] sm:$0xff]
        %v1888 = vld [vmem:[#allocation10 + $0xc0] sm:$0xff]
        %v1889 = vld [vmem:[#allocation10 + $0xc8] sm:$0xff]
        %v1890 = vld [vmem:[#allocation10 + $0xd0] sm:$0xff]
        %v1891 = vld [vmem:[#allocation10 + $0xd8] sm:$0xff]
        %v1892 = vld [vmem:[#allocation10 + $0xe0] sm:$0xff]
        %v1893 = vld [vmem:[#allocation10 + $0xe8] sm:$0xff]
        %v1894 = vld [vmem:[#allocation10 + $0xf0] sm:$0xff]
        %v1895 = vld [vmem:[#allocation10 + $0xf8] sm:$0xff]
        %v1896 = vld [vmem:[#allocation10 + $0x100] sm:$0xff]
        %v1897 = vld [vmem:[#allocation10 + $0x108] sm:$0xff]
        %v1898 = vld [vmem:[#allocation10 + $0x110] sm:$0xff]
        %v1899 = vld [vmem:[#allocation10 + $0x118] sm:$0xff]
        %v1900 = vld [vmem:[#allocation10 + $0x120] sm:$0xff]
        %v1901 = vld [vmem:[#allocation10 + $0x128] sm:$0xff]
        %v1902 = vld [vmem:[#allocation10 + $0x130] sm:$0xff]
        %v1903 = vld [vmem:[#allocation10 + $0x138] sm:$0xff]
        %v1904 = vld [vmem:[#allocation10 + $0x140] sm:$0xff]
        %v1905 = vld [vmem:[#allocation10 + $0x148] sm:$0xff]
        %v1906 = vld [vmem:[#allocation10 + $0x150] sm:$0xff]
        %v1907 = vld [vmem:[#allocation10 + $0x158] sm:$0xff]
        %v1908 = vld [vmem:[#allocation10 + $0x160] sm:$0xff]
        %v1909 = vld [vmem:[#allocation10 + $0x168] sm:$0xff]
        %v1910 = vld [vmem:[#allocation10 + $0x170] sm:$0xff]
        %v1911 = vld [vmem:[#allocation10 + $0x178] sm:$0xff]
        %v1912 = vld [vmem:[#allocation10 + $0x180] sm:$0xff]
        %v1913 = vld [vmem:[#allocation10 + $0x188] sm:$0xff]
        %v1914 = vld [vmem:[#allocation10 + $0x190] sm:$0xff]
        %v1915 = vld [vmem:[#allocation10 + $0x198] sm:$0xff]
        %v1916 = vld [vmem:[#allocation10 + $0x1a0] sm:$0xff]
        %v1917 = vld [vmem:[#allocation10 + $0x1a8] sm:$0xff]
        %v1918 = vld [vmem:[#allocation10 + $0x1b0] sm:$0xff]
        %v1919 = vld [vmem:[#allocation10 + $0x1b8] sm:$0xff]
        %v1920 = vld [vmem:[#allocation10 + $0x1c0] sm:$0xff]
        %v1921 = vld [vmem:[#allocation10 + $0x1c8] sm:$0xff]
        %v1922 = vld [vmem:[#allocation10 + $0x1d0] sm:$0xff]
        %v1923 = vld [vmem:[#allocation10 + $0x1d8] sm:$0xff]
        %v1924 = vld [vmem:[#allocation10 + $0x1e0] sm:$0xff]
        %v1925 = vld [vmem:[#allocation10 + $0x1e8] sm:$0xff]
        %v1926 = vld [vmem:[#allocation10 + $0x1f0] sm:$0xff]
        %v1927 = vld [vmem:[#allocation10 + $0x1f8] sm:$0xff]
        %v1928 = vand.u32 %v1865, 4294901760
        %1929 = vmatprep.subr.mxu0 %v1928
        %v1930 = vand.u32 %v1864, 4294901760
        %1931 = vmatpush1.msra.mxu0 %v1930
        %v1932 = vand.u32 %v1867, 4294901760
        %1933 = vmatprep.subr.mxu0 %v1932
        %v1934 = vand.u32 %v1866, 4294901760
        %1935 = vmatpush1.msra.mxu0 %v1934
        %v1936 = vand.u32 %v1869, 4294901760
        %1937 = vmatprep.subr.mxu0 %v1936
        %v1938 = vand.u32 %v1868, 4294901760
        %1939 = vmatpush1.msra.mxu0 %v1938
        %v1940 = vand.u32 %v1871, 4294901760
        %1941 = vmatprep.subr.mxu0 %v1940
        %v1942 = vand.u32 %v1870, 4294901760
        %1943 = vmatpush1.msra.mxu0 %v1942
        %v1944 = vand.u32 %v1873, 4294901760
        %1945 = vmatprep.subr.mxu0 %v1944
        %v1946 = vand.u32 %v1872, 4294901760
        %1947 = vmatpush1.msra.mxu0 %v1946
        %v1948 = vand.u32 %v1875, 4294901760
        %1949 = vmatprep.subr.mxu0 %v1948
        %v1950 = vand.u32 %v1874, 4294901760
        %1951 = vmatpush1.msra.mxu0 %v1950
        %v1952 = vand.u32 %v1877, 4294901760
        %1953 = vmatprep.subr.mxu0 %v1952
        %v1954 = vand.u32 %v1876, 4294901760
        %1955 = vmatpush1.msra.mxu0 %v1954
        %v1956 = vand.u32 %v1879, 4294901760
        %1957 = vmatprep.subr.mxu0 %v1956
        %v1958 = vand.u32 %v1878, 4294901760
        %1959 = vmatpush1.msra.mxu0 %v1958
        %v1960 = vand.u32 %v1881, 4294901760
        %1961 = vmatprep.subr.mxu0 %v1960
        %v1962 = vand.u32 %v1880, 4294901760
        %1963 = vmatpush1.msra.mxu0 %v1962
        %v1964 = vand.u32 %v1883, 4294901760
        %1965 = vmatprep.subr.mxu0 %v1964
        %v1966 = vand.u32 %v1882, 4294901760
        %1967 = vmatpush1.msra.mxu0 %v1966
        %v1968 = vand.u32 %v1885, 4294901760
        %1969 = vmatprep.subr.mxu0 %v1968
        %v1970 = vand.u32 %v1884, 4294901760
        %1971 = vmatpush1.msra.mxu0 %v1970
        %v1972 = vand.u32 %v1887, 4294901760
        %1973 = vmatprep.subr.mxu0 %v1972
        %v1974 = vand.u32 %v1886, 4294901760
        %1975 = vmatpush1.msra.mxu0 %v1974
        %v1976 = vand.u32 %v1889, 4294901760
        %1977 = vmatprep.subr.mxu0 %v1976
        %v1978 = vand.u32 %v1888, 4294901760
        %1979 = vmatpush1.msra.mxu0 %v1978
        %v1980 = vand.u32 %v1891, 4294901760
        %1981 = vmatprep.subr.mxu0 %v1980
        %v1982 = vand.u32 %v1890, 4294901760
        %1983 = vmatpush1.msra.mxu0 %v1982
        %v1984 = vand.u32 %v1893, 4294901760
        %1985 = vmatprep.subr.mxu0 %v1984
        %v1986 = vand.u32 %v1892, 4294901760
        %1987 = vmatpush1.msra.mxu0 %v1986
        %v1988 = vand.u32 %v1895, 4294901760
        %1989 = vmatprep.subr.mxu0 %v1988
        %v1990 = vand.u32 %v1894, 4294901760
        %1991 = vmatpush1.msra.mxu0 %v1990
        %v1992 = vand.u32 %v1897, 4294901760
        %1993 = vmatprep.subr.mxu0 %v1992
        %v1994 = vand.u32 %v1896, 4294901760
        %1995 = vmatpush1.msra.mxu0 %v1994
        %v1996 = vand.u32 %v1899, 4294901760
        %1997 = vmatprep.subr.mxu0 %v1996
        %v1998 = vand.u32 %v1898, 4294901760
        %1999 = vmatpush1.msra.mxu0 %v1998
        %v2000 = vand.u32 %v1901, 4294901760
        %2001 = vmatprep.subr.mxu0 %v2000
        %v2002 = vand.u32 %v1900, 4294901760
        %2003 = vmatpush1.msra.mxu0 %v2002
        %v2004 = vand.u32 %v1903, 4294901760
        %2005 = vmatprep.subr.mxu0 %v2004
        %v2006 = vand.u32 %v1902, 4294901760
        %2007 = vmatpush1.msra.mxu0 %v2006
        %v2008 = vand.u32 %v1905, 4294901760
        %2009 = vmatprep.subr.mxu0 %v2008
        %v2010 = vand.u32 %v1904, 4294901760
        %2011 = vmatpush1.msra.mxu0 %v2010
        %v2012 = vand.u32 %v1907, 4294901760
        %2013 = vmatprep.subr.mxu0 %v2012
        %v2014 = vand.u32 %v1906, 4294901760
        %2015 = vmatpush1.msra.mxu0 %v2014
        %v2016 = vand.u32 %v1909, 4294901760
        %2017 = vmatprep.subr.mxu0 %v2016
        %v2018 = vand.u32 %v1908, 4294901760
        %2019 = vmatpush1.msra.mxu0 %v2018
        %v2020 = vand.u32 %v1911, 4294901760
        %2021 = vmatprep.subr.mxu0 %v2020
        %v2022 = vand.u32 %v1910, 4294901760
        %2023 = vmatpush1.msra.mxu0 %v2022
        %v2024 = vand.u32 %v1913, 4294901760
        %2025 = vmatprep.subr.mxu0 %v2024
        %v2026 = vand.u32 %v1912, 4294901760
        %2027 = vmatpush1.msra.mxu0 %v2026
        %v2028 = vand.u32 %v1915, 4294901760
        %2029 = vmatprep.subr.mxu0 %v2028
        %v2030 = vand.u32 %v1914, 4294901760
        %2031 = vmatpush1.msra.mxu0 %v2030
        %v2032 = vand.u32 %v1917, 4294901760
        %2033 = vmatprep.subr.mxu0 %v2032
        %v2034 = vand.u32 %v1916, 4294901760
        %2035 = vmatpush1.msra.mxu0 %v2034
        %v2036 = vand.u32 %v1919, 4294901760
        %2037 = vmatprep.subr.mxu0 %v2036
        %v2038 = vand.u32 %v1918, 4294901760
        %2039 = vmatpush1.msra.mxu0 %v2038
        %v2040 = vand.u32 %v1921, 4294901760
        %2041 = vmatprep.subr.mxu0 %v2040
        %v2042 = vand.u32 %v1920, 4294901760
        %2043 = vmatpush1.msra.mxu0 %v2042
        %v2044 = vand.u32 %v1923, 4294901760
        %2045 = vmatprep.subr.mxu0 %v2044
        %v2046 = vand.u32 %v1922, 4294901760
        %2047 = vmatpush1.msra.mxu0 %v2046
        %v2048 = vand.u32 %v1925, 4294901760
        %2049 = vmatprep.subr.mxu0 %v2048
        %v2050 = vand.u32 %v1924, 4294901760
        %2051 = vmatpush1.msra.mxu0 %v2050
        %v2052 = vand.u32 %v1927, 4294901760
        %2053 = vmatprep.subr.mxu0 %v2052
        %v2054 = vand.u32 %v1926, 4294901760
        %2055 = vmatpush1.msra.mxu0 %v2054
        %v2056 = vand.u32 %v1863, 4294901760
        %v2057 = vsub.f32 %v1863, %v2056
        %v2058 = vand.u32 %v2057, 4294901760
        %v2059 = vsub.f32 %v2057, %v2058
        %v2060 = vand.u32 %v2059, 4294901760
        %2061 = vmatprep.mubr.f32.mxu0 %v2060
        %v2062 = vand.u32 %v1862, 4294901760
        %v2063 = vsub.f32 %v1862, %v2062
        %v2064 = vand.u32 %v2063, 4294901760
        %v2065 = vsub.f32 %v2063, %v2064
        %v2066 = vand.u32 %v2065, 4294901760
        %2067 = vmatmul.mubr.f32.gmra.mrb[0].mxu0 %v2066
        %v2068 = vpop.f32.mrb[0].mxu0
        %v2069 = vadd.f32 0.0, %v2068
        %v2070 = vpop.f32.mrb[0].mxu0
        %v2071 = vadd.f32 0.0, %v2070
        %2072 = vdwg.mxu0
        %v2073 = vand.u32 %v1865, 4294901760
        %v2074 = vsub.f32 %v1865, %v2073
        %v2075 = vand.u32 %v2074, 4294901760
        %v2076 = vsub.f32 %v2074, %v2075
        %v2077 = vand.u32 %v2076, 4294901760
        %2078 = vmatprep.subr.mxu0 %v2077
        %v2079 = vand.u32 %v1864, 4294901760
        %v2080 = vsub.f32 %v1864, %v2079
        %v2081 = vand.u32 %v2080, 4294901760
        %v2082 = vsub.f32 %v2080, %v2081
        %v2083 = vand.u32 %v2082, 4294901760
        %2084 = vmatpush1.msra.mxu0 %v2083
        %v2085 = vand.u32 %v1867, 4294901760
        %v2086 = vsub.f32 %v1867, %v2085
        %v2087 = vand.u32 %v2086, 4294901760
        %v2088 = vsub.f32 %v2086, %v2087
        %v2089 = vand.u32 %v2088, 4294901760
        %2090 = vmatprep.subr.mxu0 %v2089
        %v2091 = vand.u32 %v1866, 4294901760
        %v2092 = vsub.f32 %v1866, %v2091
        %v2093 = vand.u32 %v2092, 4294901760
        %v2094 = vsub.f32 %v2092, %v2093
        %v2095 = vand.u32 %v2094, 4294901760
        %2096 = vmatpush1.msra.mxu0 %v2095
        %v2097 = vand.u32 %v1869, 4294901760
        %v2098 = vsub.f32 %v1869, %v2097
        %v2099 = vand.u32 %v2098, 4294901760
        %v2100 = vsub.f32 %v2098, %v2099
        %v2101 = vand.u32 %v2100, 4294901760
        %2102 = vmatprep.subr.mxu0 %v2101
        %v2103 = vand.u32 %v1868, 4294901760
        %v2104 = vsub.f32 %v1868, %v2103
        %v2105 = vand.u32 %v2104, 4294901760
        %v2106 = vsub.f32 %v2104, %v2105
        %v2107 = vand.u32 %v2106, 4294901760
        %2108 = vmatpush1.msra.mxu0 %v2107
        %v2109 = vand.u32 %v1871, 4294901760
        %v2110 = vsub.f32 %v1871, %v2109
        %v2111 = vand.u32 %v2110, 4294901760
        %v2112 = vsub.f32 %v2110, %v2111
        %v2113 = vand.u32 %v2112, 4294901760
        %2114 = vmatprep.subr.mxu0 %v2113
        %v2115 = vand.u32 %v1870, 4294901760
        %v2116 = vsub.f32 %v1870, %v2115
        %v2117 = vand.u32 %v2116, 4294901760
        %v2118 = vsub.f32 %v2116, %v2117
        %v2119 = vand.u32 %v2118, 4294901760
        %2120 = vmatpush1.msra.mxu0 %v2119
        %v2121 = vand.u32 %v1873, 4294901760
        %v2122 = vsub.f32 %v1873, %v2121
        %v2123 = vand.u32 %v2122, 4294901760
        %v2124 = vsub.f32 %v2122, %v2123
        %v2125 = vand.u32 %v2124, 4294901760
        %2126 = vmatprep.subr.mxu0 %v2125
        %v2127 = vand.u32 %v1872, 4294901760
        %v2128 = vsub.f32 %v1872, %v2127
        %v2129 = vand.u32 %v2128, 4294901760
        %v2130 = vsub.f32 %v2128, %v2129
        %v2131 = vand.u32 %v2130, 4294901760
        %2132 = vmatpush1.msra.mxu0 %v2131
        %v2133 = vand.u32 %v1875, 4294901760
        %v2134 = vsub.f32 %v1875, %v2133
        %v2135 = vand.u32 %v2134, 4294901760
        %v2136 = vsub.f32 %v2134, %v2135
        %v2137 = vand.u32 %v2136, 4294901760
        %2138 = vmatprep.subr.mxu0 %v2137
        %v2139 = vand.u32 %v1874, 4294901760
        %v2140 = vsub.f32 %v1874, %v2139
        %v2141 = vand.u32 %v2140, 4294901760
        %v2142 = vsub.f32 %v2140, %v2141
        %v2143 = vand.u32 %v2142, 4294901760
        %2144 = vmatpush1.msra.mxu0 %v2143
        %v2145 = vand.u32 %v1877, 4294901760
        %v2146 = vsub.f32 %v1877, %v2145
        %v2147 = vand.u32 %v2146, 4294901760
        %v2148 = vsub.f32 %v2146, %v2147
        %v2149 = vand.u32 %v2148, 4294901760
        %2150 = vmatprep.subr.mxu0 %v2149
        %v2151 = vand.u32 %v1876, 4294901760
        %v2152 = vsub.f32 %v1876, %v2151
        %v2153 = vand.u32 %v2152, 4294901760
        %v2154 = vsub.f32 %v2152, %v2153
        %v2155 = vand.u32 %v2154, 4294901760
        %2156 = vmatpush1.msra.mxu0 %v2155
        %v2157 = vand.u32 %v1879, 4294901760
        %v2158 = vsub.f32 %v1879, %v2157
        %v2159 = vand.u32 %v2158, 4294901760
        %v2160 = vsub.f32 %v2158, %v2159
        %v2161 = vand.u32 %v2160, 4294901760
        %2162 = vmatprep.subr.mxu0 %v2161
        %v2163 = vand.u32 %v1878, 4294901760
        %v2164 = vsub.f32 %v1878, %v2163
        %v2165 = vand.u32 %v2164, 4294901760
        %v2166 = vsub.f32 %v2164, %v2165
        %v2167 = vand.u32 %v2166, 4294901760
        %2168 = vmatpush1.msra.mxu0 %v2167
        %v2169 = vand.u32 %v1881, 4294901760
        %v2170 = vsub.f32 %v1881, %v2169
        %v2171 = vand.u32 %v2170, 4294901760
        %v2172 = vsub.f32 %v2170, %v2171
        %v2173 = vand.u32 %v2172, 4294901760
        %2174 = vmatprep.subr.mxu0 %v2173
        %v2175 = vand.u32 %v1880, 4294901760
        %v2176 = vsub.f32 %v1880, %v2175
        %v2177 = vand.u32 %v2176, 4294901760
        %v2178 = vsub.f32 %v2176, %v2177
        %v2179 = vand.u32 %v2178, 4294901760
        %2180 = vmatpush1.msra.mxu0 %v2179
        %v2181 = vand.u32 %v1883, 4294901760
        %v2182 = vsub.f32 %v1883, %v2181
        %v2183 = vand.u32 %v2182, 4294901760
        %v2184 = vsub.f32 %v2182, %v2183
        %v2185 = vand.u32 %v2184, 4294901760
        %2186 = vmatprep.subr.mxu0 %v2185
        %v2187 = vand.u32 %v1882, 4294901760
        %v2188 = vsub.f32 %v1882, %v2187
        %v2189 = vand.u32 %v2188, 4294901760
        %v2190 = vsub.f32 %v2188, %v2189
        %v2191 = vand.u32 %v2190, 4294901760
        %2192 = vmatpush1.msra.mxu0 %v2191
        %v2193 = vand.u32 %v1885, 4294901760
        %v2194 = vsub.f32 %v1885, %v2193
        %v2195 = vand.u32 %v2194, 4294901760
        %v2196 = vsub.f32 %v2194, %v2195
        %v2197 = vand.u32 %v2196, 4294901760
        %2198 = vmatprep.subr.mxu0 %v2197
        %v2199 = vand.u32 %v1884, 4294901760
        %v2200 = vsub.f32 %v1884, %v2199
        %v2201 = vand.u32 %v2200, 4294901760
        %v2202 = vsub.f32 %v2200, %v2201
        %v2203 = vand.u32 %v2202, 4294901760
        %2204 = vmatpush1.msra.mxu0 %v2203
        %v2205 = vand.u32 %v1887, 4294901760
        %v2206 = vsub.f32 %v1887, %v2205
        %v2207 = vand.u32 %v2206, 4294901760
        %v2208 = vsub.f32 %v2206, %v2207
        %v2209 = vand.u32 %v2208, 4294901760
        %2210 = vmatprep.subr.mxu0 %v2209
        %v2211 = vand.u32 %v1886, 4294901760
        %v2212 = vsub.f32 %v1886, %v2211
        %v2213 = vand.u32 %v2212, 4294901760
        %v2214 = vsub.f32 %v2212, %v2213
        %v2215 = vand.u32 %v2214, 4294901760
        %2216 = vmatpush1.msra.mxu0 %v2215
        %v2217 = vand.u32 %v1889, 4294901760
        %v2218 = vsub.f32 %v1889, %v2217
        %v2219 = vand.u32 %v2218, 4294901760
        %v2220 = vsub.f32 %v2218, %v2219
        %v2221 = vand.u32 %v2220, 4294901760
        %2222 = vmatprep.subr.mxu0 %v2221
        %v2223 = vand.u32 %v1888, 4294901760
        %v2224 = vsub.f32 %v1888, %v2223
        %v2225 = vand.u32 %v2224, 4294901760
        %v2226 = vsub.f32 %v2224, %v2225
        %v2227 = vand.u32 %v2226, 4294901760
        %2228 = vmatpush1.msra.mxu0 %v2227
        %v2229 = vand.u32 %v1891, 4294901760
        %v2230 = vsub.f32 %v1891, %v2229
        %v2231 = vand.u32 %v2230, 4294901760
        %v2232 = vsub.f32 %v2230, %v2231
        %v2233 = vand.u32 %v2232, 4294901760
        %2234 = vmatprep.subr.mxu0 %v2233
        %v2235 = vand.u32 %v1890, 4294901760
        %v2236 = vsub.f32 %v1890, %v2235
        %v2237 = vand.u32 %v2236, 4294901760
        %v2238 = vsub.f32 %v2236, %v2237
        %v2239 = vand.u32 %v2238, 4294901760
        %2240 = vmatpush1.msra.mxu0 %v2239
        %v2241 = vand.u32 %v1893, 4294901760
        %v2242 = vsub.f32 %v1893, %v2241
        %v2243 = vand.u32 %v2242, 4294901760
        %v2244 = vsub.f32 %v2242, %v2243
        %v2245 = vand.u32 %v2244, 4294901760
        %2246 = vmatprep.subr.mxu0 %v2245
        %v2247 = vand.u32 %v1892, 4294901760
        %v2248 = vsub.f32 %v1892, %v2247
        %v2249 = vand.u32 %v2248, 4294901760
        %v2250 = vsub.f32 %v2248, %v2249
        %v2251 = vand.u32 %v2250, 4294901760
        %2252 = vmatpush1.msra.mxu0 %v2251
        %v2253 = vand.u32 %v1895, 4294901760
        %v2254 = vsub.f32 %v1895, %v2253
        %v2255 = vand.u32 %v2254, 4294901760
        %v2256 = vsub.f32 %v2254, %v2255
        %v2257 = vand.u32 %v2256, 4294901760
        %2258 = vmatprep.subr.mxu0 %v2257
        %v2259 = vand.u32 %v1894, 4294901760
        %v2260 = vsub.f32 %v1894, %v2259
        %v2261 = vand.u32 %v2260, 4294901760
        %v2262 = vsub.f32 %v2260, %v2261
        %v2263 = vand.u32 %v2262, 4294901760
        %2264 = vmatpush1.msra.mxu0 %v2263
        %v2265 = vand.u32 %v1897, 4294901760
        %v2266 = vsub.f32 %v1897, %v2265
        %v2267 = vand.u32 %v2266, 4294901760
        %v2268 = vsub.f32 %v2266, %v2267
        %v2269 = vand.u32 %v2268, 4294901760
        %2270 = vmatprep.subr.mxu0 %v2269
        %v2271 = vand.u32 %v1896, 4294901760
        %v2272 = vsub.f32 %v1896, %v2271
        %v2273 = vand.u32 %v2272, 4294901760
        %v2274 = vsub.f32 %v2272, %v2273
        %v2275 = vand.u32 %v2274, 4294901760
        %2276 = vmatpush1.msra.mxu0 %v2275
        %v2277 = vand.u32 %v1899, 4294901760
        %v2278 = vsub.f32 %v1899, %v2277
        %v2279 = vand.u32 %v2278, 4294901760
        %v2280 = vsub.f32 %v2278, %v2279
        %v2281 = vand.u32 %v2280, 4294901760
        %2282 = vmatprep.subr.mxu0 %v2281
        %v2283 = vand.u32 %v1898, 4294901760
        %v2284 = vsub.f32 %v1898, %v2283
        %v2285 = vand.u32 %v2284, 4294901760
        %v2286 = vsub.f32 %v2284, %v2285
        %v2287 = vand.u32 %v2286, 4294901760
        %2288 = vmatpush1.msra.mxu0 %v2287
        %v2289 = vand.u32 %v1901, 4294901760
        %v2290 = vsub.f32 %v1901, %v2289
        %v2291 = vand.u32 %v2290, 4294901760
        %v2292 = vsub.f32 %v2290, %v2291
        %v2293 = vand.u32 %v2292, 4294901760
        %2294 = vmatprep.subr.mxu0 %v2293
        %v2295 = vand.u32 %v1900, 4294901760
        %v2296 = vsub.f32 %v1900, %v2295
        %v2297 = vand.u32 %v2296, 4294901760
        %v2298 = vsub.f32 %v2296, %v2297
        %v2299 = vand.u32 %v2298, 4294901760
        %2300 = vmatpush1.msra.mxu0 %v2299
        %v2301 = vand.u32 %v1903, 4294901760
        %v2302 = vsub.f32 %v1903, %v2301
        %v2303 = vand.u32 %v2302, 4294901760
        %v2304 = vsub.f32 %v2302, %v2303
        %v2305 = vand.u32 %v2304, 4294901760
        %2306 = vmatprep.subr.mxu0 %v2305
        %v2307 = vand.u32 %v1902, 4294901760
        %v2308 = vsub.f32 %v1902, %v2307
        %v2309 = vand.u32 %v2308, 4294901760
        %v2310 = vsub.f32 %v2308, %v2309
        %v2311 = vand.u32 %v2310, 4294901760
        %2312 = vmatpush1.msra.mxu0 %v2311
        %v2313 = vand.u32 %v1905, 4294901760
        %v2314 = vsub.f32 %v1905, %v2313
        %v2315 = vand.u32 %v2314, 4294901760
        %v2316 = vsub.f32 %v2314, %v2315
        %v2317 = vand.u32 %v2316, 4294901760
        %2318 = vmatprep.subr.mxu0 %v2317
        %v2319 = vand.u32 %v1904, 4294901760
        %v2320 = vsub.f32 %v1904, %v2319
        %v2321 = vand.u32 %v2320, 4294901760
        %v2322 = vsub.f32 %v2320, %v2321
        %v2323 = vand.u32 %v2322, 4294901760
        %2324 = vmatpush1.msra.mxu0 %v2323
        %v2325 = vand.u32 %v1907, 4294901760
        %v2326 = vsub.f32 %v1907, %v2325
        %v2327 = vand.u32 %v2326, 4294901760
        %v2328 = vsub.f32 %v2326, %v2327
        %v2329 = vand.u32 %v2328, 4294901760
        %2330 = vmatprep.subr.mxu0 %v2329
        %v2331 = vand.u32 %v1906, 4294901760
        %v2332 = vsub.f32 %v1906, %v2331
        %v2333 = vand.u32 %v2332, 4294901760
        %v2334 = vsub.f32 %v2332, %v2333
        %v2335 = vand.u32 %v2334, 4294901760
        %2336 = vmatpush1.msra.mxu0 %v2335
        %v2337 = vand.u32 %v1909, 4294901760
        %v2338 = vsub.f32 %v1909, %v2337
        %v2339 = vand.u32 %v2338, 4294901760
        %v2340 = vsub.f32 %v2338, %v2339
        %v2341 = vand.u32 %v2340, 4294901760
        %2342 = vmatprep.subr.mxu0 %v2341
        %v2343 = vand.u32 %v1908, 4294901760
        %v2344 = vsub.f32 %v1908, %v2343
        %v2345 = vand.u32 %v2344, 4294901760
        %v2346 = vsub.f32 %v2344, %v2345
        %v2347 = vand.u32 %v2346, 4294901760
        %2348 = vmatpush1.msra.mxu0 %v2347
        %v2349 = vand.u32 %v1911, 4294901760
        %v2350 = vsub.f32 %v1911, %v2349
        %v2351 = vand.u32 %v2350, 4294901760
        %v2352 = vsub.f32 %v2350, %v2351
        %v2353 = vand.u32 %v2352, 4294901760
        %2354 = vmatprep.subr.mxu0 %v2353
        %v2355 = vand.u32 %v1910, 4294901760
        %v2356 = vsub.f32 %v1910, %v2355
        %v2357 = vand.u32 %v2356, 4294901760
        %v2358 = vsub.f32 %v2356, %v2357
        %v2359 = vand.u32 %v2358, 4294901760
        %2360 = vmatpush1.msra.mxu0 %v2359
        %v2361 = vand.u32 %v1913, 4294901760
        %v2362 = vsub.f32 %v1913, %v2361
        %v2363 = vand.u32 %v2362, 4294901760
        %v2364 = vsub.f32 %v2362, %v2363
        %v2365 = vand.u32 %v2364, 4294901760
        %2366 = vmatprep.subr.mxu0 %v2365
        %v2367 = vand.u32 %v1912, 4294901760
        %v2368 = vsub.f32 %v1912, %v2367
        %v2369 = vand.u32 %v2368, 4294901760
        %v2370 = vsub.f32 %v2368, %v2369
        %v2371 = vand.u32 %v2370, 4294901760
        %2372 = vmatpush1.msra.mxu0 %v2371
        %v2373 = vand.u32 %v1915, 4294901760
        %v2374 = vsub.f32 %v1915, %v2373
        %v2375 = vand.u32 %v2374, 4294901760
        %v2376 = vsub.f32 %v2374, %v2375
        %v2377 = vand.u32 %v2376, 4294901760
        %2378 = vmatprep.subr.mxu0 %v2377
        %v2379 = vand.u32 %v1914, 4294901760
        %v2380 = vsub.f32 %v1914, %v2379
        %v2381 = vand.u32 %v2380, 4294901760
        %v2382 = vsub.f32 %v2380, %v2381
        %v2383 = vand.u32 %v2382, 4294901760
        %2384 = vmatpush1.msra.mxu0 %v2383
        %v2385 = vand.u32 %v1917, 4294901760
        %v2386 = vsub.f32 %v1917, %v2385
        %v2387 = vand.u32 %v2386, 4294901760
        %v2388 = vsub.f32 %v2386, %v2387
        %v2389 = vand.u32 %v2388, 4294901760
        %2390 = vmatprep.subr.mxu0 %v2389
        %v2391 = vand.u32 %v1916, 4294901760
        %v2392 = vsub.f32 %v1916, %v2391
        %v2393 = vand.u32 %v2392, 4294901760
        %v2394 = vsub.f32 %v2392, %v2393
        %v2395 = vand.u32 %v2394, 4294901760
        %2396 = vmatpush1.msra.mxu0 %v2395
        %v2397 = vand.u32 %v1919, 4294901760
        %v2398 = vsub.f32 %v1919, %v2397
        %v2399 = vand.u32 %v2398, 4294901760
        %v2400 = vsub.f32 %v2398, %v2399
        %v2401 = vand.u32 %v2400, 4294901760
        %2402 = vmatprep.subr.mxu0 %v2401
        %v2403 = vand.u32 %v1918, 4294901760
        %v2404 = vsub.f32 %v1918, %v2403
        %v2405 = vand.u32 %v2404, 4294901760
        %v2406 = vsub.f32 %v2404, %v2405
        %v2407 = vand.u32 %v2406, 4294901760
        %2408 = vmatpush1.msra.mxu0 %v2407
        %v2409 = vand.u32 %v1921, 4294901760
        %v2410 = vsub.f32 %v1921, %v2409
        %v2411 = vand.u32 %v2410, 4294901760
        %v2412 = vsub.f32 %v2410, %v2411
        %v2413 = vand.u32 %v2412, 4294901760
        %2414 = vmatprep.subr.mxu0 %v2413
        %v2415 = vand.u32 %v1920, 4294901760
        %v2416 = vsub.f32 %v1920, %v2415
        %v2417 = vand.u32 %v2416, 4294901760
        %v2418 = vsub.f32 %v2416, %v2417
        %v2419 = vand.u32 %v2418, 4294901760
        %2420 = vmatpush1.msra.mxu0 %v2419
        %v2421 = vand.u32 %v1923, 4294901760
        %v2422 = vsub.f32 %v1923, %v2421
        %v2423 = vand.u32 %v2422, 4294901760
        %v2424 = vsub.f32 %v2422, %v2423
        %v2425 = vand.u32 %v2424, 4294901760
        %2426 = vmatprep.subr.mxu0 %v2425
        %v2427 = vand.u32 %v1922, 4294901760
        %v2428 = vsub.f32 %v1922, %v2427
        %v2429 = vand.u32 %v2428, 4294901760
        %v2430 = vsub.f32 %v2428, %v2429
        %v2431 = vand.u32 %v2430, 4294901760
        %2432 = vmatpush1.msra.mxu0 %v2431
        %v2433 = vand.u32 %v1925, 4294901760
        %v2434 = vsub.f32 %v1925, %v2433
        %v2435 = vand.u32 %v2434, 4294901760
        %v2436 = vsub.f32 %v2434, %v2435
        %v2437 = vand.u32 %v2436, 4294901760
        %2438 = vmatprep.subr.mxu0 %v2437
        %v2439 = vand.u32 %v1924, 4294901760
        %v2440 = vsub.f32 %v1924, %v2439
        %v2441 = vand.u32 %v2440, 4294901760
        %v2442 = vsub.f32 %v2440, %v2441
        %v2443 = vand.u32 %v2442, 4294901760
        %2444 = vmatpush1.msra.mxu0 %v2443
        %v2445 = vand.u32 %v1927, 4294901760
        %v2446 = vsub.f32 %v1927, %v2445
        %v2447 = vand.u32 %v2446, 4294901760
        %v2448 = vsub.f32 %v2446, %v2447
        %v2449 = vand.u32 %v2448, 4294901760
        %2450 = vmatprep.subr.mxu0 %v2449
        %v2451 = vand.u32 %v1926, 4294901760
        %v2452 = vsub.f32 %v1926, %v2451
        %v2453 = vand.u32 %v2452, 4294901760
        %v2454 = vsub.f32 %v2452, %v2453
        %v2455 = vand.u32 %v2454, 4294901760
        %2456 = vmatpush1.msra.mxu0 %v2455
        %v2457 = vand.u32 %v1863, 4294901760
        %2458 = vmatprep.mubr.f32.mxu0 %v2457
        %v2459 = vand.u32 %v1862, 4294901760
        %2460 = vmatmul.mubr.f32.gmra.mrb[0].mxu0 %v2459
        %v2461 = vpop.f32.mrb[0].mxu0
        %v2462 = vadd.f32 %v2069, %v2461
        %v2463 = vpop.f32.mrb[0].mxu0
        %v2464 = vadd.f32 %v2071, %v2463
        %2465 = vdwg.mxu0
        %v2466 = vand.u32 %v1865, 4294901760
        %v2467 = vsub.f32 %v1865, %v2466
        %2468 = vmatprep.subr.mxu0 %v2467
        %v2469 = vand.u32 %v1864, 4294901760
        %v2470 = vsub.f32 %v1864, %v2469
        %2471 = vmatpush1.msra.mxu0 %v2470
        %v2472 = vand.u32 %v1867, 4294901760
        %v2473 = vsub.f32 %v1867, %v2472
        %2474 = vmatprep.subr.mxu0 %v2473
        %v2475 = vand.u32 %v1866, 4294901760
        %v2476 = vsub.f32 %v1866, %v2475
        %2477 = vmatpush1.msra.mxu0 %v2476
        %v2478 = vand.u32 %v1869, 4294901760
        %v2479 = vsub.f32 %v1869, %v2478
        %2480 = vmatprep.subr.mxu0 %v2479
        %v2481 = vand.u32 %v1868, 4294901760
        %v2482 = vsub.f32 %v1868, %v2481
        %2483 = vmatpush1.msra.mxu0 %v2482
        %v2484 = vand.u32 %v1871, 4294901760
        %v2485 = vsub.f32 %v1871, %v2484
        %2486 = vmatprep.subr.mxu0 %v2485
        %v2487 = vand.u32 %v1870, 4294901760
        %v2488 = vsub.f32 %v1870, %v2487
        %2489 = vmatpush1.msra.mxu0 %v2488
        %v2490 = vand.u32 %v1873, 4294901760
        %v2491 = vsub.f32 %v1873, %v2490
        %2492 = vmatprep.subr.mxu0 %v2491
        %v2493 = vand.u32 %v1872, 4294901760
        %v2494 = vsub.f32 %v1872, %v2493
        %2495 = vmatpush1.msra.mxu0 %v2494
        %v2496 = vand.u32 %v1875, 4294901760
        %v2497 = vsub.f32 %v1875, %v2496
        %2498 = vmatprep.subr.mxu0 %v2497
        %v2499 = vand.u32 %v1874, 4294901760
        %v2500 = vsub.f32 %v1874, %v2499
        %2501 = vmatpush1.msra.mxu0 %v2500
        %v2502 = vand.u32 %v1877, 4294901760
        %v2503 = vsub.f32 %v1877, %v2502
        %2504 = vmatprep.subr.mxu0 %v2503
        %v2505 = vand.u32 %v1876, 4294901760
        %v2506 = vsub.f32 %v1876, %v2505
        %2507 = vmatpush1.msra.mxu0 %v2506
        %v2508 = vand.u32 %v1879, 4294901760
        %v2509 = vsub.f32 %v1879, %v2508
        %2510 = vmatprep.subr.mxu0 %v2509
        %v2511 = vand.u32 %v1878, 4294901760
        %v2512 = vsub.f32 %v1878, %v2511
        %2513 = vmatpush1.msra.mxu0 %v2512
        %v2514 = vand.u32 %v1881, 4294901760
        %v2515 = vsub.f32 %v1881, %v2514
        %2516 = vmatprep.subr.mxu0 %v2515
        %v2517 = vand.u32 %v1880, 4294901760
        %v2518 = vsub.f32 %v1880, %v2517
        %2519 = vmatpush1.msra.mxu0 %v2518
        %v2520 = vand.u32 %v1883, 4294901760
        %v2521 = vsub.f32 %v1883, %v2520
        %2522 = vmatprep.subr.mxu0 %v2521
        %v2523 = vand.u32 %v1882, 4294901760
        %v2524 = vsub.f32 %v1882, %v2523
        %2525 = vmatpush1.msra.mxu0 %v2524
        %v2526 = vand.u32 %v1885, 4294901760
        %v2527 = vsub.f32 %v1885, %v2526
        %2528 = vmatprep.subr.mxu0 %v2527
        %v2529 = vand.u32 %v1884, 4294901760
        %v2530 = vsub.f32 %v1884, %v2529
        %2531 = vmatpush1.msra.mxu0 %v2530
        %v2532 = vand.u32 %v1887, 4294901760
        %v2533 = vsub.f32 %v1887, %v2532
        %2534 = vmatprep.subr.mxu0 %v2533
        %v2535 = vand.u32 %v1886, 4294901760
        %v2536 = vsub.f32 %v1886, %v2535
        %2537 = vmatpush1.msra.mxu0 %v2536
        %v2538 = vand.u32 %v1889, 4294901760
        %v2539 = vsub.f32 %v1889, %v2538
        %2540 = vmatprep.subr.mxu0 %v2539
        %v2541 = vand.u32 %v1888, 4294901760
        %v2542 = vsub.f32 %v1888, %v2541
        %2543 = vmatpush1.msra.mxu0 %v2542
        %v2544 = vand.u32 %v1891, 4294901760
        %v2545 = vsub.f32 %v1891, %v2544
        %2546 = vmatprep.subr.mxu0 %v2545
        %v2547 = vand.u32 %v1890, 4294901760
        %v2548 = vsub.f32 %v1890, %v2547
        %2549 = vmatpush1.msra.mxu0 %v2548
        %v2550 = vand.u32 %v1893, 4294901760
        %v2551 = vsub.f32 %v1893, %v2550
        %2552 = vmatprep.subr.mxu0 %v2551
        %v2553 = vand.u32 %v1892, 4294901760
        %v2554 = vsub.f32 %v1892, %v2553
        %2555 = vmatpush1.msra.mxu0 %v2554
        %v2556 = vand.u32 %v1895, 4294901760
        %v2557 = vsub.f32 %v1895, %v2556
        %2558 = vmatprep.subr.mxu0 %v2557
        %v2559 = vand.u32 %v1894, 4294901760
        %v2560 = vsub.f32 %v1894, %v2559
        %2561 = vmatpush1.msra.mxu0 %v2560
        %v2562 = vand.u32 %v1897, 4294901760
        %v2563 = vsub.f32 %v1897, %v2562
        %2564 = vmatprep.subr.mxu0 %v2563
        %v2565 = vand.u32 %v1896, 4294901760
        %v2566 = vsub.f32 %v1896, %v2565
        %2567 = vmatpush1.msra.mxu0 %v2566
        %v2568 = vand.u32 %v1899, 4294901760
        %v2569 = vsub.f32 %v1899, %v2568
        %2570 = vmatprep.subr.mxu0 %v2569
        %v2571 = vand.u32 %v1898, 4294901760
        %v2572 = vsub.f32 %v1898, %v2571
        %2573 = vmatpush1.msra.mxu0 %v2572
        %v2574 = vand.u32 %v1901, 4294901760
        %v2575 = vsub.f32 %v1901, %v2574
        %2576 = vmatprep.subr.mxu0 %v2575
        %v2577 = vand.u32 %v1900, 4294901760
        %v2578 = vsub.f32 %v1900, %v2577
        %2579 = vmatpush1.msra.mxu0 %v2578
        %v2580 = vand.u32 %v1903, 4294901760
        %v2581 = vsub.f32 %v1903, %v2580
        %2582 = vmatprep.subr.mxu0 %v2581
        %v2583 = vand.u32 %v1902, 4294901760
        %v2584 = vsub.f32 %v1902, %v2583
        %2585 = vmatpush1.msra.mxu0 %v2584
        %v2586 = vand.u32 %v1905, 4294901760
        %v2587 = vsub.f32 %v1905, %v2586
        %2588 = vmatprep.subr.mxu0 %v2587
        %v2589 = vand.u32 %v1904, 4294901760
        %v2590 = vsub.f32 %v1904, %v2589
        %2591 = vmatpush1.msra.mxu0 %v2590
        %v2592 = vand.u32 %v1907, 4294901760
        %v2593 = vsub.f32 %v1907, %v2592
        %2594 = vmatprep.subr.mxu0 %v2593
        %v2595 = vand.u32 %v1906, 4294901760
        %v2596 = vsub.f32 %v1906, %v2595
        %2597 = vmatpush1.msra.mxu0 %v2596
        %v2598 = vand.u32 %v1909, 4294901760
        %v2599 = vsub.f32 %v1909, %v2598
        %2600 = vmatprep.subr.mxu0 %v2599
        %v2601 = vand.u32 %v1908, 4294901760
        %v2602 = vsub.f32 %v1908, %v2601
        %2603 = vmatpush1.msra.mxu0 %v2602
        %v2604 = vand.u32 %v1911, 4294901760
        %v2605 = vsub.f32 %v1911, %v2604
        %2606 = vmatprep.subr.mxu0 %v2605
        %v2607 = vand.u32 %v1910, 4294901760
        %v2608 = vsub.f32 %v1910, %v2607
        %2609 = vmatpush1.msra.mxu0 %v2608
        %v2610 = vand.u32 %v1913, 4294901760
        %v2611 = vsub.f32 %v1913, %v2610
        %2612 = vmatprep.subr.mxu0 %v2611
        %v2613 = vand.u32 %v1912, 4294901760
        %v2614 = vsub.f32 %v1912, %v2613
        %2615 = vmatpush1.msra.mxu0 %v2614
        %v2616 = vand.u32 %v1915, 4294901760
        %v2617 = vsub.f32 %v1915, %v2616
        %2618 = vmatprep.subr.mxu0 %v2617
        %v2619 = vand.u32 %v1914, 4294901760
        %v2620 = vsub.f32 %v1914, %v2619
        %2621 = vmatpush1.msra.mxu0 %v2620
        %v2622 = vand.u32 %v1917, 4294901760
        %v2623 = vsub.f32 %v1917, %v2622
        %2624 = vmatprep.subr.mxu0 %v2623
        %v2625 = vand.u32 %v1916, 4294901760
        %v2626 = vsub.f32 %v1916, %v2625
        %2627 = vmatpush1.msra.mxu0 %v2626
        %v2628 = vand.u32 %v1919, 4294901760
        %v2629 = vsub.f32 %v1919, %v2628
        %2630 = vmatprep.subr.mxu0 %v2629
        %v2631 = vand.u32 %v1918, 4294901760
        %v2632 = vsub.f32 %v1918, %v2631
        %2633 = vmatpush1.msra.mxu0 %v2632
        %v2634 = vand.u32 %v1921, 4294901760
        %v2635 = vsub.f32 %v1921, %v2634
        %2636 = vmatprep.subr.mxu0 %v2635
        %v2637 = vand.u32 %v1920, 4294901760
        %v2638 = vsub.f32 %v1920, %v2637
        %2639 = vmatpush1.msra.mxu0 %v2638
        %v2640 = vand.u32 %v1923, 4294901760
        %v2641 = vsub.f32 %v1923, %v2640
        %2642 = vmatprep.subr.mxu0 %v2641
        %v2643 = vand.u32 %v1922, 4294901760
        %v2644 = vsub.f32 %v1922, %v2643
        %2645 = vmatpush1.msra.mxu0 %v2644
        %v2646 = vand.u32 %v1925, 4294901760
        %v2647 = vsub.f32 %v1925, %v2646
        %2648 = vmatprep.subr.mxu0 %v2647
        %v2649 = vand.u32 %v1924, 4294901760
        %v2650 = vsub.f32 %v1924, %v2649
        %2651 = vmatpush1.msra.mxu0 %v2650
        %v2652 = vand.u32 %v1927, 4294901760
        %v2653 = vsub.f32 %v1927, %v2652
        %2654 = vmatprep.subr.mxu0 %v2653
        %v2655 = vand.u32 %v1926, 4294901760
        %v2656 = vsub.f32 %v1926, %v2655
        %2657 = vmatpush1.msra.mxu0 %v2656
        %v2658 = vand.u32 %v1863, 4294901760
        %v2659 = vsub.f32 %v1863, %v2658
        %2660 = vmatprep.mubr.f32.mxu0 %v2659
        %v2661 = vand.u32 %v1862, 4294901760
        %v2662 = vsub.f32 %v1862, %v2661
        %2663 = vmatmul.mubr.f32.gmra.mrb[0].mxu0 %v2662
        %v2664 = vpop.f32.mrb[0].mxu0
        %v2665 = vadd.f32 %v2462, %v2664
        %v2666 = vpop.f32.mrb[0].mxu0
        %v2667 = vadd.f32 %v2464, %v2666
        %2668 = vdwg.mxu0
        %v2669 = vand.u32 %v1865, 4294901760
        %2670 = vmatprep.subr.mxu0 %v2669
        %v2671 = vand.u32 %v1864, 4294901760
        %2672 = vmatpush1.msra.mxu0 %v2671
        %v2673 = vand.u32 %v1867, 4294901760
        %2674 = vmatprep.subr.mxu0 %v2673
        %v2675 = vand.u32 %v1866, 4294901760
        %2676 = vmatpush1.msra.mxu0 %v2675
        %v2677 = vand.u32 %v1869, 4294901760
        %2678 = vmatprep.subr.mxu0 %v2677
        %v2679 = vand.u32 %v1868, 4294901760
        %2680 = vmatpush1.msra.mxu0 %v2679
        %v2681 = vand.u32 %v1871, 4294901760
        %2682 = vmatprep.subr.mxu0 %v2681
        %v2683 = vand.u32 %v1870, 4294901760
        %2684 = vmatpush1.msra.mxu0 %v2683
        %v2685 = vand.u32 %v1873, 4294901760
        %2686 = vmatprep.subr.mxu0 %v2685
        %v2687 = vand.u32 %v1872, 4294901760
        %2688 = vmatpush1.msra.mxu0 %v2687
        %v2689 = vand.u32 %v1875, 4294901760
        %2690 = vmatprep.subr.mxu0 %v2689
        %v2691 = vand.u32 %v1874, 4294901760
        %2692 = vmatpush1.msra.mxu0 %v2691
        %v2693 = vand.u32 %v1877, 4294901760
        %2694 = vmatprep.subr.mxu0 %v2693
        %v2695 = vand.u32 %v1876, 4294901760
        %2696 = vmatpush1.msra.mxu0 %v2695
        %v2697 = vand.u32 %v1879, 4294901760
        %2698 = vmatprep.subr.mxu0 %v2697
        %v2699 = vand.u32 %v1878, 4294901760
        %2700 = vmatpush1.msra.mxu0 %v2699
        %v2701 = vand.u32 %v1881, 4294901760
        %2702 = vmatprep.subr.mxu0 %v2701
        %v2703 = vand.u32 %v1880, 4294901760
        %2704 = vmatpush1.msra.mxu0 %v2703
        %v2705 = vand.u32 %v1883, 4294901760
        %2706 = vmatprep.subr.mxu0 %v2705
        %v2707 = vand.u32 %v1882, 4294901760
        %2708 = vmatpush1.msra.mxu0 %v2707
        %v2709 = vand.u32 %v1885, 4294901760
        %2710 = vmatprep.subr.mxu0 %v2709
        %v2711 = vand.u32 %v1884, 4294901760
        %2712 = vmatpush1.msra.mxu0 %v2711
        %v2713 = vand.u32 %v1887, 4294901760
        %2714 = vmatprep.subr.mxu0 %v2713
        %v2715 = vand.u32 %v1886, 4294901760
        %2716 = vmatpush1.msra.mxu0 %v2715
        %v2717 = vand.u32 %v1889, 4294901760
        %2718 = vmatprep.subr.mxu0 %v2717
        %v2719 = vand.u32 %v1888, 4294901760
        %2720 = vmatpush1.msra.mxu0 %v2719
        %v2721 = vand.u32 %v1891, 4294901760
        %2722 = vmatprep.subr.mxu0 %v2721
        %v2723 = vand.u32 %v1890, 4294901760
        %2724 = vmatpush1.msra.mxu0 %v2723
        %v2725 = vand.u32 %v1893, 4294901760
        %2726 = vmatprep.subr.mxu0 %v2725
        %v2727 = vand.u32 %v1892, 4294901760
        %2728 = vmatpush1.msra.mxu0 %v2727
        %v2729 = vand.u32 %v1895, 4294901760
        %2730 = vmatprep.subr.mxu0 %v2729
        %v2731 = vand.u32 %v1894, 4294901760
        %2732 = vmatpush1.msra.mxu0 %v2731
        %v2733 = vand.u32 %v1897, 4294901760
        %2734 = vmatprep.subr.mxu0 %v2733
        %v2735 = vand.u32 %v1896, 4294901760
        %2736 = vmatpush1.msra.mxu0 %v2735
        %v2737 = vand.u32 %v1899, 4294901760
        %2738 = vmatprep.subr.mxu0 %v2737
        %v2739 = vand.u32 %v1898, 4294901760
        %2740 = vmatpush1.msra.mxu0 %v2739
        %v2741 = vand.u32 %v1901, 4294901760
        %2742 = vmatprep.subr.mxu0 %v2741
        %v2743 = vand.u32 %v1900, 4294901760
        %2744 = vmatpush1.msra.mxu0 %v2743
        %v2745 = vand.u32 %v1903, 4294901760
        %2746 = vmatprep.subr.mxu0 %v2745
        %v2747 = vand.u32 %v1902, 4294901760
        %2748 = vmatpush1.msra.mxu0 %v2747
        %v2749 = vand.u32 %v1905, 4294901760
        %2750 = vmatprep.subr.mxu0 %v2749
        %v2751 = vand.u32 %v1904, 4294901760
        %2752 = vmatpush1.msra.mxu0 %v2751
        %v2753 = vand.u32 %v1907, 4294901760
        %2754 = vmatprep.subr.mxu0 %v2753
        %v2755 = vand.u32 %v1906, 4294901760
        %2756 = vmatpush1.msra.mxu0 %v2755
        %v2757 = vand.u32 %v1909, 4294901760
        %2758 = vmatprep.subr.mxu0 %v2757
        %v2759 = vand.u32 %v1908, 4294901760
        %2760 = vmatpush1.msra.mxu0 %v2759
        %v2761 = vand.u32 %v1911, 4294901760
        %2762 = vmatprep.subr.mxu0 %v2761
        %v2763 = vand.u32 %v1910, 4294901760
        %2764 = vmatpush1.msra.mxu0 %v2763
        %v2765 = vand.u32 %v1913, 4294901760
        %2766 = vmatprep.subr.mxu0 %v2765
        %v2767 = vand.u32 %v1912, 4294901760
        %2768 = vmatpush1.msra.mxu0 %v2767
        %v2769 = vand.u32 %v1915, 4294901760
        %2770 = vmatprep.subr.mxu0 %v2769
        %v2771 = vand.u32 %v1914, 4294901760
        %2772 = vmatpush1.msra.mxu0 %v2771
        %v2773 = vand.u32 %v1917, 4294901760
        %2774 = vmatprep.subr.mxu0 %v2773
        %v2775 = vand.u32 %v1916, 4294901760
        %2776 = vmatpush1.msra.mxu0 %v2775
        %v2777 = vand.u32 %v1919, 4294901760
        %2778 = vmatprep.subr.mxu0 %v2777
        %v2779 = vand.u32 %v1918, 4294901760
        %2780 = vmatpush1.msra.mxu0 %v2779
        %v2781 = vand.u32 %v1921, 4294901760
        %2782 = vmatprep.subr.mxu0 %v2781
        %v2783 = vand.u32 %v1920, 4294901760
        %2784 = vmatpush1.msra.mxu0 %v2783
        %v2785 = vand.u32 %v1923, 4294901760
        %2786 = vmatprep.subr.mxu0 %v2785
        %v2787 = vand.u32 %v1922, 4294901760
        %2788 = vmatpush1.msra.mxu0 %v2787
        %v2789 = vand.u32 %v1925, 4294901760
        %2790 = vmatprep.subr.mxu0 %v2789
        %v2791 = vand.u32 %v1924, 4294901760
        %2792 = vmatpush1.msra.mxu0 %v2791
        %v2793 = vand.u32 %v1927, 4294901760
        %2794 = vmatprep.subr.mxu0 %v2793
        %v2795 = vand.u32 %v1926, 4294901760
        %2796 = vmatpush1.msra.mxu0 %v2795
        %v2797 = vand.u32 %v1863, 4294901760
        %v2798 = vsub.f32 %v1863, %v2797
        %v2799 = vand.u32 %v2798, 4294901760
        %2800 = vmatprep.mubr.f32.mxu0 %v2799
        %v2801 = vand.u32 %v1862, 4294901760
        %v2802 = vsub.f32 %v1862, %v2801
        %v2803 = vand.u32 %v2802, 4294901760
        %2804 = vmatmul.mubr.f32.gmra.mrb[0].mxu0 %v2803
        %v2805 = vpop.f32.mrb[0].mxu0
        %v2806 = vadd.f32 %v2665, %v2805
        %v2807 = vpop.f32.mrb[0].mxu0
        %v2808 = vadd.f32 %v2667, %v2807
        %2809 = vdwg.mxu0
        %v2810 = vand.u32 %v1865, 4294901760
        %v2811 = vsub.f32 %v1865, %v2810
        %v2812 = vand.u32 %v2811, 4294901760
        %2813 = vmatprep.subr.mxu0 %v2812
        %v2814 = vand.u32 %v1864, 4294901760
        %v2815 = vsub.f32 %v1864, %v2814
        %v2816 = vand.u32 %v2815, 4294901760
        %2817 = vmatpush1.msra.mxu0 %v2816
        %v2818 = vand.u32 %v1867, 4294901760
        %v2819 = vsub.f32 %v1867, %v2818
        %v2820 = vand.u32 %v2819, 4294901760
        %2821 = vmatprep.subr.mxu0 %v2820
        %v2822 = vand.u32 %v1866, 4294901760
        %v2823 = vsub.f32 %v1866, %v2822
        %v2824 = vand.u32 %v2823, 4294901760
        %2825 = vmatpush1.msra.mxu0 %v2824
        %v2826 = vand.u32 %v1869, 4294901760
        %v2827 = vsub.f32 %v1869, %v2826
        %v2828 = vand.u32 %v2827, 4294901760
        %2829 = vmatprep.subr.mxu0 %v2828
        %v2830 = vand.u32 %v1868, 4294901760
        %v2831 = vsub.f32 %v1868, %v2830
        %v2832 = vand.u32 %v2831, 4294901760
        %2833 = vmatpush1.msra.mxu0 %v2832
        %v2834 = vand.u32 %v1871, 4294901760
        %v2835 = vsub.f32 %v1871, %v2834
        %v2836 = vand.u32 %v2835, 4294901760
        %2837 = vmatprep.subr.mxu0 %v2836
        %v2838 = vand.u32 %v1870, 4294901760
        %v2839 = vsub.f32 %v1870, %v2838
        %v2840 = vand.u32 %v2839, 4294901760
        %2841 = vmatpush1.msra.mxu0 %v2840
        %v2842 = vand.u32 %v1873, 4294901760
        %v2843 = vsub.f32 %v1873, %v2842
        %v2844 = vand.u32 %v2843, 4294901760
        %2845 = vmatprep.subr.mxu0 %v2844
        %v2846 = vand.u32 %v1872, 4294901760
        %v2847 = vsub.f32 %v1872, %v2846
        %v2848 = vand.u32 %v2847, 4294901760
        %2849 = vmatpush1.msra.mxu0 %v2848
        %v2850 = vand.u32 %v1875, 4294901760
        %v2851 = vsub.f32 %v1875, %v2850
        %v2852 = vand.u32 %v2851, 4294901760
        %2853 = vmatprep.subr.mxu0 %v2852
        %v2854 = vand.u32 %v1874, 4294901760
        %v2855 = vsub.f32 %v1874, %v2854
        %v2856 = vand.u32 %v2855, 4294901760
        %2857 = vmatpush1.msra.mxu0 %v2856
        %v2858 = vand.u32 %v1877, 4294901760
        %v2859 = vsub.f32 %v1877, %v2858
        %v2860 = vand.u32 %v2859, 4294901760
        %2861 = vmatprep.subr.mxu0 %v2860
        %v2862 = vand.u32 %v1876, 4294901760
        %v2863 = vsub.f32 %v1876, %v2862
        %v2864 = vand.u32 %v2863, 4294901760
        %2865 = vmatpush1.msra.mxu0 %v2864
        %v2866 = vand.u32 %v1879, 4294901760
        %v2867 = vsub.f32 %v1879, %v2866
        %v2868 = vand.u32 %v2867, 4294901760
        %2869 = vmatprep.subr.mxu0 %v2868
        %v2870 = vand.u32 %v1878, 4294901760
        %v2871 = vsub.f32 %v1878, %v2870
        %v2872 = vand.u32 %v2871, 4294901760
        %2873 = vmatpush1.msra.mxu0 %v2872
        %v2874 = vand.u32 %v1881, 4294901760
        %v2875 = vsub.f32 %v1881, %v2874
        %v2876 = vand.u32 %v2875, 4294901760
        %2877 = vmatprep.subr.mxu0 %v2876
        %v2878 = vand.u32 %v1880, 4294901760
        %v2879 = vsub.f32 %v1880, %v2878
        %v2880 = vand.u32 %v2879, 4294901760
        %2881 = vmatpush1.msra.mxu0 %v2880
        %v2882 = vand.u32 %v1883, 4294901760
        %v2883 = vsub.f32 %v1883, %v2882
        %v2884 = vand.u32 %v2883, 4294901760
        %2885 = vmatprep.subr.mxu0 %v2884
        %v2886 = vand.u32 %v1882, 4294901760
        %v2887 = vsub.f32 %v1882, %v2886
        %v2888 = vand.u32 %v2887, 4294901760
        %2889 = vmatpush1.msra.mxu0 %v2888
        %v2890 = vand.u32 %v1885, 4294901760
        %v2891 = vsub.f32 %v1885, %v2890
        %v2892 = vand.u32 %v2891, 4294901760
        %2893 = vmatprep.subr.mxu0 %v2892
        %v2894 = vand.u32 %v1884, 4294901760
        %v2895 = vsub.f32 %v1884, %v2894
        %v2896 = vand.u32 %v2895, 4294901760
        %2897 = vmatpush1.msra.mxu0 %v2896
        %v2898 = vand.u32 %v1887, 4294901760
        %v2899 = vsub.f32 %v1887, %v2898
        %v2900 = vand.u32 %v2899, 4294901760
        %2901 = vmatprep.subr.mxu0 %v2900
        %v2902 = vand.u32 %v1886, 4294901760
        %v2903 = vsub.f32 %v1886, %v2902
        %v2904 = vand.u32 %v2903, 4294901760
        %2905 = vmatpush1.msra.mxu0 %v2904
        %v2906 = vand.u32 %v1889, 4294901760
        %v2907 = vsub.f32 %v1889, %v2906
        %v2908 = vand.u32 %v2907, 4294901760
        %2909 = vmatprep.subr.mxu0 %v2908
        %v2910 = vand.u32 %v1888, 4294901760
        %v2911 = vsub.f32 %v1888, %v2910
        %v2912 = vand.u32 %v2911, 4294901760
        %2913 = vmatpush1.msra.mxu0 %v2912
        %v2914 = vand.u32 %v1891, 4294901760
        %v2915 = vsub.f32 %v1891, %v2914
        %v2916 = vand.u32 %v2915, 4294901760
        %2917 = vmatprep.subr.mxu0 %v2916
        %v2918 = vand.u32 %v1890, 4294901760
        %v2919 = vsub.f32 %v1890, %v2918
        %v2920 = vand.u32 %v2919, 4294901760
        %2921 = vmatpush1.msra.mxu0 %v2920
        %v2922 = vand.u32 %v1893, 4294901760
        %v2923 = vsub.f32 %v1893, %v2922
        %v2924 = vand.u32 %v2923, 4294901760
        %2925 = vmatprep.subr.mxu0 %v2924
        %v2926 = vand.u32 %v1892, 4294901760
        %v2927 = vsub.f32 %v1892, %v2926
        %v2928 = vand.u32 %v2927, 4294901760
        %2929 = vmatpush1.msra.mxu0 %v2928
        %v2930 = vand.u32 %v1895, 4294901760
        %v2931 = vsub.f32 %v1895, %v2930
        %v2932 = vand.u32 %v2931, 4294901760
        %2933 = vmatprep.subr.mxu0 %v2932
        %v2934 = vand.u32 %v1894, 4294901760
        %v2935 = vsub.f32 %v1894, %v2934
        %v2936 = vand.u32 %v2935, 4294901760
        %2937 = vmatpush1.msra.mxu0 %v2936
        %v2938 = vand.u32 %v1897, 4294901760
        %v2939 = vsub.f32 %v1897, %v2938
        %v2940 = vand.u32 %v2939, 4294901760
        %2941 = vmatprep.subr.mxu0 %v2940
        %v2942 = vand.u32 %v1896, 4294901760
        %v2943 = vsub.f32 %v1896, %v2942
        %v2944 = vand.u32 %v2943, 4294901760
        %2945 = vmatpush1.msra.mxu0 %v2944
        %v2946 = vand.u32 %v1899, 4294901760
        %v2947 = vsub.f32 %v1899, %v2946
        %v2948 = vand.u32 %v2947, 4294901760
        %2949 = vmatprep.subr.mxu0 %v2948
        %v2950 = vand.u32 %v1898, 4294901760
        %v2951 = vsub.f32 %v1898, %v2950
        %v2952 = vand.u32 %v2951, 4294901760
        %2953 = vmatpush1.msra.mxu0 %v2952
        %v2954 = vand.u32 %v1901, 4294901760
        %v2955 = vsub.f32 %v1901, %v2954
        %v2956 = vand.u32 %v2955, 4294901760
        %2957 = vmatprep.subr.mxu0 %v2956
        %v2958 = vand.u32 %v1900, 4294901760
        %v2959 = vsub.f32 %v1900, %v2958
        %v2960 = vand.u32 %v2959, 4294901760
        %2961 = vmatpush1.msra.mxu0 %v2960
        %v2962 = vand.u32 %v1903, 4294901760
        %v2963 = vsub.f32 %v1903, %v2962
        %v2964 = vand.u32 %v2963, 4294901760
        %2965 = vmatprep.subr.mxu0 %v2964
        %v2966 = vand.u32 %v1902, 4294901760
        %v2967 = vsub.f32 %v1902, %v2966
        %v2968 = vand.u32 %v2967, 4294901760
        %2969 = vmatpush1.msra.mxu0 %v2968
        %v2970 = vand.u32 %v1905, 4294901760
        %v2971 = vsub.f32 %v1905, %v2970
        %v2972 = vand.u32 %v2971, 4294901760
        %2973 = vmatprep.subr.mxu0 %v2972
        %v2974 = vand.u32 %v1904, 4294901760
        %v2975 = vsub.f32 %v1904, %v2974
        %v2976 = vand.u32 %v2975, 4294901760
        %2977 = vmatpush1.msra.mxu0 %v2976
        %v2978 = vand.u32 %v1907, 4294901760
        %v2979 = vsub.f32 %v1907, %v2978
        %v2980 = vand.u32 %v2979, 4294901760
        %2981 = vmatprep.subr.mxu0 %v2980
        %v2982 = vand.u32 %v1906, 4294901760
        %v2983 = vsub.f32 %v1906, %v2982
        %v2984 = vand.u32 %v2983, 4294901760
        %2985 = vmatpush1.msra.mxu0 %v2984
        %v2986 = vand.u32 %v1909, 4294901760
        %v2987 = vsub.f32 %v1909, %v2986
        %v2988 = vand.u32 %v2987, 4294901760
        %2989 = vmatprep.subr.mxu0 %v2988
        %v2990 = vand.u32 %v1908, 4294901760
        %v2991 = vsub.f32 %v1908, %v2990
        %v2992 = vand.u32 %v2991, 4294901760
        %2993 = vmatpush1.msra.mxu0 %v2992
        %v2994 = vand.u32 %v1911, 4294901760
        %v2995 = vsub.f32 %v1911, %v2994
        %v2996 = vand.u32 %v2995, 4294901760
        %2997 = vmatprep.subr.mxu0 %v2996
        %v2998 = vand.u32 %v1910, 4294901760
        %v2999 = vsub.f32 %v1910, %v2998
        %v3000 = vand.u32 %v2999, 4294901760
        %3001 = vmatpush1.msra.mxu0 %v3000
        %v3002 = vand.u32 %v1913, 4294901760
        %v3003 = vsub.f32 %v1913, %v3002
        %v3004 = vand.u32 %v3003, 4294901760
        %3005 = vmatprep.subr.mxu0 %v3004
        %v3006 = vand.u32 %v1912, 4294901760
        %v3007 = vsub.f32 %v1912, %v3006
        %v3008 = vand.u32 %v3007, 4294901760
        %3009 = vmatpush1.msra.mxu0 %v3008
        %v3010 = vand.u32 %v1915, 4294901760
        %v3011 = vsub.f32 %v1915, %v3010
        %v3012 = vand.u32 %v3011, 4294901760
        %3013 = vmatprep.subr.mxu0 %v3012
        %v3014 = vand.u32 %v1914, 4294901760
        %v3015 = vsub.f32 %v1914, %v3014
        %v3016 = vand.u32 %v3015, 4294901760
        %3017 = vmatpush1.msra.mxu0 %v3016
        %v3018 = vand.u32 %v1917, 4294901760
        %v3019 = vsub.f32 %v1917, %v3018
        %v3020 = vand.u32 %v3019, 4294901760
        %3021 = vmatprep.subr.mxu0 %v3020
        %v3022 = vand.u32 %v1916, 4294901760
        %v3023 = vsub.f32 %v1916, %v3022
        %v3024 = vand.u32 %v3023, 4294901760
        %3025 = vmatpush1.msra.mxu0 %v3024
        %v3026 = vand.u32 %v1919, 4294901760
        %v3027 = vsub.f32 %v1919, %v3026
        %v3028 = vand.u32 %v3027, 4294901760
        %3029 = vmatprep.subr.mxu0 %v3028
        %v3030 = vand.u32 %v1918, 4294901760
        %v3031 = vsub.f32 %v1918, %v3030
        %v3032 = vand.u32 %v3031, 4294901760
        %3033 = vmatpush1.msra.mxu0 %v3032
        %v3034 = vand.u32 %v1921, 4294901760
        %v3035 = vsub.f32 %v1921, %v3034
        %v3036 = vand.u32 %v3035, 4294901760
        %3037 = vmatprep.subr.mxu0 %v3036
        %v3038 = vand.u32 %v1920, 4294901760
        %v3039 = vsub.f32 %v1920, %v3038
        %v3040 = vand.u32 %v3039, 4294901760
        %3041 = vmatpush1.msra.mxu0 %v3040
        %v3042 = vand.u32 %v1923, 4294901760
        %v3043 = vsub.f32 %v1923, %v3042
        %v3044 = vand.u32 %v3043, 4294901760
        %3045 = vmatprep.subr.mxu0 %v3044
        %v3046 = vand.u32 %v1922, 4294901760
        %v3047 = vsub.f32 %v1922, %v3046
        %v3048 = vand.u32 %v3047, 4294901760
        %3049 = vmatpush1.msra.mxu0 %v3048
        %v3050 = vand.u32 %v1925, 4294901760
        %v3051 = vsub.f32 %v1925, %v3050
        %v3052 = vand.u32 %v3051, 4294901760
        %3053 = vmatprep.subr.mxu0 %v3052
        %v3054 = vand.u32 %v1924, 4294901760
        %v3055 = vsub.f32 %v1924, %v3054
        %v3056 = vand.u32 %v3055, 4294901760
        %3057 = vmatpush1.msra.mxu0 %v3056
        %v3058 = vand.u32 %v1927, 4294901760
        %v3059 = vsub.f32 %v1927, %v3058
        %v3060 = vand.u32 %v3059, 4294901760
        %3061 = vmatprep.subr.mxu0 %v3060
        %v3062 = vand.u32 %v1926, 4294901760
        %v3063 = vsub.f32 %v1926, %v3062
        %v3064 = vand.u32 %v3063, 4294901760
        %3065 = vmatpush1.msra.mxu0 %v3064
        %v3066 = vand.u32 %v1863, 4294901760
        %3067 = vmatprep.mubr.f32.mxu0 %v3066
        %v3068 = vand.u32 %v1862, 4294901760
        %3069 = vmatmul.mubr.f32.gmra.mrb[0].mxu0 %v3068
        %v3070 = vpop.f32.mrb[0].mxu0
        %v3071 = vadd.f32 %v2806, %v3070
        %v3072 = vpop.f32.mrb[0].mxu0
        %v3073 = vadd.f32 %v2808, %v3072
        %3074 = vdwg.mxu0
        %v3075 = vand.u32 %v1865, 4294901760
        %3076 = vmatprep.subr.mxu0 %v3075
        %v3077 = vand.u32 %v1864, 4294901760
        %3078 = vmatpush1.msra.mxu0 %v3077
        %v3079 = vand.u32 %v1867, 4294901760
        %3080 = vmatprep.subr.mxu0 %v3079
        %v3081 = vand.u32 %v1866, 4294901760
        %3082 = vmatpush1.msra.mxu0 %v3081
        %v3083 = vand.u32 %v1869, 4294901760
        %3084 = vmatprep.subr.mxu0 %v3083
        %v3085 = vand.u32 %v1868, 4294901760
        %3086 = vmatpush1.msra.mxu0 %v3085
        %v3087 = vand.u32 %v1871, 4294901760
        %3088 = vmatprep.subr.mxu0 %v3087
        %v3089 = vand.u32 %v1870, 4294901760
        %3090 = vmatpush1.msra.mxu0 %v3089
        %v3091 = vand.u32 %v1873, 4294901760
        %3092 = vmatprep.subr.mxu0 %v3091
        %v3093 = vand.u32 %v1872, 4294901760
        %3094 = vmatpush1.msra.mxu0 %v3093
        %v3095 = vand.u32 %v1875, 4294901760
        %3096 = vmatprep.subr.mxu0 %v3095
        %v3097 = vand.u32 %v1874, 4294901760
        %3098 = vmatpush1.msra.mxu0 %v3097
        %v3099 = vand.u32 %v1877, 4294901760
        %3100 = vmatprep.subr.mxu0 %v3099
        %v3101 = vand.u32 %v1876, 4294901760
        %3102 = vmatpush1.msra.mxu0 %v3101
        %v3103 = vand.u32 %v1879, 4294901760
        %3104 = vmatprep.subr.mxu0 %v3103
        %v3105 = vand.u32 %v1878, 4294901760
        %3106 = vmatpush1.msra.mxu0 %v3105
        %v3107 = vand.u32 %v1881, 4294901760
        %3108 = vmatprep.subr.mxu0 %v3107
        %v3109 = vand.u32 %v1880, 4294901760
        %3110 = vmatpush1.msra.mxu0 %v3109
        %v3111 = vand.u32 %v1883, 4294901760
        %3112 = vmatprep.subr.mxu0 %v3111
        %v3113 = vand.u32 %v1882, 4294901760
        %3114 = vmatpush1.msra.mxu0 %v3113
        %v3115 = vand.u32 %v1885, 4294901760
        %3116 = vmatprep.subr.mxu0 %v3115
        %v3117 = vand.u32 %v1884, 4294901760
        %3118 = vmatpush1.msra.mxu0 %v3117
        %v3119 = vand.u32 %v1887, 4294901760
        %3120 = vmatprep.subr.mxu0 %v3119
        %v3121 = vand.u32 %v1886, 4294901760
        %3122 = vmatpush1.msra.mxu0 %v3121
        %v3123 = vand.u32 %v1889, 4294901760
        %3124 = vmatprep.subr.mxu0 %v3123
        %v3125 = vand.u32 %v1888, 4294901760
        %3126 = vmatpush1.msra.mxu0 %v3125
        %v3127 = vand.u32 %v1891, 4294901760
        %3128 = vmatprep.subr.mxu0 %v3127
        %v3129 = vand.u32 %v1890, 4294901760
        %3130 = vmatpush1.msra.mxu0 %v3129
        %v3131 = vand.u32 %v1893, 4294901760
        %3132 = vmatprep.subr.mxu0 %v3131
        %v3133 = vand.u32 %v1892, 4294901760
        %3134 = vmatpush1.msra.mxu0 %v3133
        %v3135 = vand.u32 %v1895, 4294901760
        %3136 = vmatprep.subr.mxu0 %v3135
        %v3137 = vand.u32 %v1894, 4294901760
        %3138 = vmatpush1.msra.mxu0 %v3137
        %v3139 = vand.u32 %v1897, 4294901760
        %3140 = vmatprep.subr.mxu0 %v3139
        %v3141 = vand.u32 %v1896, 4294901760
        %3142 = vmatpush1.msra.mxu0 %v3141
        %v3143 = vand.u32 %v1899, 4294901760
        %3144 = vmatprep.subr.mxu0 %v3143
        %v3145 = vand.u32 %v1898, 4294901760
        %3146 = vmatpush1.msra.mxu0 %v3145
        %v3147 = vand.u32 %v1901, 4294901760
        %3148 = vmatprep.subr.mxu0 %v3147
        %v3149 = vand.u32 %v1900, 4294901760
        %3150 = vmatpush1.msra.mxu0 %v3149
        %v3151 = vand.u32 %v1903, 4294901760
        %3152 = vmatprep.subr.mxu0 %v3151
        %v3153 = vand.u32 %v1902, 4294901760
        %3154 = vmatpush1.msra.mxu0 %v3153
        %v3155 = vand.u32 %v1905, 4294901760
        %3156 = vmatprep.subr.mxu0 %v3155
        %v3157 = vand.u32 %v1904, 4294901760
        %3158 = vmatpush1.msra.mxu0 %v3157
        %v3159 = vand.u32 %v1907, 4294901760
        %3160 = vmatprep.subr.mxu0 %v3159
        %v3161 = vand.u32 %v1906, 4294901760
        %3162 = vmatpush1.msra.mxu0 %v3161
        %v3163 = vand.u32 %v1909, 4294901760
        %3164 = vmatprep.subr.mxu0 %v3163
        %v3165 = vand.u32 %v1908, 4294901760
        %3166 = vmatpush1.msra.mxu0 %v3165
        %v3167 = vand.u32 %v1911, 4294901760
        %3168 = vmatprep.subr.mxu0 %v3167
        %v3169 = vand.u32 %v1910, 4294901760
        %3170 = vmatpush1.msra.mxu0 %v3169
        %v3171 = vand.u32 %v1913, 4294901760
        %3172 = vmatprep.subr.mxu0 %v3171
        %v3173 = vand.u32 %v1912, 4294901760
        %3174 = vmatpush1.msra.mxu0 %v3173
        %v3175 = vand.u32 %v1915, 4294901760
        %3176 = vmatprep.subr.mxu0 %v3175
        %v3177 = vand.u32 %v1914, 4294901760
        %3178 = vmatpush1.msra.mxu0 %v3177
        %v3179 = vand.u32 %v1917, 4294901760
        %3180 = vmatprep.subr.mxu0 %v3179
        %v3181 = vand.u32 %v1916, 4294901760
        %3182 = vmatpush1.msra.mxu0 %v3181
        %v3183 = vand.u32 %v1919, 4294901760
        %3184 = vmatprep.subr.mxu0 %v3183
        %v3185 = vand.u32 %v1918, 4294901760
        %3186 = vmatpush1.msra.mxu0 %v3185
        %v3187 = vand.u32 %v1921, 4294901760
        %3188 = vmatprep.subr.mxu0 %v3187
        %v3189 = vand.u32 %v1920, 4294901760
        %3190 = vmatpush1.msra.mxu0 %v3189
        %v3191 = vand.u32 %v1923, 4294901760
        %3192 = vmatprep.subr.mxu0 %v3191
        %v3193 = vand.u32 %v1922, 4294901760
        %3194 = vmatpush1.msra.mxu0 %v3193
        %v3195 = vand.u32 %v1925, 4294901760
        %3196 = vmatprep.subr.mxu0 %v3195
        %v3197 = vand.u32 %v1924, 4294901760
        %3198 = vmatpush1.msra.mxu0 %v3197
        %v3199 = vand.u32 %v1927, 4294901760
        %3200 = vmatprep.subr.mxu0 %v3199
        %v3201 = vand.u32 %v1926, 4294901760
        %3202 = vmatpush1.msra.mxu0 %v3201
        %v3203 = vand.u32 %v1863, 4294901760
        %3204 = vmatprep.mubr.f32.mxu0 %v3203
        %v3205 = vand.u32 %v1862, 4294901760
        %3206 = vmatmul.mubr.f32.gmra.mrb[0].mxu0 %v3205
        %v3207 = vpop.f32.mrb[0].mxu0
        %v3208 = vadd.f32 %v3071, %v3207
        %v3209 = vpop.f32.mrb[0].mxu0
        %v3210 = vadd.f32 %v3073, %v3209
        %3211 = vdwg.mxu0
        %v3212 = vmul.f32 %v3208, %v3208
        %v3213 = vmul.f32 %v3210, %v3210
        %v3216 = vrot.slane %v3212, 7
        %v3217 = vrot.slane %v3213, 7
        %v3220 = vsub.f32 %v3208, %v3216
        %v3221 = vsub.f32 %v3210, %v3217
        %v3222 = vmax.f32 %v3220, 0.0
        %v3223 = vmax.f32 %v3221, 0.0
        %v3224 = vadd.f32 %v3222, 1e-05
        %v3225 = vadd.f32 %v3223, 1e-05
        %v3226 = vrsqrt.pop %v3224
        %v3227 = vrsqrt.pop %v3225
        %v3228 = vld [vmem:[%s7] sm:$0x3]
        %v3230 = vlaneseq
        %v3231 = vshrl.u32 %v3230, 7
        %v3232 = vsub.s32 0, %v3231
        %v3233 = vrot.slane %v3228, %v3232
        %v3234 = vlaneseq
        %v3235 = vshrl.u32 %v3234, 7
        %v3236 = vsub.s32 1, %v3235
        %v3237 = vrot.slane %v3228, %v3236
        %v3240 = vmul.f32 %v3226, %v3233
        %v3241 = vmul.f32 %v3227, %v3237
        %v3242 = vld [vmem:[%s8] sm:$0x3]
        %v3245 = vrot.slane %v3240, 1
        %v3246 = vrot.slane %v3241, 1
        %v3249 = vmul.f32 %v3208, %v3245
        %v3250 = vmul.f32 %v3210, %v3246
        %v3253 = vcombine.low %v3249, %v3250
        %v3255 = vunpack.c.l.s4 1966171168
        %v3256 = vunpack.c.0.s8 %v3255
        %v3257 = vlaneseq
        %v3258 = vshrl.u32 %v3257, 7
        %v3259 = vsub.s32 %v3256, %v3258
        %v3260 = vrot.slane %v3253, %v3259
        %v3262 = vunpack.c.l.s4 1966171168
        %v3263 = vunpack.c.0.s8 %v3262
        %v3264 = vlaneseq
        %v3265 = vshrl.u32 %v3264, 7
        %v3266 = vsub.s32 %v3263, %v3265
        %v3267 = vrot.slane %v3260, %v3266
        %v3269 = vsub.f32 %v3242, %v3267
        %v3270 = vlaneseq
        %v3271 = vshrl.u32 %v3270, 7
        %v3272 = vsub.s32 1, %v3271
        %v3273 = vrot.slane %v3240, %v3272
        %v3274 = vlaneseq
        %v3275 = vshrl.u32 %v3274, 7
        %v3276 = vsub.s32 1, %v3275
        %v3277 = vrot.slane %v3241, %v3276
        %v3278 = vmul.f32 %v1822, %v3273
        %v3279 = vmul.f32 %v1824, %v3277
        %v3280 = vmul.f32 %v1826, %v3273
        %v3281 = vmul.f32 %v1828, %v3277
        %v3283 = vlaneseq
        %v3284 = vshrl.u32 %v3283, 7
        %v3285 = vsub.s32 0, %v3284
        %v3286 = vrot.slane %v3269, %v3285
        %v3287 = vlaneseq
        %v3288 = vshrl.u32 %v3287, 7
        %v3289 = vsub.s32 1, %v3288
        %v3290 = vrot.slane %v3269, %v3289
        %v3293 = vadd.f32 %v3278, %v3286
        %v3294 = vadd.f32 %v3279, %v3290
        %v3295 = vadd.f32 %v3280, %v3286
        %v3296 = vadd.f32 %v3281, %v3290
        %v3297 = vxor.u32 %v3293, 2147483648
        %v3298 = vxor.u32 %v3294, 2147483648
        %v3299 = vxor.u32 %v3295, 2147483648
        %v3300 = vxor.u32 %v3296, 2147483648
        %v3301 = vmul.f32 %v3297, 1.442695
        %v3302 = vpow.pop %v3301
        %v3303 = vmul.f32 %v3298, 1.442695
        %v3304 = vpow.pop %v3303
        %v3305 = vmul.f32 %v3299, 1.442695
        %v3306 = vpow.pop %v3305
        %v3307 = vmul.f32 %v3300, 1.442695
        %v3308 = vpow.pop %v3307
        %v3309 = vadd.f32 %v3302, 1.0
        %v3310 = vadd.f32 %v3304, 1.0
        %v3311 = vadd.f32 %v3306, 1.0
        %v3312 = vadd.f32 %v3308, 1.0
        %v3313 = vrcp.pop %v3309
        %v3314 = vmul.f32 1.0, %v3313
        %v3315 = vrcp.pop %v3310
        %v3316 = vmul.f32 1.0, %v3315
        %v3317 = vrcp.pop %v3311
        %v3318 = vmul.f32 1.0, %v3317
        %v3319 = vrcp.pop %v3312
        %v3320 = vmul.f32 1.0, %v3319
        %v3321 = vmul.f32 %v3293, %v3314
        %v3322 = vmul.f32 %v3294, %v3316
        %v3323 = vmul.f32 %v3295, %v3318
        %v3324 = vmul.f32 %v3296, %v3320
        %v3325 = vpack.c.bf16 %v3323, %v3321
        %v3326 = vpack.c.bf16 %v3324, %v3322
        %v3328 = vshrl.u32 %v3325, 16
        %v3330 = vrot.slane %v3328, 7
        %v3331 = vshll.u32 %v3325, 16
        %v3333 = vor.u32 %v3330, %v3331
        %v3335 = vshrl.u32 %v3326, 16
        %v3337 = vrot.slane %v3335, 7
        %v3338 = vshll.u32 %v3326, 16
        %v3340 = vor.u32 %v3337, %v3338
        %v3343 = vsel %vm1435, 0, %v3333
        %v3344 = vsel %vm1435, 0, %v3340
        %v3345 = vrot.slane %v3331, 1
        %v3346 = vor.u32 %v3328, %v3345
        %v3347 = vrot.slane %v3338, 1
        %v3348 = vor.u32 %v3335, %v3347
        %v3351 = vsel %vm1442, %v3346, 0
        %v3352 = vsel %vm1442, %v3348, 0
        %v3353 = vld [vmem:[#allocation11] sm:$0xff]
        %v3354 = vld [vmem:[#allocation11 + $0x8] sm:$0xff]
        %v3355 = vld [vmem:[#allocation11 + $0x10] sm:$0xff]
        %v3356 = vld [vmem:[#allocation11 + $0x18] sm:$0xff]
        %v3357 = vld [vmem:[#allocation11 + $0x20] sm:$0xff]
        %v3358 = vld [vmem:[#allocation11 + $0x28] sm:$0xff]
        %v3359 = vld [vmem:[#allocation11 + $0x30] sm:$0xff]
        %v3360 = vld [vmem:[#allocation11 + $0x38] sm:$0xff]
        %v3361 = vld [vmem:[#allocation11 + $0x40] sm:$0xff]
        %v3362 = vld [vmem:[#allocation11 + $0x48] sm:$0xff]
        %v3363 = vld [vmem:[#allocation11 + $0x50] sm:$0xff]
        %v3364 = vld [vmem:[#allocation11 + $0x58] sm:$0xff]
        %v3365 = vld [vmem:[#allocation11 + $0x60] sm:$0xff]
        %v3366 = vld [vmem:[#allocation11 + $0x68] sm:$0xff]
        %v3367 = vld [vmem:[#allocation11 + $0x70] sm:$0xff]
        %v3368 = vld [vmem:[#allocation11 + $0x78] sm:$0xff]
        %v3369 = vld [vmem:[#allocation11 + $0x80] sm:$0xff]
        %v3370 = vld [vmem:[#allocation11 + $0x88] sm:$0xff]
        %v3371 = vld [vmem:[#allocation11 + $0x90] sm:$0xff]
        %v3372 = vld [vmem:[#allocation11 + $0x98] sm:$0xff]
        %v3373 = vld [vmem:[#allocation11 + $0xa0] sm:$0xff]
        %v3374 = vld [vmem:[#allocation11 + $0xa8] sm:$0xff]
        %v3375 = vld [vmem:[#allocation11 + $0xb0] sm:$0xff]
        %v3376 = vld [vmem:[#allocation11 + $0xb8] sm:$0xff]
        %v3377 = vld [vmem:[#allocation11 + $0xc0] sm:$0xff]
        %v3378 = vld [vmem:[#allocation11 + $0xc8] sm:$0xff]
        %v3379 = vld [vmem:[#allocation11 + $0xd0] sm:$0xff]
        %v3380 = vld [vmem:[#allocation11 + $0xd8] sm:$0xff]
        %v3381 = vld [vmem:[#allocation11 + $0xe0] sm:$0xff]
        %v3382 = vld [vmem:[#allocation11 + $0xe8] sm:$0xff]
        %v3383 = vld [vmem:[#allocation11 + $0xf0] sm:$0xff]
        %v3384 = vld [vmem:[#allocation11 + $0xf8] sm:$0xff]
        %v3385 = vld [vmem:[#allocation11 + $0x100] sm:$0xff]
        %v3386 = vld [vmem:[#allocation11 + $0x108] sm:$0xff]
        %v3387 = vld [vmem:[#allocation11 + $0x110] sm:$0xff]
        %v3388 = vld [vmem:[#allocation11 + $0x118] sm:$0xff]
        %v3389 = vld [vmem:[#allocation11 + $0x120] sm:$0xff]
        %v3390 = vld [vmem:[#allocation11 + $0x128] sm:$0xff]
        %v3391 = vld [vmem:[#allocation11 + $0x130] sm:$0xff]
        %v3392 = vld [vmem:[#allocation11 + $0x138] sm:$0xff]
        %v3393 = vld [vmem:[#allocation11 + $0x140] sm:$0xff]
        %v3394 = vld [vmem:[#allocation11 + $0x148] sm:$0xff]
        %v3395 = vld [vmem:[#allocation11 + $0x150] sm:$0xff]
        %v3396 = vld [vmem:[#allocation11 + $0x158] sm:$0xff]
        %v3397 = vld [vmem:[#allocation11 + $0x160] sm:$0xff]
        %v3398 = vld [vmem:[#allocation11 + $0x168] sm:$0xff]
        %v3399 = vld [vmem:[#allocation11 + $0x170] sm:$0xff]
        %v3400 = vld [vmem:[#allocation11 + $0x178] sm:$0xff]
        %v3401 = vld [vmem:[#allocation11 + $0x180] sm:$0xff]
        %v3402 = vld [vmem:[#allocation11 + $0x188] sm:$0xff]
        %v3403 = vld [vmem:[#allocation11 + $0x190] sm:$0xff]
        %v3404 = vld [vmem:[#allocation11 + $0x198] sm:$0xff]
        %v3405 = vld [vmem:[#allocation11 + $0x1a0] sm:$0xff]
        %v3406 = vld [vmem:[#allocation11 + $0x1a8] sm:$0xff]
        %v3407 = vld [vmem:[#allocation11 + $0x1b0] sm:$0xff]
        %v3408 = vld [vmem:[#allocation11 + $0x1b8] sm:$0xff]
        %v3409 = vld [vmem:[#allocation11 + $0x1c0] sm:$0xff]
        %v3410 = vld [vmem:[#allocation11 + $0x1c8] sm:$0xff]
        %v3411 = vld [vmem:[#allocation11 + $0x1d0] sm:$0xff]
        %v3412 = vld [vmem:[#allocation11 + $0x1d8] sm:$0xff]
        %v3413 = vld [vmem:[#allocation11 + $0x1e0] sm:$0xff]
        %v3414 = vld [vmem:[#allocation11 + $0x1e8] sm:$0xff]
        %v3415 = vld [vmem:[#allocation11 + $0x1f0] sm:$0xff]
        %v3416 = vld [vmem:[#allocation11 + $0x1f8] sm:$0xff]
        %v3417 = vld [vmem:[#allocation11 + $0x200] sm:$0xff]
        %v3418 = vld [vmem:[#allocation11 + $0x208] sm:$0xff]
        %v3419 = vld [vmem:[#allocation11 + $0x210] sm:$0xff]
        %v3420 = vld [vmem:[#allocation11 + $0x218] sm:$0xff]
        %v3421 = vld [vmem:[#allocation11 + $0x220] sm:$0xff]
        %v3422 = vld [vmem:[#allocation11 + $0x228] sm:$0xff]
        %v3423 = vld [vmem:[#allocation11 + $0x230] sm:$0xff]
        %v3424 = vld [vmem:[#allocation11 + $0x238] sm:$0xff]
        %v3425 = vld [vmem:[#allocation11 + $0x240] sm:$0xff]
        %v3426 = vld [vmem:[#allocation11 + $0x248] sm:$0xff]
        %v3427 = vld [vmem:[#allocation11 + $0x250] sm:$0xff]
        %v3428 = vld [vmem:[#allocation11 + $0x258] sm:$0xff]
        %v3429 = vld [vmem:[#allocation11 + $0x260] sm:$0xff]
        %v3430 = vld [vmem:[#allocation11 + $0x268] sm:$0xff]
        %v3431 = vld [vmem:[#allocation11 + $0x270] sm:$0xff]
        %v3432 = vld [vmem:[#allocation11 + $0x278] sm:$0xff]
        %v3433 = vld [vmem:[#allocation11 + $0x280] sm:$0xff]
        %v3434 = vld [vmem:[#allocation11 + $0x288] sm:$0xff]
        %v3435 = vld [vmem:[#allocation11 + $0x290] sm:$0xff]
        %v3436 = vld [vmem:[#allocation11 + $0x298] sm:$0xff]
        %v3437 = vld [vmem:[#allocation11 + $0x2a0] sm:$0xff]
        %v3438 = vld [vmem:[#allocation11 + $0x2a8] sm:$0xff]
        %v3439 = vld [vmem:[#allocation11 + $0x2b0] sm:$0xff]
        %v3440 = vld [vmem:[#allocation11 + $0x2b8] sm:$0xff]
        %v3441 = vld [vmem:[#allocation11 + $0x2c0] sm:$0xff]
        %v3442 = vld [vmem:[#allocation11 + $0x2c8] sm:$0xff]
        %v3443 = vld [vmem:[#allocation11 + $0x2d0] sm:$0xff]
        %v3444 = vld [vmem:[#allocation11 + $0x2d8] sm:$0xff]
        %v3445 = vld [vmem:[#allocation11 + $0x2e0] sm:$0xff]
        %v3446 = vld [vmem:[#allocation11 + $0x2e8] sm:$0xff]
        %v3447 = vld [vmem:[#allocation11 + $0x2f0] sm:$0xff]
        %v3448 = vld [vmem:[#allocation11 + $0x2f8] sm:$0xff]
        %v3449 = vld [vmem:[%s10] sm:$0x3]
        %v3451 = vlaneseq
        %v3452 = vshrl.u32 %v3451, 7
        %v3453 = vsub.s32 0, %v3452
        %v3454 = vrot.slane %v3449, %v3453
        %v3455 = vlaneseq
        %v3456 = vshrl.u32 %v3455, 7
        %v3457 = vsub.s32 1, %v3456
        %v3458 = vrot.slane %v3449, %v3457
        %v3557 = vunpack.c.l.b16 %v3353
        %v3558 = vunpack.c.h.b16 %v3353
        %v3559 = vunpack.c.l.b16 %v3354
        %v3560 = vunpack.c.h.b16 %v3354
        %v3561 = vunpack.c.l.b16 %v3355
        %v3562 = vunpack.c.h.b16 %v3355
        %v3563 = vunpack.c.l.b16 %v3356
        %v3564 = vunpack.c.h.b16 %v3356
        %v3565 = vunpack.c.l.b16 %v3357
        %v3566 = vunpack.c.h.b16 %v3357
        %v3567 = vunpack.c.l.b16 %v3358
        %v3568 = vunpack.c.h.b16 %v3358
        %v3569 = vunpack.c.l.b16 %v3359
        %v3570 = vunpack.c.h.b16 %v3359
        %v3571 = vunpack.c.l.b16 %v3360
        %v3572 = vunpack.c.h.b16 %v3360
        %v3573 = vunpack.c.l.b16 %v3361
        %v3574 = vunpack.c.h.b16 %v3361
        %v3575 = vunpack.c.l.b16 %v3362
        %v3576 = vunpack.c.h.b16 %v3362
        %v3577 = vunpack.c.l.b16 %v3363
        %v3578 = vunpack.c.h.b16 %v3363
        %v3579 = vunpack.c.l.b16 %v3364
        %v3580 = vunpack.c.h.b16 %v3364
        %v3581 = vunpack.c.l.b16 %v3365
        %v3582 = vunpack.c.h.b16 %v3365
        %v3583 = vunpack.c.l.b16 %v3366
        %v3584 = vunpack.c.h.b16 %v3366
        %v3585 = vunpack.c.l.b16 %v3367
        %v3586 = vunpack.c.h.b16 %v3367
        %v3587 = vunpack.c.l.b16 %v3368
        %v3588 = vunpack.c.h.b16 %v3368
        %v3589 = vunpack.c.l.b16 %v3369
        %v3590 = vunpack.c.h.b16 %v3369
        %v3591 = vunpack.c.l.b16 %v3370
        %v3592 = vunpack.c.h.b16 %v3370
        %v3593 = vunpack.c.l.b16 %v3371
        %v3594 = vunpack.c.h.b16 %v3371
        %v3595 = vunpack.c.l.b16 %v3372
        %v3596 = vunpack.c.h.b16 %v3372
        %v3597 = vunpack.c.l.b16 %v3373
        %v3598 = vunpack.c.h.b16 %v3373
        %v3599 = vunpack.c.l.b16 %v3374
        %v3600 = vunpack.c.h.b16 %v3374
        %v3601 = vunpack.c.l.b16 %v3375
        %v3602 = vunpack.c.h.b16 %v3375
        %v3603 = vunpack.c.l.b16 %v3376
        %v3604 = vunpack.c.h.b16 %v3376
        %v3605 = vunpack.c.l.b16 %v3377
        %v3606 = vunpack.c.h.b16 %v3377
        %v3607 = vunpack.c.l.b16 %v3378
        %v3608 = vunpack.c.h.b16 %v3378
        %v3609 = vunpack.c.l.b16 %v3379
        %v3610 = vunpack.c.h.b16 %v3379
        %v3611 = vunpack.c.l.b16 %v3380
        %v3612 = vunpack.c.h.b16 %v3380
        %v3613 = vunpack.c.l.b16 %v3381
        %v3614 = vunpack.c.h.b16 %v3381
        %v3615 = vunpack.c.l.b16 %v3382
        %v3616 = vunpack.c.h.b16 %v3382
        %v3617 = vunpack.c.l.b16 %v3383
        %v3618 = vunpack.c.h.b16 %v3383
        %v3619 = vunpack.c.l.b16 %v3384
        %v3620 = vunpack.c.h.b16 %v3384
        %v3621 = vunpack.c.l.b16 %v3385
        %v3622 = vunpack.c.h.b16 %v3385
        %v3623 = vunpack.c.l.b16 %v3386
        %v3624 = vunpack.c.h.b16 %v3386
        %v3625 = vunpack.c.l.b16 %v3387
        %v3626 = vunpack.c.h.b16 %v3387
        %v3627 = vunpack.c.l.b16 %v3388
        %v3628 = vunpack.c.h.b16 %v3388
        %v3629 = vunpack.c.l.b16 %v3389
        %v3630 = vunpack.c.h.b16 %v3389
        %v3631 = vunpack.c.l.b16 %v3390
        %v3632 = vunpack.c.h.b16 %v3390
        %v3633 = vunpack.c.l.b16 %v3391
        %v3634 = vunpack.c.h.b16 %v3391
        %v3635 = vunpack.c.l.b16 %v3392
        %v3636 = vunpack.c.h.b16 %v3392
        %v3637 = vunpack.c.l.b16 %v3393
        %v3638 = vunpack.c.h.b16 %v3393
        %v3639 = vunpack.c.l.b16 %v3394
        %v3640 = vunpack.c.h.b16 %v3394
        %v3641 = vunpack.c.l.b16 %v3395
        %v3642 = vunpack.c.h.b16 %v3395
        %v3643 = vunpack.c.l.b16 %v3396
        %v3644 = vunpack.c.h.b16 %v3396
        %v3645 = vunpack.c.l.b16 %v3397
        %v3646 = vunpack.c.h.b16 %v3397
        %v3647 = vunpack.c.l.b16 %v3398
        %v3648 = vunpack.c.h.b16 %v3398
        %v3649 = vunpack.c.l.b16 %v3399
        %v3650 = vunpack.c.h.b16 %v3399
        %v3651 = vunpack.c.l.b16 %v3400
        %v3652 = vunpack.c.h.b16 %v3400
        %v3653 = vunpack.c.l.b16 %v3401
        %v3654 = vunpack.c.h.b16 %v3401
        %v3655 = vunpack.c.l.b16 %v3402
        %v3656 = vunpack.c.h.b16 %v3402
        %v3657 = vunpack.c.l.b16 %v3403
        %v3658 = vunpack.c.h.b16 %v3403
        %v3659 = vunpack.c.l.b16 %v3404
        %v3660 = vunpack.c.h.b16 %v3404
        %v3661 = vunpack.c.l.b16 %v3405
        %v3662 = vunpack.c.h.b16 %v3405
        %v3663 = vunpack.c.l.b16 %v3406
        %v3664 = vunpack.c.h.b16 %v3406
        %v3665 = vunpack.c.l.b16 %v3407
        %v3666 = vunpack.c.h.b16 %v3407
        %v3667 = vunpack.c.l.b16 %v3408
        %v3668 = vunpack.c.h.b16 %v3408
        %v3669 = vunpack.c.l.b16 %v3409
        %v3670 = vunpack.c.h.b16 %v3409
        %v3671 = vunpack.c.l.b16 %v3410
        %v3672 = vunpack.c.h.b16 %v3410
        %v3673 = vunpack.c.l.b16 %v3411
        %v3674 = vunpack.c.h.b16 %v3411
        %v3675 = vunpack.c.l.b16 %v3412
        %v3676 = vunpack.c.h.b16 %v3412
        %v3677 = vunpack.c.l.b16 %v3413
        %v3678 = vunpack.c.h.b16 %v3413
        %v3679 = vunpack.c.l.b16 %v3414
        %v3680 = vunpack.c.h.b16 %v3414
        %v3681 = vunpack.c.l.b16 %v3415
        %v3682 = vunpack.c.h.b16 %v3415
        %v3683 = vunpack.c.l.b16 %v3416
        %v3684 = vunpack.c.h.b16 %v3416
        %v3685 = vunpack.c.l.b16 %v3417
        %v3686 = vunpack.c.h.b16 %v3417
        %v3687 = vunpack.c.l.b16 %v3418
        %v3688 = vunpack.c.h.b16 %v3418
        %v3689 = vunpack.c.l.b16 %v3419
        %v3690 = vunpack.c.h.b16 %v3419
        %v3691 = vunpack.c.l.b16 %v3420
        %v3692 = vunpack.c.h.b16 %v3420
        %v3693 = vunpack.c.l.b16 %v3421
        %v3694 = vunpack.c.h.b16 %v3421
        %v3695 = vunpack.c.l.b16 %v3422
        %v3696 = vunpack.c.h.b16 %v3422
        %v3697 = vunpack.c.l.b16 %v3423
        %v3698 = vunpack.c.h.b16 %v3423
        %v3699 = vunpack.c.l.b16 %v3424
        %v3700 = vunpack.c.h.b16 %v3424
        %v3701 = vunpack.c.l.b16 %v3425
        %v3702 = vunpack.c.h.b16 %v3425
        %v3703 = vunpack.c.l.b16 %v3426
        %v3704 = vunpack.c.h.b16 %v3426
        %v3705 = vunpack.c.l.b16 %v3427
        %v3706 = vunpack.c.h.b16 %v3427
        %v3707 = vunpack.c.l.b16 %v3428
        %v3708 = vunpack.c.h.b16 %v3428
        %v3709 = vunpack.c.l.b16 %v3429
        %v3710 = vunpack.c.h.b16 %v3429
        %v3711 = vunpack.c.l.b16 %v3430
        %v3712 = vunpack.c.h.b16 %v3430
        %v3713 = vunpack.c.l.b16 %v3431
        %v3714 = vunpack.c.h.b16 %v3431
        %v3715 = vunpack.c.l.b16 %v3432
        %v3716 = vunpack.c.h.b16 %v3432
        %v3717 = vunpack.c.l.b16 %v3433
        %v3718 = vunpack.c.h.b16 %v3433
        %v3719 = vunpack.c.l.b16 %v3434
        %v3720 = vunpack.c.h.b16 %v3434
        %v3721 = vunpack.c.l.b16 %v3435
        %v3722 = vunpack.c.h.b16 %v3435
        %v3723 = vunpack.c.l.b16 %v3436
        %v3724 = vunpack.c.h.b16 %v3436
        %v3725 = vunpack.c.l.b16 %v3437
        %v3726 = vunpack.c.h.b16 %v3437
        %v3727 = vunpack.c.l.b16 %v3438
        %v3728 = vunpack.c.h.b16 %v3438
        %v3729 = vunpack.c.l.b16 %v3439
        %v3730 = vunpack.c.h.b16 %v3439
        %v3731 = vunpack.c.l.b16 %v3440
        %v3732 = vunpack.c.h.b16 %v3440
        %v3733 = vunpack.c.l.b16 %v3441
        %v3734 = vunpack.c.h.b16 %v3441
        %v3735 = vunpack.c.l.b16 %v3442
        %v3736 = vunpack.c.h.b16 %v3442
        %v3737 = vunpack.c.l.b16 %v3443
        %v3738 = vunpack.c.h.b16 %v3443
        %v3739 = vunpack.c.l.b16 %v3444
        %v3740 = vunpack.c.h.b16 %v3444
        %v3741 = vunpack.c.l.b16 %v3445
        %v3742 = vunpack.c.h.b16 %v3445
        %v3743 = vunpack.c.l.b16 %v3446
        %v3744 = vunpack.c.h.b16 %v3446
        %v3745 = vunpack.c.l.b16 %v3447
        %v3746 = vunpack.c.h.b16 %v3447
        %v3747 = vunpack.c.l.b16 %v3448
        %v3748 = vunpack.c.h.b16 %v3448
        %v3749 = vpack.c.b16 %v3559, %v3557
        %v3750 = vpack.c.b16 %v3560, %v3558
        %v3751 = vpack.c.b16 %v3563, %v3561
        %v3752 = vpack.c.b16 %v3564, %v3562
        %v3753 = vpack.c.b16 %v3567, %v3565
        %v3754 = vpack.c.b16 %v3568, %v3566
        %v3755 = vpack.c.b16 %v3571, %v3569
        %v3756 = vpack.c.b16 %v3572, %v3570
        %v3757 = vpack.c.b16 %v3575, %v3573
        %v3758 = vpack.c.b16 %v3576, %v3574
        %v3759 = vpack.c.b16 %v3579, %v3577
        %v3760 = vpack.c.b16 %v3580, %v3578
        %v3761 = vpack.c.b16 %v3583, %v3581
        %v3762 = vpack.c.b16 %v3584, %v3582
        %v3763 = vpack.c.b16 %v3587, %v3585
        %v3764 = vpack.c.b16 %v3588, %v3586
        %v3765 = vpack.c.b16 %v3591, %v3589
        %v3766 = vpack.c.b16 %v3592, %v3590
        %v3767 = vpack.c.b16 %v3595, %v3593
        %v3768 = vpack.c.b16 %v3596, %v3594
        %v3769 = vpack.c.b16 %v3599, %v3597
        %v3770 = vpack.c.b16 %v3600, %v3598
        %v3771 = vpack.c.b16 %v3603, %v3601
        %v3772 = vpack.c.b16 %v3604, %v3602
        %v3773 = vpack.c.b16 %v3607, %v3605
        %v3774 = vpack.c.b16 %v3608, %v3606
        %v3775 = vpack.c.b16 %v3611, %v3609
        %v3776 = vpack.c.b16 %v3612, %v3610
        %v3777 = vpack.c.b16 %v3615, %v3613
        %v3778 = vpack.c.b16 %v3616, %v3614
        %v3779 = vpack.c.b16 %v3619, %v3617
        %v3780 = vpack.c.b16 %v3620, %v3618
        %v3781 = vpack.c.b16 %v3623, %v3621
        %v3782 = vpack.c.b16 %v3624, %v3622
        %v3783 = vpack.c.b16 %v3627, %v3625
        %v3784 = vpack.c.b16 %v3628, %v3626
        %v3785 = vpack.c.b16 %v3631, %v3629
        %v3786 = vpack.c.b16 %v3632, %v3630
        %v3787 = vpack.c.b16 %v3635, %v3633
        %v3788 = vpack.c.b16 %v3636, %v3634
        %v3789 = vpack.c.b16 %v3639, %v3637
        %v3790 = vpack.c.b16 %v3640, %v3638
        %v3791 = vpack.c.b16 %v3643, %v3641
        %v3792 = vpack.c.b16 %v3644, %v3642
        %v3793 = vpack.c.b16 %v3647, %v3645
        %v3794 = vpack.c.b16 %v3648, %v3646
        %v3795 = vpack.c.b16 %v3651, %v3649
        %v3796 = vpack.c.b16 %v3652, %v3650
        %v3797 = vpack.c.b16 %v3655, %v3653
        %v3798 = vpack.c.b16 %v3656, %v3654
        %v3799 = vpack.c.b16 %v3659, %v3657
        %v3800 = vpack.c.b16 %v3660, %v3658
        %v3801 = vpack.c.b16 %v3663, %v3661
        %v3802 = vpack.c.b16 %v3664, %v3662
        %v3803 = vpack.c.b16 %v3667, %v3665
        %v3804 = vpack.c.b16 %v3668, %v3666
        %v3805 = vpack.c.b16 %v3671, %v3669
        %v3806 = vpack.c.b16 %v3672, %v3670
        %v3807 = vpack.c.b16 %v3675, %v3673
        %v3808 = vpack.c.b16 %v3676, %v3674
        %v3809 = vpack.c.b16 %v3679, %v3677
        %v3810 = vpack.c.b16 %v3680, %v3678
        %v3811 = vpack.c.b16 %v3683, %v3681
        %v3812 = vpack.c.b16 %v3684, %v3682
        %v3813 = vpack.c.b16 %v3687, %v3685
        %v3814 = vpack.c.b16 %v3688, %v3686
        %v3815 = vpack.c.b16 %v3691, %v3689
        %v3816 = vpack.c.b16 %v3692, %v3690
        %v3817 = vpack.c.b16 %v3695, %v3693
        %v3818 = vpack.c.b16 %v3696, %v3694
        %v3819 = vpack.c.b16 %v3699, %v3697
        %v3820 = vpack.c.b16 %v3700, %v3698
        %v3821 = vpack.c.b16 %v3703, %v3701
        %v3822 = vpack.c.b16 %v3704, %v3702
        %v3823 = vpack.c.b16 %v3707, %v3705
        %v3824 = vpack.c.b16 %v3708, %v3706
        %v3825 = vpack.c.b16 %v3711, %v3709
        %v3826 = vpack.c.b16 %v3712, %v3710
        %v3827 = vpack.c.b16 %v3715, %v3713
        %v3828 = vpack.c.b16 %v3716, %v3714
        %v3829 = vpack.c.b16 %v3719, %v3717
        %v3830 = vpack.c.b16 %v3720, %v3718
        %v3831 = vpack.c.b16 %v3723, %v3721
        %v3832 = vpack.c.b16 %v3724, %v3722
        %v3833 = vpack.c.b16 %v3727, %v3725
        %v3834 = vpack.c.b16 %v3728, %v3726
        %v3835 = vpack.c.b16 %v3731, %v3729
        %v3836 = vpack.c.b16 %v3732, %v3730
        %v3837 = vpack.c.b16 %v3735, %v3733
        %v3838 = vpack.c.b16 %v3736, %v3734
        %v3839 = vpack.c.b16 %v3739, %v3737
        %v3840 = vpack.c.b16 %v3740, %v3738
        %v3841 = vpack.c.b16 %v3743, %v3741
        %v3842 = vpack.c.b16 %v3744, %v3742
        %v3843 = vpack.c.b16 %v3747, %v3745
        %v3844 = vpack.c.b16 %v3748, %v3746
        %3941 = vmatprep.subr.bf16.mxu0 %v3750
        %3942 = vmatpush1.bf16.msra.mxu0 %v3749
        %3943 = vmatprep.subr.bf16.mxu0 %v3752
        %3944 = vmatpush1.bf16.msra.mxu0 %v3751
        %3945 = vmatprep.subr.bf16.mxu0 %v3754
        %3946 = vmatpush1.bf16.msra.mxu0 %v3753
        %3947 = vmatprep.subr.bf16.mxu0 %v3756
        %3948 = vmatpush1.bf16.msra.mxu0 %v3755
        %3949 = vmatprep.subr.bf16.mxu0 %v3758
        %3950 = vmatpush1.bf16.msra.mxu0 %v3757
        %3951 = vmatprep.subr.bf16.mxu0 %v3760
        %3952 = vmatpush1.bf16.msra.mxu0 %v3759
        %3953 = vmatprep.subr.bf16.mxu0 %v3762
        %3954 = vmatpush1.bf16.msra.mxu0 %v3761
        %3955 = vmatprep.subr.bf16.mxu0 %v3764
        %3956 = vmatpush1.bf16.msra.mxu0 %v3763
        %3957 = vmatprep.subr.bf16.mxu0 %v3766
        %3958 = vmatpush1.bf16.msra.mxu0 %v3765
        %3959 = vmatprep.subr.bf16.mxu0 %v3768
        %3960 = vmatpush1.bf16.msra.mxu0 %v3767
        %3961 = vmatprep.subr.bf16.mxu0 %v3770
        %3962 = vmatpush1.bf16.msra.mxu0 %v3769
        %3963 = vmatprep.subr.bf16.mxu0 %v3772
        %3964 = vmatpush1.bf16.msra.mxu0 %v3771
        %3965 = vmatprep.subr.bf16.mxu0 %v3774
        %3966 = vmatpush1.bf16.msra.mxu0 %v3773
        %3967 = vmatprep.subr.bf16.mxu0 %v3776
        %3968 = vmatpush1.bf16.msra.mxu0 %v3775
        %3969 = vmatprep.subr.bf16.mxu0 %v3778
        %3970 = vmatpush1.bf16.msra.mxu0 %v3777
        %3971 = vmatprep.subr.bf16.mxu0 %v3780
        %3972 = vmatpush1.bf16.msra.mxu0 %v3779
        %3973 = vmatprep.mubr.bf16.mxu0 %v3344
        %3974 = vmatmul.mubr.bf16.gmra.mrb[0].mxu0 %v3343
        %v3975 = vpop.f32.mrb[0].mxu0
        %v3976 = vadd.f32 %v3454, %v3975
        %v3977 = vpop.f32.mrb[0].mxu0
        %v3978 = vadd.f32 %v3458, %v3977
        %v3979 = vpop.f32.mrb[0].mxu0
        %v3980 = vadd.f32 %v3454, %v3979
        %v3981 = vpop.f32.mrb[0].mxu0
        %v3982 = vadd.f32 %v3458, %v3981
        %3983 = vdwg.mxu0
        %3984 = vmatprep.subr.bf16.mxu0 %v3782
        %3985 = vmatpush1.bf16.msra.mxu0 %v3781
        %3986 = vmatprep.subr.bf16.mxu0 %v3784
        %3987 = vmatpush1.bf16.msra.mxu0 %v3783
        %3988 = vmatprep.subr.bf16.mxu0 %v3786
        %3989 = vmatpush1.bf16.msra.mxu0 %v3785
        %3990 = vmatprep.subr.bf16.mxu0 %v3788
        %3991 = vmatpush1.bf16.msra.mxu0 %v3787
        %3992 = vmatprep.subr.bf16.mxu0 %v3790
        %3993 = vmatpush1.bf16.msra.mxu0 %v3789
        %3994 = vmatprep.subr.bf16.mxu0 %v3792
        %3995 = vmatpush1.bf16.msra.mxu0 %v3791
        %3996 = vmatprep.subr.bf16.mxu0 %v3794
        %3997 = vmatpush1.bf16.msra.mxu0 %v3793
        %3998 = vmatprep.subr.bf16.mxu0 %v3796
        %3999 = vmatpush1.bf16.msra.mxu0 %v3795
        %4000 = vmatprep.subr.bf16.mxu0 %v3798
        %4001 = vmatpush1.bf16.msra.mxu0 %v3797
        %4002 = vmatprep.subr.bf16.mxu0 %v3800
        %4003 = vmatpush1.bf16.msra.mxu0 %v3799
        %4004 = vmatprep.subr.bf16.mxu0 %v3802
        %4005 = vmatpush1.bf16.msra.mxu0 %v3801
        %4006 = vmatprep.subr.bf16.mxu0 %v3804
        %4007 = vmatpush1.bf16.msra.mxu0 %v3803
        %4008 = vmatprep.subr.bf16.mxu0 %v3806
        %4009 = vmatpush1.bf16.msra.mxu0 %v3805
        %4010 = vmatprep.subr.bf16.mxu0 %v3808
        %4011 = vmatpush1.bf16.msra.mxu0 %v3807
        %4012 = vmatprep.subr.bf16.mxu0 %v3810
        %4013 = vmatpush1.bf16.msra.mxu0 %v3809
        %4014 = vmatprep.subr.bf16.mxu0 %v3812
        %4015 = vmatpush1.bf16.msra.mxu0 %v3811
        %4016 = vmatprep.mubr.bf16.mxu0 %v3326
        %4017 = vmatmul.mubr.bf16.gmra.mrb[0].mxu0 %v3325
        %v4018 = vpop.f32.mrb[0].mxu0
        %v4019 = vadd.f32 %v3976, %v4018
        %v4020 = vpop.f32.mrb[0].mxu0
        %v4021 = vadd.f32 %v3978, %v4020
        %v4022 = vpop.f32.mrb[0].mxu0
        %v4023 = vadd.f32 %v3980, %v4022
        %v4024 = vpop.f32.mrb[0].mxu0
        %v4025 = vadd.f32 %v3982, %v4024
        %4026 = vdwg.mxu0
        %4027 = vmatprep.subr.bf16.mxu0 %v3814
        %4028 = vmatpush1.bf16.msra.mxu0 %v3813
        %4029 = vmatprep.subr.bf16.mxu0 %v3816
        %4030 = vmatpush1.bf16.msra.mxu0 %v3815
        %4031 = vmatprep.subr.bf16.mxu0 %v3818
        %4032 = vmatpush1.bf16.msra.mxu0 %v3817
        %4033 = vmatprep.subr.bf16.mxu0 %v3820
        %4034 = vmatpush1.bf16.msra.mxu0 %v3819
        %4035 = vmatprep.subr.bf16.mxu0 %v3822
        %4036 = vmatpush1.bf16.msra.mxu0 %v3821
        %4037 = vmatprep.subr.bf16.mxu0 %v3824
        %4038 = vmatpush1.bf16.msra.mxu0 %v3823
        %4039 = vmatprep.subr.bf16.mxu0 %v3826
        %4040 = vmatpush1.bf16.msra.mxu0 %v3825
        %4041 = vmatprep.subr.bf16.mxu0 %v3828
        %4042 = vmatpush1.bf16.msra.mxu0 %v3827
        %4043 = vmatprep.subr.bf16.mxu0 %v3830
        %4044 = vmatpush1.bf16.msra.mxu0 %v3829
        %4045 = vmatprep.subr.bf16.mxu0 %v3832
        %4046 = vmatpush1.bf16.msra.mxu0 %v3831
        %4047 = vmatprep.subr.bf16.mxu0 %v3834
        %4048 = vmatpush1.bf16.msra.mxu0 %v3833
        %4049 = vmatprep.subr.bf16.mxu0 %v3836
        %4050 = vmatpush1.bf16.msra.mxu0 %v3835
        %4051 = vmatprep.subr.bf16.mxu0 %v3838
        %4052 = vmatpush1.bf16.msra.mxu0 %v3837
        %4053 = vmatprep.subr.bf16.mxu0 %v3840
        %4054 = vmatpush1.bf16.msra.mxu0 %v3839
        %4055 = vmatprep.subr.bf16.mxu0 %v3842
        %4056 = vmatpush1.bf16.msra.mxu0 %v3841
        %4057 = vmatprep.subr.bf16.mxu0 %v3844
        %4058 = vmatpush1.bf16.msra.mxu0 %v3843
        %4059 = vmatprep.mubr.bf16.mxu0 %v3352
        %4060 = vmatmul.mubr.bf16.gmra.mrb[0].mxu0 %v3351
        %v4061 = vpop.f32.mrb[0].mxu0
        %v4062 = vadd.f32 %v4019, %v4061
        %v4063 = vpop.f32.mrb[0].mxu0
        %v4064 = vadd.f32 %v4021, %v4063
        %v4065 = vpop.f32.mrb[0].mxu0
        %v4066 = vadd.f32 %v4023, %v4065
        %v4067 = vpop.f32.mrb[0].mxu0
        %v4068 = vadd.f32 %v4025, %v4067
        %4069 = vdwg.mxu0
        %v4070 = vadd.f32 %v4062, %v691
        %v4071 = vadd.f32 %v4064, %v693
        %v4072 = vadd.f32 %v4066, %v695
        %v4073 = vadd.f32 %v4068, %v697
        %4074 = vst [vmem:[%s543] sm:$0xff] %v4070
        %4075 = vst [vmem:[%s543 + $0x8] sm:$0xff] %v4071
        %4076 = vst [vmem:[%s543 + $0x10] sm:$0xff] %v4072
        %4077 = vst [vmem:[%s543 + $0x18] sm:$0xff] %v4073
        %s4078 = sand.u32 %s319, 1
        %s4079 = scalar_lea.sflag [#allocation4], %s4078
        %s4080 = sand.u32 %s319, 1
        %s4081 = smul.addr %s4080, 32
        %s4082 = scalar_lea.vmem [#allocation14], %s4081
        // Predicated region
        $region101: #{tpu_custom_call.1} parent=71 // pred_check
          %p4083 = pneg %p329
        $region102: #{tpu_custom_call.1} parent=71 // pred_check_branch
          %4085 = sbr.rel (%p4083) target = $region104
        $region103: #{tpu_custom_call.1} parent=71 // pred_region
          %s4087 = ssub.s32 512, 512
          %4088 = vsyncadd %s4079, %s4087
          %s4089 = smul.addr %s33, 4
          %s4090 = smul.addr %s4089, 128
          %s4091 = scalar_lea.hbm %s13, %s4090
          %s4092 = sshll.u32 %s4082, 4
          %s4093 = int_to_ptr.vmem [resolvable:$true] %s4092
          %4098 = dma.vmem_to_hbm [thread:$0]  %s4093, 512, %s4091, %s4079, 256, 256, 16
        $region104: #{tpu_custom_call.1} parent=71 // pred_fallthru
          _
      $region72: #{tpu_custom_call.1} parent=5 // pred_fallthru
        _
      %p4099 = scmp.le.s32.totalorder 2, %s28
      // Predicated region
      $region105: #{tpu_custom_call.1} parent=5 // pred_check
        %p4100 = pneg %p4099
      $region106: #{tpu_custom_call.1} parent=5 // pred_check_branch
        %4102 = sbr.rel (%p4100) target = $region108
      $region107: #{tpu_custom_call.1} parent=5 // pred_region
        %s4103 = ssub.s32 %s28, 2
        // Predicated region
        $region109: #{tpu_custom_call.1} parent=107 // pred_check
          %p4104 = pneg %p335
        $region110: #{tpu_custom_call.1} parent=107 // pred_check_branch
          %4106 = sbr.rel (%p4104) target = $region112
        $region111: #{tpu_custom_call.1} parent=107 // pred_region
          %s4107 = sand.u32 %s320, 1
          %s4108 = scalar_lea.sflag [#allocation4], %s4107
          %s4109 = sand.u32 %s320, 1
          %s4110 = smul.addr %s4109, 32
          %s4111 = scalar_lea.vmem [#allocation14], %s4110
          %4112 = dma.done %s4108, 512
        $region112: #{tpu_custom_call.1} parent=107 // pred_fallthru
          _
      $region108: #{tpu_custom_call.1} parent=5 // pred_fallthru
        _
    $region6: #{tpu_custom_call.1} parent=1 // loop_footer
      %s32 = sadd.s32 1, %s28
    $region7: #{tpu_custom_call.1} parent=1 // loop_footer_branch
      %27 = sbr.rel target = $region3
    $region8: #{tpu_custom_call.1} parent=1 // loop_exit
      _
    %4113 = vsyncpa [#allocation3], 1
    %s4114 = scalar_lea.sflag [#allocation3], 1
    %4115 = vsyncpa %s4114, 1
    %4116 = vsyncpa [#allocation6], 1
    %4117 = vsyncpa [#allocation9], 1
    %4118 = vsyncpa [#allocation12], 1
    %4119 = vsyncpa [#allocation4], 1
    %s4120 = scalar_lea.sflag [#allocation4], 1
    %4121 = vsyncpa %s4120, 1

</llo_original>
